<compile_context>
chip_gen: v6e
topology: v6e:2x2x1
jax: 0.10.0
libtpu: 0.0.40
codegen_flags: <defaults>
</compile_context>

<pallas_src>
import functools

import jax
import jax.numpy as jnp
from jax.experimental import pallas as pl
from jax.experimental.pallas import tpu as pltpu


# ----------------------------------------------------------------------------
# 1. Fused bidirectional leaky-ESN layer.
#    h_t = (1 - a) * h_{t-1} + a * tanh(x_t @ Win^T + h_{t-1} @ Wrec^T + b)
#    forward and backward directions share one kernel invocation:
#      - input projection (x @ [Win_fw | Win_bw] + [b_fw | b_bw]) hoisted out of
#        the recurrence -> one (S*B, I) @ (I, 2R) matmul
#      - recurrence is a lax.fori_loop over time inside the kernel
#      - output stored once as a lane-dense (S*B, 2R) slab: [:, :R]=fw, [:, R:]=bw
# ----------------------------------------------------------------------------
def _esn_bidir_kernel(x_ref, win_ref, wrec_fw_ref, wrec_bw_ref, b_ref,
                      out_ref, pj_ref, ofw_ref, obw_ref,
                      *, S, B, R, leak_fw, leak_bw):
    # Hoisted input projection for both directions (single MXU call).
    pj_ref[...] = (jnp.dot(x_ref[...], win_ref[...],
                           preferred_element_type=jnp.float32) + b_ref[...])

    def step(t, carry):
        h_fw, h_bw = carry
        # TODO(synk): ESNMultiringCell's ring structure would allow replacing
        # these tiny matmuls with an XLU lane-roll; keep the generic recurrent
        # matrix path for exactness w.r.t. any reservoir matrix.
        rec_fw = jnp.dot(h_fw, wrec_fw_ref[...],
                         preferred_element_type=jnp.float32)
        rec_bw = jnp.dot(h_bw, wrec_bw_ref[...],
                         preferred_element_type=jnp.float32)
        row_f = pl.ds(t * B, B)               # rows of original time t
        row_b = pl.ds((S - 1 - t) * B, B)     # rows of original time S-1-t
        p_f = pj_ref[row_f, :]                # (B, 2R)
        p_b = pj_ref[row_b, :]
        h_fw = (1.0 - leak_fw) * h_fw + leak_fw * jnp.tanh(p_f[:, :R] + rec_fw)
        h_bw = (1.0 - leak_bw) * h_bw + leak_bw * jnp.tanh(p_b[:, R:] + rec_bw)
        ofw_ref[row_f, :] = h_fw
        obw_ref[row_b, :] = h_bw
        return (h_fw, h_bw)

    h0 = jnp.zeros((B, R), jnp.float32)
    jax.lax.fori_loop(0, S, step, (h0, h0), unroll=True)

    # Single lane-dense store (last dim = 2R = 128 for R = 64).
    out_ref[...] = jnp.concatenate([ofw_ref[...], obw_ref[...]], axis=-1)


def esn_bidir_layer(x, lp):
    """x: (S, B, I) -> (S, B, 2R)  (fw states in [:R], bw states in [R:])."""
    S, B, I = x.shape
    R = lp["wrec_fw_t"].shape[0]
    kernel = functools.partial(_esn_bidir_kernel, S=S, B=B, R=R,
                               leak_fw=float(lp["leak_fw"]),
                               leak_bw=float(lp["leak_bw"]))
    x2d = x.reshape(S * B, I)                 # free: merges leading dims only
    out2d = pl.pallas_call(
        kernel,
        out_shape=jax.ShapeDtypeStruct((S * B, 2 * R), jnp.float32),
        grid_spec=pltpu.PrefetchScalarGridSpec(
            num_scalar_prefetch=0,
            grid=(1,),
            in_specs=[
                pl.BlockSpec((S * B, I), lambda i: (0, 0)),
                pl.BlockSpec((I, 2 * R), lambda i: (0, 0)),
                pl.BlockSpec((R, R), lambda i: (0, 0)),
                pl.BlockSpec((R, R), lambda i: (0, 0)),
                pl.BlockSpec((1, 2 * R), lambda i: (0, 0)),
            ],
            out_specs=pl.BlockSpec((S * B, 2 * R), lambda i: (0, 0)),
            scratch_shapes=[
                pltpu.VMEM((S * B, 2 * R), jnp.float32),   # input projections
                pltpu.VMEM((S * B, R), jnp.float32),       # fw states
                pltpu.VMEM((S * B, R), jnp.float32),       # bw states
            ],
        ),
        compiler_params=pltpu.CompilerParams(
            dimension_semantics=("arbitrary",)),
    )(x2d, lp["win_t"], lp["wrec_fw_t"], lp["wrec_bw_t"], lp["b"])
    return out2d.reshape(S, B, 2 * R)


def esn_forward(x, esn_layers):
    """x: (S, B, input) -> (S, B, n_layers * 2 * R)."""
    layer_in = x
    outs = []
    for lp in esn_layers:
        out = esn_bidir_layer(layer_in, lp)     # (S, B, 2R) = [fw || bw]
        outs.append(out)
        layer_in = out
    return outs[0] if len(outs) == 1 else jnp.concatenate(outs, axis=-1)


# ----------------------------------------------------------------------------
# 2. Fused second stage: ff1+tanh -> LinSelfAttention -> W_fh/W_fp -> gating
#    -> classifier.  One grid step per batch element ("parallel" axis).
# ----------------------------------------------------------------------------
def _stage2_kernel(e1_ref, e2_ref, ff1w_ref, ff1b_ref, ws1_ref, ws2_ref,
                   wfh_ref, bfh_ref, wfp_ref, bfp_ref, wc_ref, bc_ref, o_ref,
                   *, r, H):
    ff1w = ff1w_ref[...]
    ff1b = ff1b_ref[...]
    ws1 = ws1_ref[...]
    ws2 = ws2_ref[...]

    def sentence_feature(e_ref, wf_ref, bf_ref):
        # ff1 + tanh
        h = jnp.tanh(jnp.dot(e_ref[0], ff1w,
                             preferred_element_type=jnp.float32) + ff1b)   # (S, H)
        # LinSelfAttention: A = softmax_seq(Ws2 @ tanh(Ws1 @ H^T)); M = A @ H
        u = jnp.tanh(jnp.dot(h, ws1, preferred_element_type=jnp.float32))  # (S, d_a)
        sc = jnp.dot(u, ws2, preferred_element_type=jnp.float32)           # (S, r)
        sc = sc - jnp.max(sc, axis=0, keepdims=True)
        ex = jnp.exp(sc)
        a = ex / jnp.sum(ex, axis=0, keepdims=True)                        # (S, r)
        m = jax.lax.dot_general(a, h, (((0,), (0,)), ((), ())),
                                preferred_element_type=jnp.float32)        # (r, H)
        # F = M.view(r*H) @ W_f^T + b  (unrolled over the r heads: no reshape)
        wf = wf_ref[...]                                                   # (r*H, H)
        f = bf_ref[...]                                                    # (1, H)
        for ri in range(r):
            f = f + jnp.dot(m[ri:ri + 1, :], wf[ri * H:(ri + 1) * H, :],
                            preferred_element_type=jnp.float32)
        return f                                                           # (1, H)

    f_h = sentence_feature(e1_ref, wfh_ref, bfh_ref)
    f_p = sentence_feature(e2_ref, wfp_ref, bfp_ref)
    emb = f_h * f_p
    o_ref[0] = (jnp.dot(emb, wc_ref[...],
                        preferred_element_type=jnp.float32) + bc_ref[...])


def stage2(e1_bsd, e2_bsd, params):
    """e1/e2: (B, S, D) batch-major ESN features -> logits (B, C)."""
    B, S1, D = e1_bsd.shape
    S2 = e2_bsd.shape[1]
    H = params["ff1_w_t"].shape[1]
    d_a = params["ws1_t"].shape[1]
    r = params["ws2_t"].shape[1]
    C = params["wc_t"].shape[1]
    kernel = functools.partial(_stage2_kernel, r=r, H=H)
    out = pl.pallas_call(
        kernel,
        out_shape=jax.ShapeDtypeStruct((B, 1, C), jnp.float32),
        grid_spec=pltpu.PrefetchScalarGridSpec(
            num_scalar_prefetch=0,
            grid=(B,),
            in_specs=[
                pl.BlockSpec((1, S1, D), lambda b: (b, 0, 0)),
                pl.BlockSpec((1, S2, D), lambda b: (b, 0, 0)),
                pl.BlockSpec((D, H), lambda b: (0, 0)),
                pl.BlockSpec((1, H), lambda b: (0, 0)),
                pl.BlockSpec((H, d_a), lambda b: (0, 0)),
                pl.BlockSpec((d_a, r), lambda b: (0, 0)),
                pl.BlockSpec((r * H, H), lambda b: (0, 0)),
                pl.BlockSpec((1, H), lambda b: (0, 0)),
                pl.BlockSpec((r * H, H), lambda b: (0, 0)),
                pl.BlockSpec((1, H), lambda b: (0, 0)),
                pl.BlockSpec((H, C), lambda b: (0, 0)),
                pl.BlockSpec((1, C), lambda b: (0, 0)),
            ],
            out_specs=pl.BlockSpec((1, 1, C), lambda b: (b, 0, 0)),
        ),
        compiler_params=pltpu.CompilerParams(
            dimension_semantics=("parallel",)),
    )(e1_bsd, e2_bsd,
      params["ff1_w_t"], params["ff1_b"],
      params["ws1_t"], params["ws2_t"],
      params["wfh_t"], params["bfh"],
      params["wfp_t"], params["bfp"],
      params["wc_t"], params["bc"])
    return out.reshape(B, C)


# ----------------------------------------------------------------------------
# Plain-JAX glue: full model forward + parameter init.
# ----------------------------------------------------------------------------
def model_forward(params, x1, x2):
    s1 = esn_forward(x1, params["esn"])                 # (S1, B, D)
    s2 = esn_forward(x2, params["esn"])                 # (S2, B, D)
    e1 = jnp.transpose(s1, (1, 0, 2))                   # (B, S1, D)  tiny copy
    e2 = jnp.transpose(s2, (1, 0, 2))                   # (B, S2, D)
    return stage2(e1, e2, params)


def _uniform(key, shape, lo, hi):
    return jax.random.uniform(key, shape, jnp.float32, lo, hi)


def init_params(key, hp, input_size=300, output_size=3, d_a=16):
    n_layers = hp["num_layers"]
    R = hp["reservoir_size"]
    H = hp["n_attention"]
    r = hp["attention_r"]
    D = n_layers * 2 * R

    keys = iter(jax.random.split(key, 8 * n_layers + 16))
    esn_layers = []
    # TODO(synk): ESNMultiringCell's exact multi-ring partitioning is not given;
    # the recurrent matrix is built here as a single ring permutation scaled by
    # the contractivity coefficient (same spectral structure).
    ring = jnp.roll(jnp.eye(R, dtype=jnp.float32), 1, axis=1)   # P[i, (i+1)%R] = 1
    for layer in range(n_layers):
        in_sz = input_size if layer == 0 else 2 * R
        per_dir = {}
        for d, tag in ((0, "fw"), (1, "bw")):
            scale_in = hp["scale_in"][layer] if d == 0 else hp["scale_in_bw"][layer]
            # NOTE: forward-direction density mirrors the original PyTorch module,
            # which passes scale_in as density_in for direction 0.
            density = hp["scale_in"][layer] if d == 0 else hp["density_in_bw"][layer]
            coeff = hp["scale_rec"][layer] if d == 0 else hp["scale_rec_bw"][layer]
            leak = hp["leaking_rate"][layer] if d == 0 else hp["leaking_rate_bw"][layer]
            w_in = _uniform(next(keys), (R, in_sz), -1.0, 1.0) * scale_in
            mask = (jax.random.uniform(next(keys), (R, in_sz)) < density
                    ).astype(jnp.float32)
            w_in = w_in * mask
            b = _uniform(next(keys), (R,), -1.0, 1.0) * scale_in
            per_dir[tag] = dict(win_t=w_in.T,                  # (in_sz, R)
                                wrec_t=(coeff * ring).T,       # (R, R)
                                b=b.reshape(1, R),
                                leak=float(leak))
        esn_layers.append(dict(
            win_t=jnp.concatenate([per_dir["fw"]["win_t"],
                                   per_dir["bw"]["win_t"]], axis=1),   # (in_sz, 2R)
            b=jnp.concatenate([per_dir["fw"]["b"],
                               per_dir["bw"]["b"]], axis=1),           # (1, 2R)
            wrec_fw_t=per_dir["fw"]["wrec_t"],
            wrec_bw_t=per_dir["bw"]["wrec_t"],
            leak_fw=per_dir["fw"]["leak"],
            leak_bw=per_dir["bw"]["leak"]))

    def linear_init(k, out_f, in_f):
        k1, k2 = jax.random.split(k)
        bound = 1.0 / (in_f ** 0.5)
        w = _uniform(k1, (out_f, in_f), -bound, bound)
        b = _uniform(k2, (out_f,), -bound, bound)
        return w.T, b.reshape(1, out_f)

    ff1_w_t, ff1_b = linear_init(next(keys), H, D)
    ws1_t = _uniform(next(keys), (d_a, H), -0.1, 0.1).T          # (H, d_a), no bias
    ws2_t = _uniform(next(keys), (r, d_a), -0.1, 0.1).T          # (d_a, r), no bias
    wfh_t, bfh = linear_init(next(keys), H, r * H)
    wfp_t, bfp = linear_init(next(keys), H, r * H)
    wc_t, bc = linear_init(next(keys), output_size, H)

    return dict(esn=esn_layers,
                ff1_w_t=ff1_w_t, ff1_b=ff1_b,
                ws1_t=ws1_t, ws2_t=ws2_t,
                wfh_t=wfh_t, bfh=bfh, wfp_t=wfp_t, bfp=bfp,
                wc_t=wc_t, bc=bc)


if __name__ == "__main__":
    hp = dict(
        epochs=1, lr=1e-3, n_batch=2, weight_decay=0.0,
        num_layers=1, reservoir_size=64,
        n_attention=32, attention_r=2,
        scale_rec=[0.9], scale_rec_bw=[0.9],
        scale_in=[1.0], scale_in_bw=[1.0],
        density_in_bw=[1.0],
        leaking_rate=[0.5], leaking_rate_bw=[0.5],
    )
    key = jax.random.PRNGKey(0)
    pkey, k1, k2 = jax.random.split(key, 3)
    params = init_params(pkey, hp)

    seq1, seq2, batch, input_size = 8, 6, 2, 300
    x1 = jax.random.normal(k1, (seq1, batch, input_size), dtype=jnp.float32)
    x2 = jax.random.normal(k2, (seq2, batch, input_size), dtype=jnp.float32)

    # jit with params closed over so the per-direction leak rates stay static.
    fwd = jax.jit(lambda a, b: model_forward(params, a, b))
    out = fwd(x1, x2)
    out = jax.block_until_ready(out)
    assert out.shape == (batch, 3), out.shape
    assert bool(jnp.all(jnp.isfinite(out)))
    print("KERNEL_OK")
</pallas_src>

<mosaic_0001>
module attributes {stable_mosaic.version = 11 : i64} {
  func.func @_esn_bidir_kernel(%arg0: i32, %arg1: memref<16x300xf32, #tpu.memory_space<vmem>>, %arg2: memref<300x128xf32, #tpu.memory_space<vmem>>, %arg3: memref<64x64xf32, #tpu.memory_space<vmem>>, %arg4: memref<64x64xf32, #tpu.memory_space<vmem>>, %arg5: memref<1x128xf32, #tpu.memory_space<vmem>>, %arg6: memref<16x128xf32, #tpu.memory_space<vmem>>, %arg7: memref<16x128xf32, #tpu.memory_space<vmem>>, %arg8: memref<16x64xf32, #tpu.memory_space<vmem>>, %arg9: memref<16x64xf32, #tpu.memory_space<vmem>>) attributes {dimension_semantics = [#tpu.dimension_semantics<arbitrary>], iteration_bounds = array<i64: 1>, scalar_prefetch = 0 : i64, scratch_operands = 3 : i64, tpu.core_type = #tpu.core_type<tc>, window_params = [{pipeline_mode = #tpu.pipeline_mode<synchronous>, transform_indices = @transform_0, window_bounds = array<i64: 16, 300>}, {pipeline_mode = #tpu.pipeline_mode<synchronous>, transform_indices = @transform_1, window_bounds = array<i64: 300, 128>}, {pipeline_mode = #tpu.pipeline_mode<synchronous>, transform_indices = @transform_2, window_bounds = array<i64: 64, 64>}, {pipeline_mode = #tpu.pipeline_mode<synchronous>, transform_indices = @transform_3, window_bounds = array<i64: 64, 64>}, {pipeline_mode = #tpu.pipeline_mode<synchronous>, transform_indices = @transform_4, window_bounds = array<i64: 1, 128>}, {pipeline_mode = #tpu.pipeline_mode<synchronous>, transform_indices = @transform_5, window_bounds = array<i64: 16, 128>}]} {
    %c0 = arith.constant 0 : index
    %c0_0 = arith.constant 0 : index
    %0 = vector.load %arg1[%c0, %c0_0] : memref<16x300xf32, #tpu.memory_space<vmem>>, vector<16x300xf32>
    %c0_1 = arith.constant 0 : index
    %c0_2 = arith.constant 0 : index
    %1 = vector.load %arg2[%c0_1, %c0_2] : memref<300x128xf32, #tpu.memory_space<vmem>>, vector<300x128xf32>
    %cst = arith.constant dense<0.000000e+00> : vector<16x128xf32>
    %2 = tpu.matmul %0, %1, %cst {dimension_numbers = #tpu.dot_dimension_numbers<[1], [0], [0], [1], [0, 0, 1, 1], [], []>} : vector<16x300xf32>, vector<300x128xf32>, vector<16x128xf32> -> vector<16x128xf32>
    %c0_3 = arith.constant 0 : index
    %c0_4 = arith.constant 0 : index
    %3 = vector.load %arg5[%c0_3, %c0_4] : memref<1x128xf32, #tpu.memory_space<vmem>>, vector<1x128xf32>
    %4 = vector.broadcast %3 : vector<1x128xf32> to vector<16x128xf32>
    %5 = arith.addf %2, %4 : vector<16x128xf32>
    %c0_5 = arith.constant 0 : index
    %c0_6 = arith.constant 0 : index
    %6 = vector.load %arg7[%c0_5, %c0_6] : memref<16x128xf32, #tpu.memory_space<vmem>>, vector<16x128xf32>
    tpu.vector_store %arg7[%c0_5, %c0_6], %5 {strides = array<i32>} : memref<16x128xf32, #tpu.memory_space<vmem>>, vector<16x128xf32>,
    %cst_7 = arith.constant 0.000000e+00 : f32
    %7 = vector.broadcast %cst_7 : f32 to vector<2x64xf32>
    %c0_i32 = arith.constant 0 : i32
    %c0_8 = arith.constant 0 : index
    %c0_9 = arith.constant 0 : index
    %8 = vector.load %arg3[%c0_8, %c0_9] : memref<64x64xf32, #tpu.memory_space<vmem>>, vector<64x64xf32>
    %cst_10 = arith.constant dense<0.000000e+00> : vector<2x64xf32>
    %9 = tpu.matmul %7, %8, %cst_10 {dimension_numbers = #tpu.dot_dimension_numbers<[1], [0], [0], [1], [0, 0, 1, 1], [], []>} : vector<2x64xf32>, vector<64x64xf32>, vector<2x64xf32> -> vector<2x64xf32>
    %c0_11 = arith.constant 0 : index
    %c0_12 = arith.constant 0 : index
    %10 = vector.load %arg4[%c0_11, %c0_12] : memref<64x64xf32, #tpu.memory_space<vmem>>, vector<64x64xf32>
    %cst_13 = arith.constant dense<0.000000e+00> : vector<2x64xf32>
    %11 = tpu.matmul %7, %10, %cst_13 {dimension_numbers = #tpu.dot_dimension_numbers<[1], [0], [0], [1], [0, 0, 1, 1], [], []>} : vector<2x64xf32>, vector<64x64xf32>, vector<2x64xf32> -> vector<2x64xf32>
    %c2_i32 = arith.constant 2 : i32
    %12 = arith.muli %c0_i32, %c2_i32 : i32
    %c7_i32 = arith.constant 7 : i32
    %13 = arith.subi %c7_i32, %c0_i32 : i32
    %c2_i32_14 = arith.constant 2 : i32
    %14 = arith.muli %13, %c2_i32_14 : i32
    %15 = arith.index_cast %12 : i32 to index
    %c0_15 = arith.constant 0 : index
    %16 = vector.load %arg7[%15, %c0_15] : memref<16x128xf32, #tpu.memory_space<vmem>>, vector<2x128xf32>
    %17 = arith.index_cast %14 : i32 to index
    %c0_16 = arith.constant 0 : index
    %18 = vector.load %arg7[%17, %c0_16] : memref<16x128xf32, #tpu.memory_space<vmem>>, vector<2x128xf32>
    %cst_17 = arith.constant 5.000000e-01 : f32
    %19 = vector.broadcast %cst_17 : f32 to vector<2x64xf32>
    %20 = arith.mulf %19, %7 : vector<2x64xf32>
    %21 = vector.extract_strided_slice %16 {offsets = [0, 0], sizes = [2, 64], strides = [1, 1]} : vector<2x128xf32> to vector<2x64xf32>
    %22 = arith.addf %21, %9 : vector<2x64xf32>
    %23 = math.tanh %22 : vector<2x64xf32>
    %cst_18 = arith.constant 5.000000e-01 : f32
    %24 = vector.broadcast %cst_18 : f32 to vector<2x64xf32>
    %25 = arith.mulf %24, %23 : vector<2x64xf32>
    %26 = arith.addf %20, %25 : vector<2x64xf32>
    %cst_19 = arith.constant 5.000000e-01 : f32
    %27 = vector.broadcast %cst_19 : f32 to vector<2x64xf32>
    %28 = arith.mulf %27, %7 : vector<2x64xf32>
    %29 = vector.extract_strided_slice %18 {offsets = [0, 64], sizes = [2, 64], strides = [1, 1]} : vector<2x128xf32> to vector<2x64xf32>
    %30 = arith.addf %29, %11 : vector<2x64xf32>
    %31 = math.tanh %30 : vector<2x64xf32>
    %cst_20 = arith.constant 5.000000e-01 : f32
    %32 = vector.broadcast %cst_20 : f32 to vector<2x64xf32>
    %33 = arith.mulf %32, %31 : vector<2x64xf32>
    %34 = arith.addf %28, %33 : vector<2x64xf32>
    %35 = arith.index_cast %12 : i32 to index
    %c0_21 = arith.constant 0 : index
    %36 = vector.load %arg8[%35, %c0_21] : memref<16x64xf32, #tpu.memory_space<vmem>>, vector<2x64xf32>
    tpu.vector_store %arg8[%35, %c0_21], %26 {strides = array<i32>} : memref<16x64xf32, #tpu.memory_space<vmem>>, vector<2x64xf32>,
    %37 = arith.index_cast %14 : i32 to index
    %c0_22 = arith.constant 0 : index
    %38 = vector.load %arg9[%37, %c0_22] : memref<16x64xf32, #tpu.memory_space<vmem>>, vector<2x64xf32>
    tpu.vector_store %arg9[%37, %c0_22], %34 {strides = array<i32>} : memref<16x64xf32, #tpu.memory_space<vmem>>, vector<2x64xf32>,
    %c1_i32 = arith.constant 1 : i32
    %c0_23 = arith.constant 0 : index
    %c0_24 = arith.constant 0 : index
    %39 = vector.load %arg3[%c0_23, %c0_24] : memref<64x64xf32, #tpu.memory_space<vmem>>, vector<64x64xf32>
    %cst_25 = arith.constant dense<0.000000e+00> : vector<2x64xf32>
    %40 = tpu.matmul %26, %39, %cst_25 {dimension_numbers = #tpu.dot_dimension_numbers<[1], [0], [0], [1], [0, 0, 1, 1], [], []>} : vector<2x64xf32>, vector<64x64xf32>, vector<2x64xf32> -> vector<2x64xf32>
    %c0_26 = arith.constant 0 : index
    %c0_27 = arith.constant 0 : index
    %41 = vector.load %arg4[%c0_26, %c0_27] : memref<64x64xf32, #tpu.memory_space<vmem>>, vector<64x64xf32>
    %cst_28 = arith.constant dense<0.000000e+00> : vector<2x64xf32>
    %42 = tpu.matmul %34, %41, %cst_28 {dimension_numbers = #tpu.dot_dimension_numbers<[1], [0], [0], [1], [0, 0, 1, 1], [], []>} : vector<2x64xf32>, vector<64x64xf32>, vector<2x64xf32> -> vector<2x64xf32>
    %c2_i32_29 = arith.constant 2 : i32
    %43 = arith.muli %c1_i32, %c2_i32_29 : i32
    %c7_i32_30 = arith.constant 7 : i32
    %44 = arith.subi %c7_i32_30, %c1_i32 : i32
    %c2_i32_31 = arith.constant 2 : i32
    %45 = arith.muli %44, %c2_i32_31 : i32
    %46 = arith.index_cast %43 : i32 to index
    %c0_32 = arith.constant 0 : index
    %47 = vector.load %arg7[%46, %c0_32] : memref<16x128xf32, #tpu.memory_space<vmem>>, vector<2x128xf32>
    %48 = arith.index_cast %45 : i32 to index
    %c0_33 = arith.constant 0 : index
    %49 = vector.load %arg7[%48, %c0_33] : memref<16x128xf32, #tpu.memory_space<vmem>>, vector<2x128xf32>
    %cst_34 = arith.constant 5.000000e-01 : f32
    %50 = vector.broadcast %cst_34 : f32 to vector<2x64xf32>
    %51 = arith.mulf %50, %26 : vector<2x64xf32>
    %52 = vector.extract_strided_slice %47 {offsets = [0, 0], sizes = [2, 64], strides = [1, 1]} : vector<2x128xf32> to vector<2x64xf32>
    %53 = arith.addf %52, %40 : vector<2x64xf32>
    %54 = math.tanh %53 : vector<2x64xf32>
    %cst_35 = arith.constant 5.000000e-01 : f32
    %55 = vector.broadcast %cst_35 : f32 to vector<2x64xf32>
    %56 = arith.mulf %55, %54 : vector<2x64xf32>
    %57 = arith.addf %51, %56 : vector<2x64xf32>
    %cst_36 = arith.constant 5.000000e-01 : f32
    %58 = vector.broadcast %cst_36 : f32 to vector<2x64xf32>
    %59 = arith.mulf %58, %34 : vector<2x64xf32>
    %60 = vector.extract_strided_slice %49 {offsets = [0, 64], sizes = [2, 64], strides = [1, 1]} : vector<2x128xf32> to vector<2x64xf32>
    %61 = arith.addf %60, %42 : vector<2x64xf32>
    %62 = math.tanh %61 : vector<2x64xf32>
    %cst_37 = arith.constant 5.000000e-01 : f32
    %63 = vector.broadcast %cst_37 : f32 to vector<2x64xf32>
    %64 = arith.mulf %63, %62 : vector<2x64xf32>
    %65 = arith.addf %59, %64 : vector<2x64xf32>
    %66 = arith.index_cast %43 : i32 to index
    %c0_38 = arith.constant 0 : index
    %67 = vector.load %arg8[%66, %c0_38] : memref<16x64xf32, #tpu.memory_space<vmem>>, vector<2x64xf32>
    tpu.vector_store %arg8[%66, %c0_38], %57 {strides = array<i32>} : memref<16x64xf32, #tpu.memory_space<vmem>>, vector<2x64xf32>,
    %68 = arith.index_cast %45 : i32 to index
    %c0_39 = arith.constant 0 : index
    %69 = vector.load %arg9[%68, %c0_39] : memref<16x64xf32, #tpu.memory_space<vmem>>, vector<2x64xf32>
    tpu.vector_store %arg9[%68, %c0_39], %65 {strides = array<i32>} : memref<16x64xf32, #tpu.memory_space<vmem>>, vector<2x64xf32>,
    %c2_i32_40 = arith.constant 2 : i32
    %c0_41 = arith.constant 0 : index
    %c0_42 = arith.constant 0 : index
    %70 = vector.load %arg3[%c0_41, %c0_42] : memref<64x64xf32, #tpu.memory_space<vmem>>, vector<64x64xf32>
    %cst_43 = arith.constant dense<0.000000e+00> : vector<2x64xf32>
    %71 = tpu.matmul %57, %70, %cst_43 {dimension_numbers = #tpu.dot_dimension_numbers<[1], [0], [0], [1], [0, 0, 1, 1], [], []>} : vector<2x64xf32>, vector<64x64xf32>, vector<2x64xf32> -> vector<2x64xf32>
    %c0_44 = arith.constant 0 : index
    %c0_45 = arith.constant 0 : index
    %72 = vector.load %arg4[%c0_44, %c0_45] : memref<64x64xf32, #tpu.memory_space<vmem>>, vector<64x64xf32>
    %cst_46 = arith.constant dense<0.000000e+00> : vector<2x64xf32>
    %73 = tpu.matmul %65, %72, %cst_46 {dimension_numbers = #tpu.dot_dimension_numbers<[1], [0], [0], [1], [0, 0, 1, 1], [], []>} : vector<2x64xf32>, vector<64x64xf32>, vector<2x64xf32> -> vector<2x64xf32>
    %c2_i32_47 = arith.constant 2 : i32
    %74 = arith.muli %c2_i32_40, %c2_i32_47 : i32
    %c7_i32_48 = arith.constant 7 : i32
    %75 = arith.subi %c7_i32_48, %c2_i32_40 : i32
    %c2_i32_49 = arith.constant 2 : i32
    %76 = arith.muli %75, %c2_i32_49 : i32
    %77 = arith.index_cast %74 : i32 to index
    %c0_50 = arith.constant 0 : index
    %78 = vector.load %arg7[%77, %c0_50] : memref<16x128xf32, #tpu.memory_space<vmem>>, vector<2x128xf32>
    %79 = arith.index_cast %76 : i32 to index
    %c0_51 = arith.constant 0 : index
    %80 = vector.load %arg7[%79, %c0_51] : memref<16x128xf32, #tpu.memory_space<vmem>>, vector<2x128xf32>
    %cst_52 = arith.constant 5.000000e-01 : f32
    %81 = vector.broadcast %cst_52 : f32 to vector<2x64xf32>
    %82 = arith.mulf %81, %57 : vector<2x64xf32>
    %83 = vector.extract_strided_slice %78 {offsets = [0, 0], sizes = [2, 64], strides = [1, 1]} : vector<2x128xf32> to vector<2x64xf32>
    %84 = arith.addf %83, %71 : vector<2x64xf32>
    %85 = math.tanh %84 : vector<2x64xf32>
    %cst_53 = arith.constant 5.000000e-01 : f32
    %86 = vector.broadcast %cst_53 : f32 to vector<2x64xf32>
    %87 = arith.mulf %86, %85 : vector<2x64xf32>
    %88 = arith.addf %82, %87 : vector<2x64xf32>
    %cst_54 = arith.constant 5.000000e-01 : f32
    %89 = vector.broadcast %cst_54 : f32 to vector<2x64xf32>
    %90 = arith.mulf %89, %65 : vector<2x64xf32>
    %91 = vector.extract_strided_slice %80 {offsets = [0, 64], sizes = [2, 64], strides = [1, 1]} : vector<2x128xf32> to vector<2x64xf32>
    %92 = arith.addf %91, %73 : vector<2x64xf32>
    %93 = math.tanh %92 : vector<2x64xf32>
    %cst_55 = arith.constant 5.000000e-01 : f32
    %94 = vector.broadcast %cst_55 : f32 to vector<2x64xf32>
    %95 = arith.mulf %94, %93 : vector<2x64xf32>
    %96 = arith.addf %90, %95 : vector<2x64xf32>
    %97 = arith.index_cast %74 : i32 to index
    %c0_56 = arith.constant 0 : index
    %98 = vector.load %arg8[%97, %c0_56] : memref<16x64xf32, #tpu.memory_space<vmem>>, vector<2x64xf32>
    tpu.vector_store %arg8[%97, %c0_56], %88 {strides = array<i32>} : memref<16x64xf32, #tpu.memory_space<vmem>>, vector<2x64xf32>,
    %99 = arith.index_cast %76 : i32 to index
    %c0_57 = arith.constant 0 : index
    %100 = vector.load %arg9[%99, %c0_57] : memref<16x64xf32, #tpu.memory_space<vmem>>, vector<2x64xf32>
    tpu.vector_store %arg9[%99, %c0_57], %96 {strides = array<i32>} : memref<16x64xf32, #tpu.memory_space<vmem>>, vector<2x64xf32>,
    %c3_i32 = arith.constant 3 : i32
    %c0_58 = arith.constant 0 : index
    %c0_59 = arith.constant 0 : index
    %101 = vector.load %arg3[%c0_58, %c0_59] : memref<64x64xf32, #tpu.memory_space<vmem>>, vector<64x64xf32>
    %cst_60 = arith.constant dense<0.000000e+00> : vector<2x64xf32>
    %102 = tpu.matmul %88, %101, %cst_60 {dimension_numbers = #tpu.dot_dimension_numbers<[1], [0], [0], [1], [0, 0, 1, 1], [], []>} : vector<2x64xf32>, vector<64x64xf32>, vector<2x64xf32> -> vector<2x64xf32>
    %c0_61 = arith.constant 0 : index
    %c0_62 = arith.constant 0 : index
    %103 = vector.load %arg4[%c0_61, %c0_62] : memref<64x64xf32, #tpu.memory_space<vmem>>, vector<64x64xf32>
    %cst_63 = arith.constant dense<0.000000e+00> : vector<2x64xf32>
    %104 = tpu.matmul %96, %103, %cst_63 {dimension_numbers = #tpu.dot_dimension_numbers<[1], [0], [0], [1], [0, 0, 1, 1], [], []>} : vector<2x64xf32>, vector<64x64xf32>, vector<2x64xf32> -> vector<2x64xf32>
    %c2_i32_64 = arith.constant 2 : i32
    %105 = arith.muli %c3_i32, %c2_i32_64 : i32
    %c7_i32_65 = arith.constant 7 : i32
    %106 = arith.subi %c7_i32_65, %c3_i32 : i32
    %c2_i32_66 = arith.constant 2 : i32
    %107 = arith.muli %106, %c2_i32_66 : i32
    %108 = arith.index_cast %105 : i32 to index
    %c0_67 = arith.constant 0 : index
    %109 = vector.load %arg7[%108, %c0_67] : memref<16x128xf32, #tpu.memory_space<vmem>>, vector<2x128xf32>
    %110 = arith.index_cast %107 : i32 to index
    %c0_68 = arith.constant 0 : index
    %111 = vector.load %arg7[%110, %c0_68] : memref<16x128xf32, #tpu.memory_space<vmem>>, vector<2x128xf32>
    %cst_69 = arith.constant 5.000000e-01 : f32
    %112 = vector.broadcast %cst_69 : f32 to vector<2x64xf32>
    %113 = arith.mulf %112, %88 : vector<2x64xf32>
    %114 = vector.extract_strided_slice %109 {offsets = [0, 0], sizes = [2, 64], strides = [1, 1]} : vector<2x128xf32> to vector<2x64xf32>
    %115 = arith.addf %114, %102 : vector<2x64xf32>
    %116 = math.tanh %115 : vector<2x64xf32>
    %cst_70 = arith.constant 5.000000e-01 : f32
    %117 = vector.broadcast %cst_70 : f32 to vector<2x64xf32>
    %118 = arith.mulf %117, %116 : vector<2x64xf32>
    %119 = arith.addf %113, %118 : vector<2x64xf32>
    %cst_71 = arith.constant 5.000000e-01 : f32
    %120 = vector.broadcast %cst_71 : f32 to vector<2x64xf32>
    %121 = arith.mulf %120, %96 : vector<2x64xf32>
    %122 = vector.extract_strided_slice %111 {offsets = [0, 64], sizes = [2, 64], strides = [1, 1]} : vector<2x128xf32> to vector<2x64xf32>
    %123 = arith.addf %122, %104 : vector<2x64xf32>
    %124 = math.tanh %123 : vector<2x64xf32>
    %cst_72 = arith.constant 5.000000e-01 : f32
    %125 = vector.broadcast %cst_72 : f32 to vector<2x64xf32>
    %126 = arith.mulf %125, %124 : vector<2x64xf32>
    %127 = arith.addf %121, %126 : vector<2x64xf32>
    %128 = arith.index_cast %105 : i32 to index
    %c0_73 = arith.constant 0 : index
    %129 = vector.load %arg8[%128, %c0_73] : memref<16x64xf32, #tpu.memory_space<vmem>>, vector<2x64xf32>
    tpu.vector_store %arg8[%128, %c0_73], %119 {strides = array<i32>} : memref<16x64xf32, #tpu.memory_space<vmem>>, vector<2x64xf32>,
    %130 = arith.index_cast %107 : i32 to index
    %c0_74 = arith.constant 0 : index
    %131 = vector.load %arg9[%130, %c0_74] : memref<16x64xf32, #tpu.memory_space<vmem>>, vector<2x64xf32>
    tpu.vector_store %arg9[%130, %c0_74], %127 {strides = array<i32>} : memref<16x64xf32, #tpu.memory_space<vmem>>, vector<2x64xf32>,
    %c4_i32 = arith.constant 4 : i32
    %c0_75 = arith.constant 0 : index
    %c0_76 = arith.constant 0 : index
    %132 = vector.load %arg3[%c0_75, %c0_76] : memref<64x64xf32, #tpu.memory_space<vmem>>, vector<64x64xf32>
    %cst_77 = arith.constant dense<0.000000e+00> : vector<2x64xf32>
    %133 = tpu.matmul %119, %132, %cst_77 {dimension_numbers = #tpu.dot_dimension_numbers<[1], [0], [0], [1], [0, 0, 1, 1], [], []>} : vector<2x64xf32>, vector<64x64xf32>, vector<2x64xf32> -> vector<2x64xf32>
    %c0_78 = arith.constant 0 : index
    %c0_79 = arith.constant 0 : index
    %134 = vector.load %arg4[%c0_78, %c0_79] : memref<64x64xf32, #tpu.memory_space<vmem>>, vector<64x64xf32>
    %cst_80 = arith.constant dense<0.000000e+00> : vector<2x64xf32>
    %135 = tpu.matmul %127, %134, %cst_80 {dimension_numbers = #tpu.dot_dimension_numbers<[1], [0], [0], [1], [0, 0, 1, 1], [], []>} : vector<2x64xf32>, vector<64x64xf32>, vector<2x64xf32> -> vector<2x64xf32>
    %c2_i32_81 = arith.constant 2 : i32
    %136 = arith.muli %c4_i32, %c2_i32_81 : i32
    %c7_i32_82 = arith.constant 7 : i32
    %137 = arith.subi %c7_i32_82, %c4_i32 : i32
    %c2_i32_83 = arith.constant 2 : i32
    %138 = arith.muli %137, %c2_i32_83 : i32
    %139 = arith.index_cast %136 : i32 to index
    %c0_84 = arith.constant 0 : index
    %140 = vector.load %arg7[%139, %c0_84] : memref<16x128xf32, #tpu.memory_space<vmem>>, vector<2x128xf32>
    %141 = arith.index_cast %138 : i32 to index
    %c0_85 = arith.constant 0 : index
    %142 = vector.load %arg7[%141, %c0_85] : memref<16x128xf32, #tpu.memory_space<vmem>>, vector<2x128xf32>
    %cst_86 = arith.constant 5.000000e-01 : f32
    %143 = vector.broadcast %cst_86 : f32 to vector<2x64xf32>
    %144 = arith.mulf %143, %119 : vector<2x64xf32>
    %145 = vector.extract_strided_slice %140 {offsets = [0, 0], sizes = [2, 64], strides = [1, 1]} : vector<2x128xf32> to vector<2x64xf32>
    %146 = arith.addf %145, %133 : vector<2x64xf32>
    %147 = math.tanh %146 : vector<2x64xf32>
    %cst_87 = arith.constant 5.000000e-01 : f32
    %148 = vector.broadcast %cst_87 : f32 to vector<2x64xf32>
    %149 = arith.mulf %148, %147 : vector<2x64xf32>
    %150 = arith.addf %144, %149 : vector<2x64xf32>
    %cst_88 = arith.constant 5.000000e-01 : f32
    %151 = vector.broadcast %cst_88 : f32 to vector<2x64xf32>
    %152 = arith.mulf %151, %127 : vector<2x64xf32>
    %153 = vector.extract_strided_slice %142 {offsets = [0, 64], sizes = [2, 64], strides = [1, 1]} : vector<2x128xf32> to vector<2x64xf32>
    %154 = arith.addf %153, %135 : vector<2x64xf32>
    %155 = math.tanh %154 : vector<2x64xf32>
    %cst_89 = arith.constant 5.000000e-01 : f32
    %156 = vector.broadcast %cst_89 : f32 to vector<2x64xf32>
    %157 = arith.mulf %156, %155 : vector<2x64xf32>
    %158 = arith.addf %152, %157 : vector<2x64xf32>
    %159 = arith.index_cast %136 : i32 to index
    %c0_90 = arith.constant 0 : index
    %160 = vector.load %arg8[%159, %c0_90] : memref<16x64xf32, #tpu.memory_space<vmem>>, vector<2x64xf32>
    tpu.vector_store %arg8[%159, %c0_90], %150 {strides = array<i32>} : memref<16x64xf32, #tpu.memory_space<vmem>>, vector<2x64xf32>,
    %161 = arith.index_cast %138 : i32 to index
    %c0_91 = arith.constant 0 : index
    %162 = vector.load %arg9[%161, %c0_91] : memref<16x64xf32, #tpu.memory_space<vmem>>, vector<2x64xf32>
    tpu.vector_store %arg9[%161, %c0_91], %158 {strides = array<i32>} : memref<16x64xf32, #tpu.memory_space<vmem>>, vector<2x64xf32>,
    %c5_i32 = arith.constant 5 : i32
    %c0_92 = arith.constant 0 : index
    %c0_93 = arith.constant 0 : index
    %163 = vector.load %arg3[%c0_92, %c0_93] : memref<64x64xf32, #tpu.memory_space<vmem>>, vector<64x64xf32>
    %cst_94 = arith.constant dense<0.000000e+00> : vector<2x64xf32>
    %164 = tpu.matmul %150, %163, %cst_94 {dimension_numbers = #tpu.dot_dimension_numbers<[1], [0], [0], [1], [0, 0, 1, 1], [], []>} : vector<2x64xf32>, vector<64x64xf32>, vector<2x64xf32> -> vector<2x64xf32>
    %c0_95 = arith.constant 0 : index
    %c0_96 = arith.constant 0 : index
    %165 = vector.load %arg4[%c0_95, %c0_96] : memref<64x64xf32, #tpu.memory_space<vmem>>, vector<64x64xf32>
    %cst_97 = arith.constant dense<0.000000e+00> : vector<2x64xf32>
    %166 = tpu.matmul %158, %165, %cst_97 {dimension_numbers = #tpu.dot_dimension_numbers<[1], [0], [0], [1], [0, 0, 1, 1], [], []>} : vector<2x64xf32>, vector<64x64xf32>, vector<2x64xf32> -> vector<2x64xf32>
    %c2_i32_98 = arith.constant 2 : i32
    %167 = arith.muli %c5_i32, %c2_i32_98 : i32
    %c7_i32_99 = arith.constant 7 : i32
    %168 = arith.subi %c7_i32_99, %c5_i32 : i32
    %c2_i32_100 = arith.constant 2 : i32
    %169 = arith.muli %168, %c2_i32_100 : i32
    %170 = arith.index_cast %167 : i32 to index
    %c0_101 = arith.constant 0 : index
    %171 = vector.load %arg7[%170, %c0_101] : memref<16x128xf32, #tpu.memory_space<vmem>>, vector<2x128xf32>
    %172 = arith.index_cast %169 : i32 to index
    %c0_102 = arith.constant 0 : index
    %173 = vector.load %arg7[%172, %c0_102] : memref<16x128xf32, #tpu.memory_space<vmem>>, vector<2x128xf32>
    %cst_103 = arith.constant 5.000000e-01 : f32
    %174 = vector.broadcast %cst_103 : f32 to vector<2x64xf32>
    %175 = arith.mulf %174, %150 : vector<2x64xf32>
    %176 = vector.extract_strided_slice %171 {offsets = [0, 0], sizes = [2, 64], strides = [1, 1]} : vector<2x128xf32> to vector<2x64xf32>
    %177 = arith.addf %176, %164 : vector<2x64xf32>
    %178 = math.tanh %177 : vector<2x64xf32>
    %cst_104 = arith.constant 5.000000e-01 : f32
    %179 = vector.broadcast %cst_104 : f32 to vector<2x64xf32>
    %180 = arith.mulf %179, %178 : vector<2x64xf32>
    %181 = arith.addf %175, %180 : vector<2x64xf32>
    %cst_105 = arith.constant 5.000000e-01 : f32
    %182 = vector.broadcast %cst_105 : f32 to vector<2x64xf32>
    %183 = arith.mulf %182, %158 : vector<2x64xf32>
    %184 = vector.extract_strided_slice %173 {offsets = [0, 64], sizes = [2, 64], strides = [1, 1]} : vector<2x128xf32> to vector<2x64xf32>
    %185 = arith.addf %184, %166 : vector<2x64xf32>
    %186 = math.tanh %185 : vector<2x64xf32>
    %cst_106 = arith.constant 5.000000e-01 : f32
    %187 = vector.broadcast %cst_106 : f32 to vector<2x64xf32>
    %188 = arith.mulf %187, %186 : vector<2x64xf32>
    %189 = arith.addf %183, %188 : vector<2x64xf32>
    %190 = arith.index_cast %167 : i32 to index
    %c0_107 = arith.constant 0 : index
    %191 = vector.load %arg8[%190, %c0_107] : memref<16x64xf32, #tpu.memory_space<vmem>>, vector<2x64xf32>
    tpu.vector_store %arg8[%190, %c0_107], %181 {strides = array<i32>} : memref<16x64xf32, #tpu.memory_space<vmem>>, vector<2x64xf32>,
    %192 = arith.index_cast %169 : i32 to index
    %c0_108 = arith.constant 0 : index
    %193 = vector.load %arg9[%192, %c0_108] : memref<16x64xf32, #tpu.memory_space<vmem>>, vector<2x64xf32>
    tpu.vector_store %arg9[%192, %c0_108], %189 {strides = array<i32>} : memref<16x64xf32, #tpu.memory_space<vmem>>, vector<2x64xf32>,
    %c6_i32 = arith.constant 6 : i32
    %c0_109 = arith.constant 0 : index
    %c0_110 = arith.constant 0 : index
    %194 = vector.load %arg3[%c0_109, %c0_110] : memref<64x64xf32, #tpu.memory_space<vmem>>, vector<64x64xf32>
    %cst_111 = arith.constant dense<0.000000e+00> : vector<2x64xf32>
    %195 = tpu.matmul %181, %194, %cst_111 {dimension_numbers = #tpu.dot_dimension_numbers<[1], [0], [0], [1], [0, 0, 1, 1], [], []>} : vector<2x64xf32>, vector<64x64xf32>, vector<2x64xf32> -> vector<2x64xf32>
    %c0_112 = arith.constant 0 : index
    %c0_113 = arith.constant 0 : index
    %196 = vector.load %arg4[%c0_112, %c0_113] : memref<64x64xf32, #tpu.memory_space<vmem>>, vector<64x64xf32>
    %cst_114 = arith.constant dense<0.000000e+00> : vector<2x64xf32>
    %197 = tpu.matmul %189, %196, %cst_114 {dimension_numbers = #tpu.dot_dimension_numbers<[1], [0], [0], [1], [0, 0, 1, 1], [], []>} : vector<2x64xf32>, vector<64x64xf32>, vector<2x64xf32> -> vector<2x64xf32>
    %c2_i32_115 = arith.constant 2 : i32
    %198 = arith.muli %c6_i32, %c2_i32_115 : i32
    %c7_i32_116 = arith.constant 7 : i32
    %199 = arith.subi %c7_i32_116, %c6_i32 : i32
    %c2_i32_117 = arith.constant 2 : i32
    %200 = arith.muli %199, %c2_i32_117 : i32
    %201 = arith.index_cast %198 : i32 to index
    %c0_118 = arith.constant 0 : index
    %202 = vector.load %arg7[%201, %c0_118] : memref<16x128xf32, #tpu.memory_space<vmem>>, vector<2x128xf32>
    %203 = arith.index_cast %200 : i32 to index
    %c0_119 = arith.constant 0 : index
    %204 = vector.load %arg7[%203, %c0_119] : memref<16x128xf32, #tpu.memory_space<vmem>>, vector<2x128xf32>
    %cst_120 = arith.constant 5.000000e-01 : f32
    %205 = vector.broadcast %cst_120 : f32 to vector<2x64xf32>
    %206 = arith.mulf %205, %181 : vector<2x64xf32>
    %207 = vector.extract_strided_slice %202 {offsets = [0, 0], sizes = [2, 64], strides = [1, 1]} : vector<2x128xf32> to vector<2x64xf32>
    %208 = arith.addf %207, %195 : vector<2x64xf32>
    %209 = math.tanh %208 : vector<2x64xf32>
    %cst_121 = arith.constant 5.000000e-01 : f32
    %210 = vector.broadcast %cst_121 : f32 to vector<2x64xf32>
    %211 = arith.mulf %210, %209 : vector<2x64xf32>
    %212 = arith.addf %206, %211 : vector<2x64xf32>
    %cst_122 = arith.constant 5.000000e-01 : f32
    %213 = vector.broadcast %cst_122 : f32 to vector<2x64xf32>
    %214 = arith.mulf %213, %189 : vector<2x64xf32>
    %215 = vector.extract_strided_slice %204 {offsets = [0, 64], sizes = [2, 64], strides = [1, 1]} : vector<2x128xf32> to vector<2x64xf32>
    %216 = arith.addf %215, %197 : vector<2x64xf32>
    %217 = math.tanh %216 : vector<2x64xf32>
    %cst_123 = arith.constant 5.000000e-01 : f32
    %218 = vector.broadcast %cst_123 : f32 to vector<2x64xf32>
    %219 = arith.mulf %218, %217 : vector<2x64xf32>
    %220 = arith.addf %214, %219 : vector<2x64xf32>
    %221 = arith.index_cast %198 : i32 to index
    %c0_124 = arith.constant 0 : index
    %222 = vector.load %arg8[%221, %c0_124] : memref<16x64xf32, #tpu.memory_space<vmem>>, vector<2x64xf32>
    tpu.vector_store %arg8[%221, %c0_124], %212 {strides = array<i32>} : memref<16x64xf32, #tpu.memory_space<vmem>>, vector<2x64xf32>,
    %223 = arith.index_cast %200 : i32 to index
    %c0_125 = arith.constant 0 : index
    %224 = vector.load %arg9[%223, %c0_125] : memref<16x64xf32, #tpu.memory_space<vmem>>, vector<2x64xf32>
    tpu.vector_store %arg9[%223, %c0_125], %220 {strides = array<i32>} : memref<16x64xf32, #tpu.memory_space<vmem>>, vector<2x64xf32>,
    %c7_i32_126 = arith.constant 7 : i32
    %c0_127 = arith.constant 0 : index
    %c0_128 = arith.constant 0 : index
    %225 = vector.load %arg3[%c0_127, %c0_128] : memref<64x64xf32, #tpu.memory_space<vmem>>, vector<64x64xf32>
    %cst_129 = arith.constant dense<0.000000e+00> : vector<2x64xf32>
    %226 = tpu.matmul %212, %225, %cst_129 {dimension_numbers = #tpu.dot_dimension_numbers<[1], [0], [0], [1], [0, 0, 1, 1], [], []>} : vector<2x64xf32>, vector<64x64xf32>, vector<2x64xf32> -> vector<2x64xf32>
    %c0_130 = arith.constant 0 : index
    %c0_131 = arith.constant 0 : index
    %227 = vector.load %arg4[%c0_130, %c0_131] : memref<64x64xf32, #tpu.memory_space<vmem>>, vector<64x64xf32>
    %cst_132 = arith.constant dense<0.000000e+00> : vector<2x64xf32>
    %228 = tpu.matmul %220, %227, %cst_132 {dimension_numbers = #tpu.dot_dimension_numbers<[1], [0], [0], [1], [0, 0, 1, 1], [], []>} : vector<2x64xf32>, vector<64x64xf32>, vector<2x64xf32> -> vector<2x64xf32>
    %c2_i32_133 = arith.constant 2 : i32
    %229 = arith.muli %c7_i32_126, %c2_i32_133 : i32
    %c7_i32_134 = arith.constant 7 : i32
    %230 = arith.subi %c7_i32_134, %c7_i32_126 : i32
    %c2_i32_135 = arith.constant 2 : i32
    %231 = arith.muli %230, %c2_i32_135 : i32
    %232 = arith.index_cast %229 : i32 to index
    %c0_136 = arith.constant 0 : index
    %233 = vector.load %arg7[%232, %c0_136] : memref<16x128xf32, #tpu.memory_space<vmem>>, vector<2x128xf32>
    %234 = arith.index_cast %231 : i32 to index
    %c0_137 = arith.constant 0 : index
    %235 = vector.load %arg7[%234, %c0_137] : memref<16x128xf32, #tpu.memory_space<vmem>>, vector<2x128xf32>
    %cst_138 = arith.constant 5.000000e-01 : f32
    %236 = vector.broadcast %cst_138 : f32 to vector<2x64xf32>
    %237 = arith.mulf %236, %212 : vector<2x64xf32>
    %238 = vector.extract_strided_slice %233 {offsets = [0, 0], sizes = [2, 64], strides = [1, 1]} : vector<2x128xf32> to vector<2x64xf32>
    %239 = arith.addf %238, %226 : vector<2x64xf32>
    %240 = math.tanh %239 : vector<2x64xf32>
    %cst_139 = arith.constant 5.000000e-01 : f32
    %241 = vector.broadcast %cst_139 : f32 to vector<2x64xf32>
    %242 = arith.mulf %241, %240 : vector<2x64xf32>
    %243 = arith.addf %237, %242 : vector<2x64xf32>
    %cst_140 = arith.constant 5.000000e-01 : f32
    %244 = vector.broadcast %cst_140 : f32 to vector<2x64xf32>
    %245 = arith.mulf %244, %220 : vector<2x64xf32>
    %246 = vector.extract_strided_slice %235 {offsets = [0, 64], sizes = [2, 64], strides = [1, 1]} : vector<2x128xf32> to vector<2x64xf32>
    %247 = arith.addf %246, %228 : vector<2x64xf32>
    %248 = math.tanh %247 : vector<2x64xf32>
    %cst_141 = arith.constant 5.000000e-01 : f32
    %249 = vector.broadcast %cst_141 : f32 to vector<2x64xf32>
    %250 = arith.mulf %249, %248 : vector<2x64xf32>
    %251 = arith.addf %245, %250 : vector<2x64xf32>
    %252 = arith.index_cast %229 : i32 to index
    %c0_142 = arith.constant 0 : index
    %253 = vector.load %arg8[%252, %c0_142] : memref<16x64xf32, #tpu.memory_space<vmem>>, vector<2x64xf32>
    tpu.vector_store %arg8[%252, %c0_142], %243 {strides = array<i32>} : memref<16x64xf32, #tpu.memory_space<vmem>>, vector<2x64xf32>,
    %254 = arith.index_cast %231 : i32 to index
    %c0_143 = arith.constant 0 : index
    %255 = vector.load %arg9[%254, %c0_143] : memref<16x64xf32, #tpu.memory_space<vmem>>, vector<2x64xf32>
    tpu.vector_store %arg9[%254, %c0_143], %251 {strides = array<i32>} : memref<16x64xf32, #tpu.memory_space<vmem>>, vector<2x64xf32>,
    %c8_i32 = arith.constant 8 : i32
    %c0_144 = arith.constant 0 : index
    %c0_145 = arith.constant 0 : index
    %256 = vector.load %arg8[%c0_144, %c0_145] : memref<16x64xf32, #tpu.memory_space<vmem>>, vector<16x64xf32>
    %c0_146 = arith.constant 0 : index
    %c0_147 = arith.constant 0 : index
    %257 = vector.load %arg9[%c0_146, %c0_147] : memref<16x64xf32, #tpu.memory_space<vmem>>, vector<16x64xf32>
    %258 = tpu.concatenate %256, %257 in 1 : vector<16x64xf32>, vector<16x64xf32> -> vector<16x128xf32>
    %c0_148 = arith.constant 0 : index
    %c0_149 = arith.constant 0 : index
    %259 = vector.load %arg6[%c0_148, %c0_149] : memref<16x128xf32, #tpu.memory_space<vmem>>, vector<16x128xf32>
    tpu.vector_store %arg6[%c0_148, %c0_149], %258 {strides = array<i32>} : memref<16x128xf32, #tpu.memory_space<vmem>>, vector<16x128xf32>,
    return
  }
  func.func @transform_0(%arg0: i32) -> (i32, i32) {
    %c0_i32 = arith.constant 0 : i32
    %c0_i32_0 = arith.constant 0 : i32
    %c0_i32_1 = arith.constant 0 : i32
    return %c0_i32, %c0_i32_0 : i32, i32
  }
  func.func @transform_1(%arg0: i32) -> (i32, i32) {
    %c0_i32 = arith.constant 0 : i32
    %c0_i32_0 = arith.constant 0 : i32
    %c0_i32_1 = arith.constant 0 : i32
    return %c0_i32, %c0_i32_0 : i32, i32
  }
  func.func @transform_2(%arg0: i32) -> (i32, i32) {
    %c0_i32 = arith.constant 0 : i32
    %c0_i32_0 = arith.constant 0 : i32
    %c0_i32_1 = arith.constant 0 : i32
    return %c0_i32, %c0_i32_0 : i32, i32
  }
  func.func @transform_3(%arg0: i32) -> (i32, i32) {
    %c0_i32 = arith.constant 0 : i32
    %c0_i32_0 = arith.constant 0 : i32
    %c0_i32_1 = arith.constant 0 : i32
    return %c0_i32, %c0_i32_0 : i32, i32
  }
  func.func @transform_4(%arg0: i32) -> (i32, i32) {
    %c0_i32 = arith.constant 0 : i32
    %c0_i32_0 = arith.constant 0 : i32
    %c0_i32_1 = arith.constant 0 : i32
    return %c0_i32, %c0_i32_0 : i32, i32
  }
  func.func @transform_5(%arg0: i32) -> (i32, i32) {
    %c0_i32 = arith.constant 0 : i32
    %c0_i32_0 = arith.constant 0 : i32
    %c0_i32_1 = arith.constant 0 : i32
    return %c0_i32, %c0_i32_0 : i32, i32
  }
}

module attributes {stable_mosaic.version = 11 : i64} {
  func.func @_esn_bidir_kernel(%arg0: i32, %arg1: memref<12x300xf32, #tpu.memory_space<vmem>>, %arg2: memref<300x128xf32, #tpu.memory_space<vmem>>, %arg3: memref<64x64xf32, #tpu.memory_space<vmem>>, %arg4: memref<64x64xf32, #tpu.memory_space<vmem>>, %arg5: memref<1x128xf32, #tpu.memory_space<vmem>>, %arg6: memref<12x128xf32, #tpu.memory_space<vmem>>, %arg7: memref<12x128xf32, #tpu.memory_space<vmem>>, %arg8: memref<12x64xf32, #tpu.memory_space<vmem>>, %arg9: memref<12x64xf32, #tpu.memory_space<vmem>>) attributes {dimension_semantics = [#tpu.dimension_semantics<arbitrary>], iteration_bounds = array<i64: 1>, scalar_prefetch = 0 : i64, scratch_operands = 3 : i64, tpu.core_type = #tpu.core_type<tc>, window_params = [{pipeline_mode = #tpu.pipeline_mode<synchronous>, transform_indices = @transform_0, window_bounds = array<i64: 12, 300>}, {pipeline_mode = #tpu.pipeline_mode<synchronous>, transform_indices = @transform_1, window_bounds = array<i64: 300, 128>}, {pipeline_mode = #tpu.pipeline_mode<synchronous>, transform_indices = @transform_2, window_bounds = array<i64: 64, 64>}, {pipeline_mode = #tpu.pipeline_mode<synchronous>, transform_indices = @transform_3, window_bounds = array<i64: 64, 64>}, {pipeline_mode = #tpu.pipeline_mode<synchronous>, transform_indices = @transform_4, window_bounds = array<i64: 1, 128>}, {pipeline_mode = #tpu.pipeline_mode<synchronous>, transform_indices = @transform_5, window_bounds = array<i64: 12, 128>}]} {
    %c0 = arith.constant 0 : index
    %c0_0 = arith.constant 0 : index
    %0 = vector.load %arg1[%c0, %c0_0] : memref<12x300xf32, #tpu.memory_space<vmem>>, vector<12x300xf32>
    %c0_1 = arith.constant 0 : index
    %c0_2 = arith.constant 0 : index
    %1 = vector.load %arg2[%c0_1, %c0_2] : memref<300x128xf32, #tpu.memory_space<vmem>>, vector<300x128xf32>
    %cst = arith.constant dense<0.000000e+00> : vector<12x128xf32>
    %2 = tpu.matmul %0, %1, %cst {dimension_numbers = #tpu.dot_dimension_numbers<[1], [0], [0], [1], [0, 0, 1, 1], [], []>} : vector<12x300xf32>, vector<300x128xf32>, vector<12x128xf32> -> vector<12x128xf32>
    %c0_3 = arith.constant 0 : index
    %c0_4 = arith.constant 0 : index
    %3 = vector.load %arg5[%c0_3, %c0_4] : memref<1x128xf32, #tpu.memory_space<vmem>>, vector<1x128xf32>
    %4 = vector.broadcast %3 : vector<1x128xf32> to vector<12x128xf32>
    %5 = arith.addf %2, %4 : vector<12x128xf32>
    %c0_5 = arith.constant 0 : index
    %c0_6 = arith.constant 0 : index
    %6 = vector.load %arg7[%c0_5, %c0_6] : memref<12x128xf32, #tpu.memory_space<vmem>>, vector<12x128xf32>
    tpu.vector_store %arg7[%c0_5, %c0_6], %5 {strides = array<i32>} : memref<12x128xf32, #tpu.memory_space<vmem>>, vector<12x128xf32>,
    %cst_7 = arith.constant 0.000000e+00 : f32
    %7 = vector.broadcast %cst_7 : f32 to vector<2x64xf32>
    %c0_i32 = arith.constant 0 : i32
    %c0_8 = arith.constant 0 : index
    %c0_9 = arith.constant 0 : index
    %8 = vector.load %arg3[%c0_8, %c0_9] : memref<64x64xf32, #tpu.memory_space<vmem>>, vector<64x64xf32>
    %cst_10 = arith.constant dense<0.000000e+00> : vector<2x64xf32>
    %9 = tpu.matmul %7, %8, %cst_10 {dimension_numbers = #tpu.dot_dimension_numbers<[1], [0], [0], [1], [0, 0, 1, 1], [], []>} : vector<2x64xf32>, vector<64x64xf32>, vector<2x64xf32> -> vector<2x64xf32>
    %c0_11 = arith.constant 0 : index
    %c0_12 = arith.constant 0 : index
    %10 = vector.load %arg4[%c0_11, %c0_12] : memref<64x64xf32, #tpu.memory_space<vmem>>, vector<64x64xf32>
    %cst_13 = arith.constant dense<0.000000e+00> : vector<2x64xf32>
    %11 = tpu.matmul %7, %10, %cst_13 {dimension_numbers = #tpu.dot_dimension_numbers<[1], [0], [0], [1], [0, 0, 1, 1], [], []>} : vector<2x64xf32>, vector<64x64xf32>, vector<2x64xf32> -> vector<2x64xf32>
    %c2_i32 = arith.constant 2 : i32
    %12 = arith.muli %c0_i32, %c2_i32 : i32
    %c5_i32 = arith.constant 5 : i32
    %13 = arith.subi %c5_i32, %c0_i32 : i32
    %c2_i32_14 = arith.constant 2 : i32
    %14 = arith.muli %13, %c2_i32_14 : i32
    %15 = arith.index_cast %12 : i32 to index
    %c0_15 = arith.constant 0 : index
    %16 = vector.load %arg7[%15, %c0_15] : memref<12x128xf32, #tpu.memory_space<vmem>>, vector<2x128xf32>
    %17 = arith.index_cast %14 : i32 to index
    %c0_16 = arith.constant 0 : index
    %18 = vector.load %arg7[%17, %c0_16] : memref<12x128xf32, #tpu.memory_space<vmem>>, vector<2x128xf32>
    %cst_17 = arith.constant 5.000000e-01 : f32
    %19 = vector.broadcast %cst_17 : f32 to vector<2x64xf32>
    %20 = arith.mulf %19, %7 : vector<2x64xf32>
    %21 = vector.extract_strided_slice %16 {offsets = [0, 0], sizes = [2, 64], strides = [1, 1]} : vector<2x128xf32> to vector<2x64xf32>
    %22 = arith.addf %21, %9 : vector<2x64xf32>
    %23 = math.tanh %22 : vector<2x64xf32>
    %cst_18 = arith.constant 5.000000e-01 : f32
    %24 = vector.broadcast %cst_18 : f32 to vector<2x64xf32>
    %25 = arith.mulf %24, %23 : vector<2x64xf32>
    %26 = arith.addf %20, %25 : vector<2x64xf32>
    %cst_19 = arith.constant 5.000000e-01 : f32
    %27 = vector.broadcast %cst_19 : f32 to vector<2x64xf32>
    %28 = arith.mulf %27, %7 : vector<2x64xf32>
    %29 = vector.extract_strided_slice %18 {offsets = [0, 64], sizes = [2, 64], strides = [1, 1]} : vector<2x128xf32> to vector<2x64xf32>
    %30 = arith.addf %29, %11 : vector<2x64xf32>
    %31 = math.tanh %30 : vector<2x64xf32>
    %cst_20 = arith.constant 5.000000e-01 : f32
    %32 = vector.broadcast %cst_20 : f32 to vector<2x64xf32>
    %33 = arith.mulf %32, %31 : vector<2x64xf32>
    %34 = arith.addf %28, %33 : vector<2x64xf32>
    %35 = arith.index_cast %12 : i32 to index
    %c0_21 = arith.constant 0 : index
    %36 = vector.load %arg8[%35, %c0_21] : memref<12x64xf32, #tpu.memory_space<vmem>>, vector<2x64xf32>
    tpu.vector_store %arg8[%35, %c0_21], %26 {strides = array<i32>} : memref<12x64xf32, #tpu.memory_space<vmem>>, vector<2x64xf32>,
    %37 = arith.index_cast %14 : i32 to index
    %c0_22 = arith.constant 0 : index
    %38 = vector.load %arg9[%37, %c0_22] : memref<12x64xf32, #tpu.memory_space<vmem>>, vector<2x64xf32>
    tpu.vector_store %arg9[%37, %c0_22], %34 {strides = array<i32>} : memref<12x64xf32, #tpu.memory_space<vmem>>, vector<2x64xf32>,
    %c1_i32 = arith.constant 1 : i32
    %c0_23 = arith.constant 0 : index
    %c0_24 = arith.constant 0 : index
    %39 = vector.load %arg3[%c0_23, %c0_24] : memref<64x64xf32, #tpu.memory_space<vmem>>, vector<64x64xf32>
    %cst_25 = arith.constant dense<0.000000e+00> : vector<2x64xf32>
    %40 = tpu.matmul %26, %39, %cst_25 {dimension_numbers = #tpu.dot_dimension_numbers<[1], [0], [0], [1], [0, 0, 1, 1], [], []>} : vector<2x64xf32>, vector<64x64xf32>, vector<2x64xf32> -> vector<2x64xf32>
    %c0_26 = arith.constant 0 : index
    %c0_27 = arith.constant 0 : index
    %41 = vector.load %arg4[%c0_26, %c0_27] : memref<64x64xf32, #tpu.memory_space<vmem>>, vector<64x64xf32>
    %cst_28 = arith.constant dense<0.000000e+00> : vector<2x64xf32>
    %42 = tpu.matmul %34, %41, %cst_28 {dimension_numbers = #tpu.dot_dimension_numbers<[1], [0], [0], [1], [0, 0, 1, 1], [], []>} : vector<2x64xf32>, vector<64x64xf32>, vector<2x64xf32> -> vector<2x64xf32>
    %c2_i32_29 = arith.constant 2 : i32
    %43 = arith.muli %c1_i32, %c2_i32_29 : i32
    %c5_i32_30 = arith.constant 5 : i32
    %44 = arith.subi %c5_i32_30, %c1_i32 : i32
    %c2_i32_31 = arith.constant 2 : i32
    %45 = arith.muli %44, %c2_i32_31 : i32
    %46 = arith.index_cast %43 : i32 to index
    %c0_32 = arith.constant 0 : index
    %47 = vector.load %arg7[%46, %c0_32] : memref<12x128xf32, #tpu.memory_space<vmem>>, vector<2x128xf32>
    %48 = arith.index_cast %45 : i32 to index
    %c0_33 = arith.constant 0 : index
    %49 = vector.load %arg7[%48, %c0_33] : memref<12x128xf32, #tpu.memory_space<vmem>>, vector<2x128xf32>
    %cst_34 = arith.constant 5.000000e-01 : f32
    %50 = vector.broadcast %cst_34 : f32 to vector<2x64xf32>
    %51 = arith.mulf %50, %26 : vector<2x64xf32>
    %52 = vector.extract_strided_slice %47 {offsets = [0, 0], sizes = [2, 64], strides = [1, 1]} : vector<2x128xf32> to vector<2x64xf32>
    %53 = arith.addf %52, %40 : vector<2x64xf32>
    %54 = math.tanh %53 : vector<2x64xf32>
    %cst_35 = arith.constant 5.000000e-01 : f32
    %55 = vector.broadcast %cst_35 : f32 to vector<2x64xf32>
    %56 = arith.mulf %55, %54 : vector<2x64xf32>
    %57 = arith.addf %51, %56 : vector<2x64xf32>
    %cst_36 = arith.constant 5.000000e-01 : f32
    %58 = vector.broadcast %cst_36 : f32 to vector<2x64xf32>
    %59 = arith.mulf %58, %34 : vector<2x64xf32>
    %60 = vector.extract_strided_slice %49 {offsets = [0, 64], sizes = [2, 64], strides = [1, 1]} : vector<2x128xf32> to vector<2x64xf32>
    %61 = arith.addf %60, %42 : vector<2x64xf32>
    %62 = math.tanh %61 : vector<2x64xf32>
    %cst_37 = arith.constant 5.000000e-01 : f32
    %63 = vector.broadcast %cst_37 : f32 to vector<2x64xf32>
    %64 = arith.mulf %63, %62 : vector<2x64xf32>
    %65 = arith.addf %59, %64 : vector<2x64xf32>
    %66 = arith.index_cast %43 : i32 to index
    %c0_38 = arith.constant 0 : index
    %67 = vector.load %arg8[%66, %c0_38] : memref<12x64xf32, #tpu.memory_space<vmem>>, vector<2x64xf32>
    tpu.vector_store %arg8[%66, %c0_38], %57 {strides = array<i32>} : memref<12x64xf32, #tpu.memory_space<vmem>>, vector<2x64xf32>,
    %68 = arith.index_cast %45 : i32 to index
    %c0_39 = arith.constant 0 : index
    %69 = vector.load %arg9[%68, %c0_39] : memref<12x64xf32, #tpu.memory_space<vmem>>, vector<2x64xf32>
    tpu.vector_store %arg9[%68, %c0_39], %65 {strides = array<i32>} : memref<12x64xf32, #tpu.memory_space<vmem>>, vector<2x64xf32>,
    %c2_i32_40 = arith.constant 2 : i32
    %c0_41 = arith.constant 0 : index
    %c0_42 = arith.constant 0 : index
    %70 = vector.load %arg3[%c0_41, %c0_42] : memref<64x64xf32, #tpu.memory_space<vmem>>, vector<64x64xf32>
    %cst_43 = arith.constant dense<0.000000e+00> : vector<2x64xf32>
    %71 = tpu.matmul %57, %70, %cst_43 {dimension_numbers = #tpu.dot_dimension_numbers<[1], [0], [0], [1], [0, 0, 1, 1], [], []>} : vector<2x64xf32>, vector<64x64xf32>, vector<2x64xf32> -> vector<2x64xf32>
    %c0_44 = arith.constant 0 : index
    %c0_45 = arith.constant 0 : index
    %72 = vector.load %arg4[%c0_44, %c0_45] : memref<64x64xf32, #tpu.memory_space<vmem>>, vector<64x64xf32>
    %cst_46 = arith.constant dense<0.000000e+00> : vector<2x64xf32>
    %73 = tpu.matmul %65, %72, %cst_46 {dimension_numbers = #tpu.dot_dimension_numbers<[1], [0], [0], [1], [0, 0, 1, 1], [], []>} : vector<2x64xf32>, vector<64x64xf32>, vector<2x64xf32> -> vector<2x64xf32>
    %c2_i32_47 = arith.constant 2 : i32
    %74 = arith.muli %c2_i32_40, %c2_i32_47 : i32
    %c5_i32_48 = arith.constant 5 : i32
    %75 = arith.subi %c5_i32_48, %c2_i32_40 : i32
    %c2_i32_49 = arith.constant 2 : i32
    %76 = arith.muli %75, %c2_i32_49 : i32
    %77 = arith.index_cast %74 : i32 to index
    %c0_50 = arith.constant 0 : index
    %78 = vector.load %arg7[%77, %c0_50] : memref<12x128xf32, #tpu.memory_space<vmem>>, vector<2x128xf32>
    %79 = arith.index_cast %76 : i32 to index
    %c0_51 = arith.constant 0 : index
    %80 = vector.load %arg7[%79, %c0_51] : memref<12x128xf32, #tpu.memory_space<vmem>>, vector<2x128xf32>
    %cst_52 = arith.constant 5.000000e-01 : f32
    %81 = vector.broadcast %cst_52 : f32 to vector<2x64xf32>
    %82 = arith.mulf %81, %57 : vector<2x64xf32>
    %83 = vector.extract_strided_slice %78 {offsets = [0, 0], sizes = [2, 64], strides = [1, 1]} : vector<2x128xf32> to vector<2x64xf32>
    %84 = arith.addf %83, %71 : vector<2x64xf32>
    %85 = math.tanh %84 : vector<2x64xf32>
    %cst_53 = arith.constant 5.000000e-01 : f32
    %86 = vector.broadcast %cst_53 : f32 to vector<2x64xf32>
    %87 = arith.mulf %86, %85 : vector<2x64xf32>
    %88 = arith.addf %82, %87 : vector<2x64xf32>
    %cst_54 = arith.constant 5.000000e-01 : f32
    %89 = vector.broadcast %cst_54 : f32 to vector<2x64xf32>
    %90 = arith.mulf %89, %65 : vector<2x64xf32>
    %91 = vector.extract_strided_slice %80 {offsets = [0, 64], sizes = [2, 64], strides = [1, 1]} : vector<2x128xf32> to vector<2x64xf32>
    %92 = arith.addf %91, %73 : vector<2x64xf32>
    %93 = math.tanh %92 : vector<2x64xf32>
    %cst_55 = arith.constant 5.000000e-01 : f32
    %94 = vector.broadcast %cst_55 : f32 to vector<2x64xf32>
    %95 = arith.mulf %94, %93 : vector<2x64xf32>
    %96 = arith.addf %90, %95 : vector<2x64xf32>
    %97 = arith.index_cast %74 : i32 to index
    %c0_56 = arith.constant 0 : index
    %98 = vector.load %arg8[%97, %c0_56] : memref<12x64xf32, #tpu.memory_space<vmem>>, vector<2x64xf32>
    tpu.vector_store %arg8[%97, %c0_56], %88 {strides = array<i32>} : memref<12x64xf32, #tpu.memory_space<vmem>>, vector<2x64xf32>,
    %99 = arith.index_cast %76 : i32 to index
    %c0_57 = arith.constant 0 : index
    %100 = vector.load %arg9[%99, %c0_57] : memref<12x64xf32, #tpu.memory_space<vmem>>, vector<2x64xf32>
    tpu.vector_store %arg9[%99, %c0_57], %96 {strides = array<i32>} : memref<12x64xf32, #tpu.memory_space<vmem>>, vector<2x64xf32>,
    %c3_i32 = arith.constant 3 : i32
    %c0_58 = arith.constant 0 : index
    %c0_59 = arith.constant 0 : index
    %101 = vector.load %arg3[%c0_58, %c0_59] : memref<64x64xf32, #tpu.memory_space<vmem>>, vector<64x64xf32>
    %cst_60 = arith.constant dense<0.000000e+00> : vector<2x64xf32>
    %102 = tpu.matmul %88, %101, %cst_60 {dimension_numbers = #tpu.dot_dimension_numbers<[1], [0], [0], [1], [0, 0, 1, 1], [], []>} : vector<2x64xf32>, vector<64x64xf32>, vector<2x64xf32> -> vector<2x64xf32>
    %c0_61 = arith.constant 0 : index
    %c0_62 = arith.constant 0 : index
    %103 = vector.load %arg4[%c0_61, %c0_62] : memref<64x64xf32, #tpu.memory_space<vmem>>, vector<64x64xf32>
    %cst_63 = arith.constant dense<0.000000e+00> : vector<2x64xf32>
    %104 = tpu.matmul %96, %103, %cst_63 {dimension_numbers = #tpu.dot_dimension_numbers<[1], [0], [0], [1], [0, 0, 1, 1], [], []>} : vector<2x64xf32>, vector<64x64xf32>, vector<2x64xf32> -> vector<2x64xf32>
    %c2_i32_64 = arith.constant 2 : i32
    %105 = arith.muli %c3_i32, %c2_i32_64 : i32
    %c5_i32_65 = arith.constant 5 : i32
    %106 = arith.subi %c5_i32_65, %c3_i32 : i32
    %c2_i32_66 = arith.constant 2 : i32
    %107 = arith.muli %106, %c2_i32_66 : i32
    %108 = arith.index_cast %105 : i32 to index
    %c0_67 = arith.constant 0 : index
    %109 = vector.load %arg7[%108, %c0_67] : memref<12x128xf32, #tpu.memory_space<vmem>>, vector<2x128xf32>
    %110 = arith.index_cast %107 : i32 to index
    %c0_68 = arith.constant 0 : index
    %111 = vector.load %arg7[%110, %c0_68] : memref<12x128xf32, #tpu.memory_space<vmem>>, vector<2x128xf32>
    %cst_69 = arith.constant 5.000000e-01 : f32
    %112 = vector.broadcast %cst_69 : f32 to vector<2x64xf32>
    %113 = arith.mulf %112, %88 : vector<2x64xf32>
    %114 = vector.extract_strided_slice %109 {offsets = [0, 0], sizes = [2, 64], strides = [1, 1]} : vector<2x128xf32> to vector<2x64xf32>
    %115 = arith.addf %114, %102 : vector<2x64xf32>
    %116 = math.tanh %115 : vector<2x64xf32>
    %cst_70 = arith.constant 5.000000e-01 : f32
    %117 = vector.broadcast %cst_70 : f32 to vector<2x64xf32>
    %118 = arith.mulf %117, %116 : vector<2x64xf32>
    %119 = arith.addf %113, %118 : vector<2x64xf32>
    %cst_71 = arith.constant 5.000000e-01 : f32
    %120 = vector.broadcast %cst_71 : f32 to vector<2x64xf32>
    %121 = arith.mulf %120, %96 : vector<2x64xf32>
    %122 = vector.extract_strided_slice %111 {offsets = [0, 64], sizes = [2, 64], strides = [1, 1]} : vector<2x128xf32> to vector<2x64xf32>
    %123 = arith.addf %122, %104 : vector<2x64xf32>
    %124 = math.tanh %123 : vector<2x64xf32>
    %cst_72 = arith.constant 5.000000e-01 : f32
    %125 = vector.broadcast %cst_72 : f32 to vector<2x64xf32>
    %126 = arith.mulf %125, %124 : vector<2x64xf32>
    %127 = arith.addf %121, %126 : vector<2x64xf32>
    %128 = arith.index_cast %105 : i32 to index
    %c0_73 = arith.constant 0 : index
    %129 = vector.load %arg8[%128, %c0_73] : memref<12x64xf32, #tpu.memory_space<vmem>>, vector<2x64xf32>
    tpu.vector_store %arg8[%128, %c0_73], %119 {strides = array<i32>} : memref<12x64xf32, #tpu.memory_space<vmem>>, vector<2x64xf32>,
    %130 = arith.index_cast %107 : i32 to index
    %c0_74 = arith.constant 0 : index
    %131 = vector.load %arg9[%130, %c0_74] : memref<12x64xf32, #tpu.memory_space<vmem>>, vector<2x64xf32>
    tpu.vector_store %arg9[%130, %c0_74], %127 {strides = array<i32>} : memref<12x64xf32, #tpu.memory_space<vmem>>, vector<2x64xf32>,
    %c4_i32 = arith.constant 4 : i32
    %c0_75 = arith.constant 0 : index
    %c0_76 = arith.constant 0 : index
    %132 = vector.load %arg3[%c0_75, %c0_76] : memref<64x64xf32, #tpu.memory_space<vmem>>, vector<64x64xf32>
    %cst_77 = arith.constant dense<0.000000e+00> : vector<2x64xf32>
    %133 = tpu.matmul %119, %132, %cst_77 {dimension_numbers = #tpu.dot_dimension_numbers<[1], [0], [0], [1], [0, 0, 1, 1], [], []>} : vector<2x64xf32>, vector<64x64xf32>, vector<2x64xf32> -> vector<2x64xf32>
    %c0_78 = arith.constant 0 : index
    %c0_79 = arith.constant 0 : index
    %134 = vector.load %arg4[%c0_78, %c0_79] : memref<64x64xf32, #tpu.memory_space<vmem>>, vector<64x64xf32>
    %cst_80 = arith.constant dense<0.000000e+00> : vector<2x64xf32>
    %135 = tpu.matmul %127, %134, %cst_80 {dimension_numbers = #tpu.dot_dimension_numbers<[1], [0], [0], [1], [0, 0, 1, 1], [], []>} : vector<2x64xf32>, vector<64x64xf32>, vector<2x64xf32> -> vector<2x64xf32>
    %c2_i32_81 = arith.constant 2 : i32
    %136 = arith.muli %c4_i32, %c2_i32_81 : i32
    %c5_i32_82 = arith.constant 5 : i32
    %137 = arith.subi %c5_i32_82, %c4_i32 : i32
    %c2_i32_83 = arith.constant 2 : i32
    %138 = arith.muli %137, %c2_i32_83 : i32
    %139 = arith.index_cast %136 : i32 to index
    %c0_84 = arith.constant 0 : index
    %140 = vector.load %arg7[%139, %c0_84] : memref<12x128xf32, #tpu.memory_space<vmem>>, vector<2x128xf32>
    %141 = arith.index_cast %138 : i32 to index
    %c0_85 = arith.constant 0 : index
    %142 = vector.load %arg7[%141, %c0_85] : memref<12x128xf32, #tpu.memory_space<vmem>>, vector<2x128xf32>
    %cst_86 = arith.constant 5.000000e-01 : f32
    %143 = vector.broadcast %cst_86 : f32 to vector<2x64xf32>
    %144 = arith.mulf %143, %119 : vector<2x64xf32>
    %145 = vector.extract_strided_slice %140 {offsets = [0, 0], sizes = [2, 64], strides = [1, 1]} : vector<2x128xf32> to vector<2x64xf32>
    %146 = arith.addf %145, %133 : vector<2x64xf32>
    %147 = math.tanh %146 : vector<2x64xf32>
    %cst_87 = arith.constant 5.000000e-01 : f32
    %148 = vector.broadcast %cst_87 : f32 to vector<2x64xf32>
    %149 = arith.mulf %148, %147 : vector<2x64xf32>
    %150 = arith.addf %144, %149 : vector<2x64xf32>
    %cst_88 = arith.constant 5.000000e-01 : f32
    %151 = vector.broadcast %cst_88 : f32 to vector<2x64xf32>
    %152 = arith.mulf %151, %127 : vector<2x64xf32>
    %153 = vector.extract_strided_slice %142 {offsets = [0, 64], sizes = [2, 64], strides = [1, 1]} : vector<2x128xf32> to vector<2x64xf32>
    %154 = arith.addf %153, %135 : vector<2x64xf32>
    %155 = math.tanh %154 : vector<2x64xf32>
    %cst_89 = arith.constant 5.000000e-01 : f32
    %156 = vector.broadcast %cst_89 : f32 to vector<2x64xf32>
    %157 = arith.mulf %156, %155 : vector<2x64xf32>
    %158 = arith.addf %152, %157 : vector<2x64xf32>
    %159 = arith.index_cast %136 : i32 to index
    %c0_90 = arith.constant 0 : index
    %160 = vector.load %arg8[%159, %c0_90] : memref<12x64xf32, #tpu.memory_space<vmem>>, vector<2x64xf32>
    tpu.vector_store %arg8[%159, %c0_90], %150 {strides = array<i32>} : memref<12x64xf32, #tpu.memory_space<vmem>>, vector<2x64xf32>,
    %161 = arith.index_cast %138 : i32 to index
    %c0_91 = arith.constant 0 : index
    %162 = vector.load %arg9[%161, %c0_91] : memref<12x64xf32, #tpu.memory_space<vmem>>, vector<2x64xf32>
    tpu.vector_store %arg9[%161, %c0_91], %158 {strides = array<i32>} : memref<12x64xf32, #tpu.memory_space<vmem>>, vector<2x64xf32>,
    %c5_i32_92 = arith.constant 5 : i32
    %c0_93 = arith.constant 0 : index
    %c0_94 = arith.constant 0 : index
    %163 = vector.load %arg3[%c0_93, %c0_94] : memref<64x64xf32, #tpu.memory_space<vmem>>, vector<64x64xf32>
    %cst_95 = arith.constant dense<0.000000e+00> : vector<2x64xf32>
    %164 = tpu.matmul %150, %163, %cst_95 {dimension_numbers = #tpu.dot_dimension_numbers<[1], [0], [0], [1], [0, 0, 1, 1], [], []>} : vector<2x64xf32>, vector<64x64xf32>, vector<2x64xf32> -> vector<2x64xf32>
    %c0_96 = arith.constant 0 : index
    %c0_97 = arith.constant 0 : index
    %165 = vector.load %arg4[%c0_96, %c0_97] : memref<64x64xf32, #tpu.memory_space<vmem>>, vector<64x64xf32>
    %cst_98 = arith.constant dense<0.000000e+00> : vector<2x64xf32>
    %166 = tpu.matmul %158, %165, %cst_98 {dimension_numbers = #tpu.dot_dimension_numbers<[1], [0], [0], [1], [0, 0, 1, 1], [], []>} : vector<2x64xf32>, vector<64x64xf32>, vector<2x64xf32> -> vector<2x64xf32>
    %c2_i32_99 = arith.constant 2 : i32
    %167 = arith.muli %c5_i32_92, %c2_i32_99 : i32
    %c5_i32_100 = arith.constant 5 : i32
    %168 = arith.subi %c5_i32_100, %c5_i32_92 : i32
    %c2_i32_101 = arith.constant 2 : i32
    %169 = arith.muli %168, %c2_i32_101 : i32
    %170 = arith.index_cast %167 : i32 to index
    %c0_102 = arith.constant 0 : index
    %171 = vector.load %arg7[%170, %c0_102] : memref<12x128xf32, #tpu.memory_space<vmem>>, vector<2x128xf32>
    %172 = arith.index_cast %169 : i32 to index
    %c0_103 = arith.constant 0 : index
    %173 = vector.load %arg7[%172, %c0_103] : memref<12x128xf32, #tpu.memory_space<vmem>>, vector<2x128xf32>
    %cst_104 = arith.constant 5.000000e-01 : f32
    %174 = vector.broadcast %cst_104 : f32 to vector<2x64xf32>
    %175 = arith.mulf %174, %150 : vector<2x64xf32>
    %176 = vector.extract_strided_slice %171 {offsets = [0, 0], sizes = [2, 64], strides = [1, 1]} : vector<2x128xf32> to vector<2x64xf32>
    %177 = arith.addf %176, %164 : vector<2x64xf32>
    %178 = math.tanh %177 : vector<2x64xf32>
    %cst_105 = arith.constant 5.000000e-01 : f32
    %179 = vector.broadcast %cst_105 : f32 to vector<2x64xf32>
    %180 = arith.mulf %179, %178 : vector<2x64xf32>
    %181 = arith.addf %175, %180 : vector<2x64xf32>
    %cst_106 = arith.constant 5.000000e-01 : f32
    %182 = vector.broadcast %cst_106 : f32 to vector<2x64xf32>
    %183 = arith.mulf %182, %158 : vector<2x64xf32>
    %184 = vector.extract_strided_slice %173 {offsets = [0, 64], sizes = [2, 64], strides = [1, 1]} : vector<2x128xf32> to vector<2x64xf32>
    %185 = arith.addf %184, %166 : vector<2x64xf32>
    %186 = math.tanh %185 : vector<2x64xf32>
    %cst_107 = arith.constant 5.000000e-01 : f32
    %187 = vector.broadcast %cst_107 : f32 to vector<2x64xf32>
    %188 = arith.mulf %187, %186 : vector<2x64xf32>
    %189 = arith.addf %183, %188 : vector<2x64xf32>
    %190 = arith.index_cast %167 : i32 to index
    %c0_108 = arith.constant 0 : index
    %191 = vector.load %arg8[%190, %c0_108] : memref<12x64xf32, #tpu.memory_space<vmem>>, vector<2x64xf32>
    tpu.vector_store %arg8[%190, %c0_108], %181 {strides = array<i32>} : memref<12x64xf32, #tpu.memory_space<vmem>>, vector<2x64xf32>,
    %192 = arith.index_cast %169 : i32 to index
    %c0_109 = arith.constant 0 : index
    %193 = vector.load %arg9[%192, %c0_109] : memref<12x64xf32, #tpu.memory_space<vmem>>, vector<2x64xf32>
    tpu.vector_store %arg9[%192, %c0_109], %189 {strides = array<i32>} : memref<12x64xf32, #tpu.memory_space<vmem>>, vector<2x64xf32>,
    %c6_i32 = arith.constant 6 : i32
    %c0_110 = arith.constant 0 : index
    %c0_111 = arith.constant 0 : index
    %194 = vector.load %arg8[%c0_110, %c0_111] : memref<12x64xf32, #tpu.memory_space<vmem>>, vector<12x64xf32>
    %c0_112 = arith.constant 0 : index
    %c0_113 = arith.constant 0 : index
    %195 = vector.load %arg9[%c0_112, %c0_113] : memref<12x64xf32, #tpu.memory_space<vmem>>, vector<12x64xf32>
    %196 = tpu.concatenate %194, %195 in 1 : vector<12x64xf32>, vector<12x64xf32> -> vector<12x128xf32>
    %c0_114 = arith.constant 0 : index
    %c0_115 = arith.constant 0 : index
    %197 = vector.load %arg6[%c0_114, %c0_115] : memref<12x128xf32, #tpu.memory_space<vmem>>, vector<12x128xf32>
    tpu.vector_store %arg6[%c0_114, %c0_115], %196 {strides = array<i32>} : memref<12x128xf32, #tpu.memory_space<vmem>>, vector<12x128xf32>,
    return
  }
  func.func @transform_0(%arg0: i32) -> (i32, i32) {
    %c0_i32 = arith.constant 0 : i32
    %c0_i32_0 = arith.constant 0 : i32
    %c0_i32_1 = arith.constant 0 : i32
    return %c0_i32, %c0_i32_0 : i32, i32
  }
  func.func @transform_1(%arg0: i32) -> (i32, i32) {
    %c0_i32 = arith.constant 0 : i32
    %c0_i32_0 = arith.constant 0 : i32
    %c0_i32_1 = arith.constant 0 : i32
    return %c0_i32, %c0_i32_0 : i32, i32
  }
  func.func @transform_2(%arg0: i32) -> (i32, i32) {
    %c0_i32 = arith.constant 0 : i32
    %c0_i32_0 = arith.constant 0 : i32
    %c0_i32_1 = arith.constant 0 : i32
    return %c0_i32, %c0_i32_0 : i32, i32
  }
  func.func @transform_3(%arg0: i32) -> (i32, i32) {
    %c0_i32 = arith.constant 0 : i32
    %c0_i32_0 = arith.constant 0 : i32
    %c0_i32_1 = arith.constant 0 : i32
    return %c0_i32, %c0_i32_0 : i32, i32
  }
  func.func @transform_4(%arg0: i32) -> (i32, i32) {
    %c0_i32 = arith.constant 0 : i32
    %c0_i32_0 = arith.constant 0 : i32
    %c0_i32_1 = arith.constant 0 : i32
    return %c0_i32, %c0_i32_0 : i32, i32
  }
  func.func @transform_5(%arg0: i32) -> (i32, i32) {
    %c0_i32 = arith.constant 0 : i32
    %c0_i32_0 = arith.constant 0 : i32
    %c0_i32_1 = arith.constant 0 : i32
    return %c0_i32, %c0_i32_0 : i32, i32
  }
}

module attributes {stable_mosaic.version = 11 : i64} {
  func.func @_stage2_kernel(%arg0: i32, %arg1: memref<1x8x128xf32, #tpu.memory_space<vmem>>, %arg2: memref<1x6x128xf32, #tpu.memory_space<vmem>>, %arg3: memref<128x32xf32, #tpu.memory_space<vmem>>, %arg4: memref<1x32xf32, #tpu.memory_space<vmem>>, %arg5: memref<32x16xf32, #tpu.memory_space<vmem>>, %arg6: memref<16x2xf32, #tpu.memory_space<vmem>>, %arg7: memref<64x32xf32, #tpu.memory_space<vmem>>, %arg8: memref<1x32xf32, #tpu.memory_space<vmem>>, %arg9: memref<64x32xf32, #tpu.memory_space<vmem>>, %arg10: memref<1x32xf32, #tpu.memory_space<vmem>>, %arg11: memref<32x3xf32, #tpu.memory_space<vmem>>, %arg12: memref<1x3xf32, #tpu.memory_space<vmem>>, %arg13: memref<1x1x3xf32, #tpu.memory_space<vmem>>) attributes {dimension_semantics = [#tpu.dimension_semantics<parallel>], iteration_bounds = array<i64: 2>, scalar_prefetch = 0 : i64, scratch_operands = 0 : i64, tpu.core_type = #tpu.core_type<tc>, window_params = [{transform_indices = @transform_0, window_bounds = array<i64: 1, 8, 128>}, {transform_indices = @transform_1, window_bounds = array<i64: 1, 6, 128>}, {pipeline_mode = #tpu.pipeline_mode<synchronous>, transform_indices = @transform_2, window_bounds = array<i64: 128, 32>}, {pipeline_mode = #tpu.pipeline_mode<synchronous>, transform_indices = @transform_3, window_bounds = array<i64: 1, 32>}, {pipeline_mode = #tpu.pipeline_mode<synchronous>, transform_indices = @transform_4, window_bounds = array<i64: 32, 16>}, {pipeline_mode = #tpu.pipeline_mode<synchronous>, transform_indices = @transform_5, window_bounds = array<i64: 16, 2>}, {pipeline_mode = #tpu.pipeline_mode<synchronous>, transform_indices = @transform_6, window_bounds = array<i64: 64, 32>}, {pipeline_mode = #tpu.pipeline_mode<synchronous>, transform_indices = @transform_7, window_bounds = array<i64: 1, 32>}, {pipeline_mode = #tpu.pipeline_mode<synchronous>, transform_indices = @transform_8, window_bounds = array<i64: 64, 32>}, {pipeline_mode = #tpu.pipeline_mode<synchronous>, transform_indices = @transform_9, window_bounds = array<i64: 1, 32>}, {pipeline_mode = #tpu.pipeline_mode<synchronous>, transform_indices = @transform_10, window_bounds = array<i64: 32, 3>}, {pipeline_mode = #tpu.pipeline_mode<synchronous>, transform_indices = @transform_11, window_bounds = array<i64: 1, 3>}, {transform_indices = @transform_12, window_bounds = array<i64: 1, 1, 3>}]} {
    %c0 = arith.constant 0 : index
    %c0_0 = arith.constant 0 : index
    %0 = vector.load %arg3[%c0, %c0_0] : memref<128x32xf32, #tpu.memory_space<vmem>>, vector<128x32xf32>
    %c0_1 = arith.constant 0 : index
    %c0_2 = arith.constant 0 : index
    %1 = vector.load %arg4[%c0_1, %c0_2] : memref<1x32xf32, #tpu.memory_space<vmem>>, vector<1x32xf32>
    %c0_3 = arith.constant 0 : index
    %c0_4 = arith.constant 0 : index
    %2 = vector.load %arg5[%c0_3, %c0_4] : memref<32x16xf32, #tpu.memory_space<vmem>>, vector<32x16xf32>
    %c0_5 = arith.constant 0 : index
    %c0_6 = arith.constant 0 : index
    %3 = vector.load %arg6[%c0_5, %c0_6] : memref<16x2xf32, #tpu.memory_space<vmem>>, vector<16x2xf32>
    %c0_7 = arith.constant 0 : index
    %c0_8 = arith.constant 0 : index
    %c0_9 = arith.constant 0 : index
    %4 = vector.load %arg1[%c0_7, %c0_8, %c0_9] : memref<1x8x128xf32, #tpu.memory_space<vmem>>, vector<1x8x128xf32>
    %5 = vector.shape_cast %4 : vector<1x8x128xf32> to vector<8x128xf32>
    %cst = arith.constant dense<0.000000e+00> : vector<8x32xf32>
    %6 = tpu.matmul %5, %0, %cst {dimension_numbers = #tpu.dot_dimension_numbers<[1], [0], [0], [1], [0, 0, 1, 1], [], []>} : vector<8x128xf32>, vector<128x32xf32>, vector<8x32xf32> -> vector<8x32xf32>
    %7 = vector.broadcast %1 : vector<1x32xf32> to vector<8x32xf32>
    %8 = arith.addf %6, %7 : vector<8x32xf32>
    %9 = math.tanh %8 : vector<8x32xf32>
    %cst_10 = arith.constant dense<0.000000e+00> : vector<8x16xf32>
    %10 = tpu.matmul %9, %2, %cst_10 {dimension_numbers = #tpu.dot_dimension_numbers<[1], [0], [0], [1], [0, 0, 1, 1], [], []>} : vector<8x32xf32>, vector<32x16xf32>, vector<8x16xf32> -> vector<8x16xf32>
    %11 = math.tanh %10 : vector<8x16xf32>
    %cst_11 = arith.constant dense<0.000000e+00> : vector<8x2xf32>
    %12 = tpu.matmul %11, %3, %cst_11 {dimension_numbers = #tpu.dot_dimension_numbers<[1], [0], [0], [1], [0, 0, 1, 1], [], []>} : vector<8x16xf32>, vector<16x2xf32>, vector<8x2xf32> -> vector<8x2xf32>
    %cst_12 = arith.constant dense<0xFF800000> : vector<2xf32>
    %13 = vector.multi_reduction <maximumf>, %12, %cst_12 [0] : vector<8x2xf32> to vector<2xf32>
    %14 = vector.shape_cast %13 : vector<2xf32> to vector<1x2xf32>
    %15 = vector.broadcast %14 : vector<1x2xf32> to vector<8x2xf32>
    %16 = arith.subf %12, %15 : vector<8x2xf32>
    %17 = math.exp %16 : vector<8x2xf32>
    %cst_13 = arith.constant dense<0.000000e+00> : vector<2xf32>
    %18 = vector.multi_reduction <add>, %17, %cst_13 [0] : vector<8x2xf32> to vector<2xf32>
    %19 = vector.shape_cast %18 : vector<2xf32> to vector<1x2xf32>
    %20 = vector.broadcast %19 : vector<1x2xf32> to vector<8x2xf32>
    %21 = arith.divf %17, %20 : vector<8x2xf32>
    %cst_14 = arith.constant dense<0.000000e+00> : vector<2x32xf32>
    %22 = tpu.matmul %21, %9, %cst_14 {dimension_numbers = #tpu.dot_dimension_numbers<[0], [0], [1], [1], [0, 1, 1, 1], [], []>} : vector<8x2xf32>, vector<8x32xf32>, vector<2x32xf32> -> vector<2x32xf32>
    %c0_15 = arith.constant 0 : index
    %c0_16 = arith.constant 0 : index
    %23 = vector.load %arg7[%c0_15, %c0_16] : memref<64x32xf32, #tpu.memory_space<vmem>>, vector<64x32xf32>
    %c0_17 = arith.constant 0 : index
    %c0_18 = arith.constant 0 : index
    %24 = vector.load %arg8[%c0_17, %c0_18] : memref<1x32xf32, #tpu.memory_space<vmem>>, vector<1x32xf32>
    %25 = vector.extract_strided_slice %22 {offsets = [0, 0], sizes = [1, 32], strides = [1, 1]} : vector<2x32xf32> to vector<1x32xf32>
    %26 = vector.extract_strided_slice %23 {offsets = [0, 0], sizes = [32, 32], strides = [1, 1]} : vector<64x32xf32> to vector<32x32xf32>
    %cst_19 = arith.constant dense<0.000000e+00> : vector<1x32xf32>
    %27 = tpu.matmul %25, %26, %cst_19 {dimension_numbers = #tpu.dot_dimension_numbers<[1], [0], [0], [1], [0, 0, 1, 1], [], []>} : vector<1x32xf32>, vector<32x32xf32>, vector<1x32xf32> -> vector<1x32xf32>
    %28 = arith.addf %24, %27 : vector<1x32xf32>
    %29 = vector.extract_strided_slice %22 {offsets = [1, 0], sizes = [1, 32], strides = [1, 1]} : vector<2x32xf32> to vector<1x32xf32>
    %30 = vector.extract_strided_slice %23 {offsets = [32, 0], sizes = [32, 32], strides = [1, 1]} : vector<64x32xf32> to vector<32x32xf32>
    %cst_20 = arith.constant dense<0.000000e+00> : vector<1x32xf32>
    %31 = tpu.matmul %29, %30, %cst_20 {dimension_numbers = #tpu.dot_dimension_numbers<[1], [0], [0], [1], [0, 0, 1, 1], [], []>} : vector<1x32xf32>, vector<32x32xf32>, vector<1x32xf32> -> vector<1x32xf32>
    %32 = arith.addf %28, %31 : vector<1x32xf32>
    %c0_21 = arith.constant 0 : index
    %c0_22 = arith.constant 0 : index
    %c0_23 = arith.constant 0 : index
    %33 = vector.load %arg2[%c0_21, %c0_22, %c0_23] : memref<1x6x128xf32, #tpu.memory_space<vmem>>, vector<1x6x128xf32>
    %34 = vector.shape_cast %33 : vector<1x6x128xf32> to vector<6x128xf32>
    %cst_24 = arith.constant dense<0.000000e+00> : vector<6x32xf32>
    %35 = tpu.matmul %34, %0, %cst_24 {dimension_numbers = #tpu.dot_dimension_numbers<[1], [0], [0], [1], [0, 0, 1, 1], [], []>} : vector<6x128xf32>, vector<128x32xf32>, vector<6x32xf32> -> vector<6x32xf32>
    %36 = vector.broadcast %1 : vector<1x32xf32> to vector<6x32xf32>
    %37 = arith.addf %35, %36 : vector<6x32xf32>
    %38 = math.tanh %37 : vector<6x32xf32>
    %cst_25 = arith.constant dense<0.000000e+00> : vector<6x16xf32>
    %39 = tpu.matmul %38, %2, %cst_25 {dimension_numbers = #tpu.dot_dimension_numbers<[1], [0], [0], [1], [0, 0, 1, 1], [], []>} : vector<6x32xf32>, vector<32x16xf32>, vector<6x16xf32> -> vector<6x16xf32>
    %40 = math.tanh %39 : vector<6x16xf32>
    %cst_26 = arith.constant dense<0.000000e+00> : vector<6x2xf32>
    %41 = tpu.matmul %40, %3, %cst_26 {dimension_numbers = #tpu.dot_dimension_numbers<[1], [0], [0], [1], [0, 0, 1, 1], [], []>} : vector<6x16xf32>, vector<16x2xf32>, vector<6x2xf32> -> vector<6x2xf32>
    %cst_27 = arith.constant dense<0xFF800000> : vector<2xf32>
    %42 = vector.multi_reduction <maximumf>, %41, %cst_27 [0] : vector<6x2xf32> to vector<2xf32>
    %43 = vector.shape_cast %42 : vector<2xf32> to vector<1x2xf32>
    %44 = vector.broadcast %43 : vector<1x2xf32> to vector<6x2xf32>
    %45 = arith.subf %41, %44 : vector<6x2xf32>
    %46 = math.exp %45 : vector<6x2xf32>
    %cst_28 = arith.constant dense<0.000000e+00> : vector<2xf32>
    %47 = vector.multi_reduction <add>, %46, %cst_28 [0] : vector<6x2xf32> to vector<2xf32>
    %48 = vector.shape_cast %47 : vector<2xf32> to vector<1x2xf32>
    %49 = vector.broadcast %48 : vector<1x2xf32> to vector<6x2xf32>
    %50 = arith.divf %46, %49 : vector<6x2xf32>
    %cst_29 = arith.constant dense<0.000000e+00> : vector<2x32xf32>
    %51 = tpu.matmul %50, %38, %cst_29 {dimension_numbers = #tpu.dot_dimension_numbers<[0], [0], [1], [1], [0, 1, 1, 1], [], []>} : vector<6x2xf32>, vector<6x32xf32>, vector<2x32xf32> -> vector<2x32xf32>
    %c0_30 = arith.constant 0 : index
    %c0_31 = arith.constant 0 : index
    %52 = vector.load %arg9[%c0_30, %c0_31] : memref<64x32xf32, #tpu.memory_space<vmem>>, vector<64x32xf32>
    %c0_32 = arith.constant 0 : index
    %c0_33 = arith.constant 0 : index
    %53 = vector.load %arg10[%c0_32, %c0_33] : memref<1x32xf32, #tpu.memory_space<vmem>>, vector<1x32xf32>
    %54 = vector.extract_strided_slice %51 {offsets = [0, 0], sizes = [1, 32], strides = [1, 1]} : vector<2x32xf32> to vector<1x32xf32>
    %55 = vector.extract_strided_slice %52 {offsets = [0, 0], sizes = [32, 32], strides = [1, 1]} : vector<64x32xf32> to vector<32x32xf32>
    %cst_34 = arith.constant dense<0.000000e+00> : vector<1x32xf32>
    %56 = tpu.matmul %54, %55, %cst_34 {dimension_numbers = #tpu.dot_dimension_numbers<[1], [0], [0], [1], [0, 0, 1, 1], [], []>} : vector<1x32xf32>, vector<32x32xf32>, vector<1x32xf32> -> vector<1x32xf32>
    %57 = arith.addf %53, %56 : vector<1x32xf32>
    %58 = vector.extract_strided_slice %51 {offsets = [1, 0], sizes = [1, 32], strides = [1, 1]} : vector<2x32xf32> to vector<1x32xf32>
    %59 = vector.extract_strided_slice %52 {offsets = [32, 0], sizes = [32, 32], strides = [1, 1]} : vector<64x32xf32> to vector<32x32xf32>
    %cst_35 = arith.constant dense<0.000000e+00> : vector<1x32xf32>
    %60 = tpu.matmul %58, %59, %cst_35 {dimension_numbers = #tpu.dot_dimension_numbers<[1], [0], [0], [1], [0, 0, 1, 1], [], []>} : vector<1x32xf32>, vector<32x32xf32>, vector<1x32xf32> -> vector<1x32xf32>
    %61 = arith.addf %57, %60 : vector<1x32xf32>
    %62 = arith.mulf %32, %61 : vector<1x32xf32>
    %c0_36 = arith.constant 0 : index
    %c0_37 = arith.constant 0 : index
    %63 = vector.load %arg11[%c0_36, %c0_37] : memref<32x3xf32, #tpu.memory_space<vmem>>, vector<32x3xf32>
    %cst_38 = arith.constant dense<0.000000e+00> : vector<1x3xf32>
    %64 = tpu.matmul %62, %63, %cst_38 {dimension_numbers = #tpu.dot_dimension_numbers<[1], [0], [0], [1], [0, 0, 1, 1], [], []>} : vector<1x32xf32>, vector<32x3xf32>, vector<1x3xf32> -> vector<1x3xf32>
    %c0_39 = arith.constant 0 : index
    %c0_40 = arith.constant 0 : index
    %65 = vector.load %arg12[%c0_39, %c0_40] : memref<1x3xf32, #tpu.memory_space<vmem>>, vector<1x3xf32>
    %66 = arith.addf %64, %65 : vector<1x3xf32>
    %c0_41 = arith.constant 0 : index
    %c0_42 = arith.constant 0 : index
    %c0_43 = arith.constant 0 : index
    %67 = vector.load %arg13[%c0_41, %c0_42, %c0_43] : memref<1x1x3xf32, #tpu.memory_space<vmem>>, vector<1x1x3xf32>
    %68 = vector.shape_cast %67 : vector<1x1x3xf32> to vector<1x3xf32>
    %69 = vector.shape_cast %66 : vector<1x3xf32> to vector<1x1x3xf32>
    tpu.vector_store %arg13[%c0_41, %c0_42, %c0_43], %69 {strides = array<i32>} : memref<1x1x3xf32, #tpu.memory_space<vmem>>, vector<1x1x3xf32>,
    return
  }
  func.func @transform_0(%arg0: i32) -> (i32, i32, i32) {
    %c0_i32 = arith.constant 0 : i32
    %c0_i32_0 = arith.constant 0 : i32
    %c0_i32_1 = arith.constant 0 : i32
    return %arg0, %c0_i32, %c0_i32_0 : i32, i32, i32
  }
  func.func @transform_1(%arg0: i32) -> (i32, i32, i32) {
    %c0_i32 = arith.constant 0 : i32
    %c0_i32_0 = arith.constant 0 : i32
    %c0_i32_1 = arith.constant 0 : i32
    return %arg0, %c0_i32, %c0_i32_0 : i32, i32, i32
  }
  func.func @transform_2(%arg0: i32) -> (i32, i32) {
    %c0_i32 = arith.constant 0 : i32
    %c0_i32_0 = arith.constant 0 : i32
    %c0_i32_1 = arith.constant 0 : i32
    return %c0_i32, %c0_i32_0 : i32, i32
  }
  func.func @transform_3(%arg0: i32) -> (i32, i32) {
    %c0_i32 = arith.constant 0 : i32
    %c0_i32_0 = arith.constant 0 : i32
    %c0_i32_1 = arith.constant 0 : i32
    return %c0_i32, %c0_i32_0 : i32, i32
  }
  func.func @transform_4(%arg0: i32) -> (i32, i32) {
    %c0_i32 = arith.constant 0 : i32
    %c0_i32_0 = arith.constant 0 : i32
    %c0_i32_1 = arith.constant 0 : i32
    return %c0_i32, %c0_i32_0 : i32, i32
  }
  func.func @transform_5(%arg0: i32) -> (i32, i32) {
    %c0_i32 = arith.constant 0 : i32
    %c0_i32_0 = arith.constant 0 : i32
    %c0_i32_1 = arith.constant 0 : i32
    return %c0_i32, %c0_i32_0 : i32, i32
  }
  func.func @transform_6(%arg0: i32) -> (i32, i32) {
    %c0_i32 = arith.constant 0 : i32
    %c0_i32_0 = arith.constant 0 : i32
    %c0_i32_1 = arith.constant 0 : i32
    return %c0_i32, %c0_i32_0 : i32, i32
  }
  func.func @transform_7(%arg0: i32) -> (i32, i32) {
    %c0_i32 = arith.constant 0 : i32
    %c0_i32_0 = arith.constant 0 : i32
    %c0_i32_1 = arith.constant 0 : i32
    return %c0_i32, %c0_i32_0 : i32, i32
  }
  func.func @transform_8(%arg0: i32) -> (i32, i32) {
    %c0_i32 = arith.constant 0 : i32
    %c0_i32_0 = arith.constant 0 : i32
    %c0_i32_1 = arith.constant 0 : i32
    return %c0_i32, %c0_i32_0 : i32, i32
  }
  func.func @transform_9(%arg0: i32) -> (i32, i32) {
    %c0_i32 = arith.constant 0 : i32
    %c0_i32_0 = arith.constant 0 : i32
    %c0_i32_1 = arith.constant 0 : i32
    return %c0_i32, %c0_i32_0 : i32, i32
  }
  func.func @transform_10(%arg0: i32) -> (i32, i32) {
    %c0_i32 = arith.constant 0 : i32
    %c0_i32_0 = arith.constant 0 : i32
    %c0_i32_1 = arith.constant 0 : i32
    return %c0_i32, %c0_i32_0 : i32, i32
  }
  func.func @transform_11(%arg0: i32) -> (i32, i32) {
    %c0_i32 = arith.constant 0 : i32
    %c0_i32_0 = arith.constant 0 : i32
    %c0_i32_1 = arith.constant 0 : i32
    return %c0_i32, %c0_i32_0 : i32, i32
  }
  func.func @transform_12(%arg0: i32) -> (i32, i32, i32) {
    %c0_i32 = arith.constant 0 : i32
    %c0_i32_0 = arith.constant 0 : i32
    %c0_i32_1 = arith.constant 0 : i32
    return %arg0, %c0_i32, %c0_i32_0 : i32, i32, i32
  }
}

</mosaic_0001>

<llo_original>
// kernel: _lambda_.5
$region0: #{_lambda_.5}
  #allocation0 [shape = 'u32[]', space=smem, size = 0x4, offset = 0x4, fixed_abs, tag = 'smem constant byte address 0x4 - core index']
  #allocation1 [shape = 'u32[144,128]{1,0:T(1,128)}', space=vmem, size = 0x12000, scoped, tag = 'internal scratch']
  %s0 = inlined_call_operand.vmem [shape: f32[2,8,128], index: 0, kind: input, shape index: {}]
  %s1 = inlined_call_operand.vmem [shape: f32[2,6,128], index: 1, kind: input, shape index: {}]
  %s2 = inlined_call_operand.vmem [shape: f32[128,32], index: 2, kind: input, shape index: {}]
  %s3 = inlined_call_operand.vmem [shape: f32[1,32], index: 3, kind: input, shape index: {}]
  %s4 = inlined_call_operand.vmem [shape: f32[32,16], index: 4, kind: input, shape index: {}]
  %s5 = inlined_call_operand.vmem [shape: f32[16,2], index: 5, kind: input, shape index: {}]
  %s6 = inlined_call_operand.vmem [shape: f32[64,32], index: 6, kind: input, shape index: {}]
  %s7 = inlined_call_operand.vmem [shape: f32[1,32], index: 7, kind: input, shape index: {}]
  %s8 = inlined_call_operand.vmem [shape: f32[64,32], index: 8, kind: input, shape index: {}]
  %s9 = inlined_call_operand.vmem [shape: f32[1,32], index: 9, kind: input, shape index: {}]
  %s10 = inlined_call_operand.vmem [shape: f32[32,3], index: 10, kind: input, shape index: {}]
  %s11 = inlined_call_operand.vmem [shape: f32[1,3], index: 11, kind: input, shape index: {}]
  %s12 = inlined_call_operand.hbm [shape: f32[2,1,3], index: 12, kind: output, shape index: {}]
  %s13 = sld [smem:[#allocation0]]
  $region81: #{_lambda_.5} parent=0
    _
  %s15 = ssub.s32 1, %s13
  %s16 = scalar_select 0, %s15, %s13
  $region1: #{_lambda_.5} parent=0
    #allocation2 [shape = 'u8[1024]{0}', space=vmem, size = 0x400, scoped, tag = 'output window, operand 0']
    #allocation3 [shape = 's32[2]{0}', space=sflag, size = 0x8, scoped, tag = 'scoped memory for _lambda_.5']
    %17 = vsyncpa [#allocation3], 0
    %s18 = scalar_lea.sflag [#allocation3], 1
    %19 = vsyncpa %s18, 0
    loop: start=0, step=1, limit=4
    $region2: #{_lambda_.5} parent=1 // loop_pre_header
      _
    $region3: #{_lambda_.5} parent=1 // loop_header
      %s21 = sphi 0, %s25
      %p22 = scmp.ge.s32.totalorder %s21, 4
      %s31 = sphi 0, %s33
      %s34 = sphi 0, %s31
      %s35 = sphi 0, %s34
      %s51 = sphi 0, %s35
      %s57 = sphi 0, %s59
      %s60 = sphi 0, %s57
      %s61 = sphi 0, %s60
      %s77 = sphi 0, %s61
      %s81 = sphi 0, %s81
      %s83 = sphi 0, %s81
      %s84 = sphi 0, %s83
      %s98 = sphi 0, %s84
      %s102 = sphi 0, %s102
      %s104 = sphi 0, %s102
      %s105 = sphi 0, %s104
      %s119 = sphi 0, %s105
      %s123 = sphi 0, %s123
      %s125 = sphi 0, %s123
      %s126 = sphi 0, %s125
      %s140 = sphi 0, %s126
      %s144 = sphi 0, %s144
      %s146 = sphi 0, %s144
      %s147 = sphi 0, %s146
      %s161 = sphi 0, %s147
      %s165 = sphi 0, %s165
      %s167 = sphi 0, %s165
      %s168 = sphi 0, %s167
      %s182 = sphi 0, %s168
      %s186 = sphi 0, %s186
      %s188 = sphi 0, %s186
      %s189 = sphi 0, %s188
      %s203 = sphi 0, %s189
      %s207 = sphi 0, %s207
      %s209 = sphi 0, %s207
      %s210 = sphi 0, %s209
      %s224 = sphi 0, %s210
      %s228 = sphi 0, %s228
      %s230 = sphi 0, %s228
      %s231 = sphi 0, %s230
      %s245 = sphi 0, %s231
      %s249 = sphi 0, %s249
      %s251 = sphi 0, %s249
      %s252 = sphi 0, %s251
      %s266 = sphi 0, %s252
      %s270 = sphi 0, %s270
      %s272 = sphi 0, %s270
      %s273 = sphi 0, %s272
      %s287 = sphi 0, %s273
      %s293 = sphi 0, %s295
      %s296 = sphi 0, %s293
      %s297 = sphi 0, %s296
      %s313 = sphi 0, %s297
    $region4: #{_lambda_.5} parent=1 // loop_header_branch
      %24 = sbr.rel (%p22) target = $region8
    $region5: #{_lambda_.5} parent=1 // loop_body
      %s26 = ssub.s32 %s21, 1
      %s27 = ssub.s32 %s21, 2
      %s28 = sadd.s32 %s21, 1
      %s29 = ssub.s32 %s21, %s28
      %p30 = scmp.eq.s32.totalorder %s29, 0
      %s32 = sadd.s32 %s31, 1
      %s33 = scalar_select %p30, %s31, %s32
      %p36 = pneg %p30
      %p37 = scmp.eq.s32.totalorder %s21, 1
      %p38 = por %p36, %p37
      %p39 = scmp.ne.s32.totalorder %s31, %s34
      %p40 = scmp.eq.s32.totalorder %s21, 0
      %p41 = por %p39, %p40
      %p42 = scmp.ne.s32.totalorder %s31, %s34
      %p43 = scmp.eq.s32.totalorder %s26, 1
      %p44 = por %p42, %p43
      %p45 = scmp.ne.s32.totalorder %s34, %s35
      %p46 = scmp.eq.s32.totalorder %s26, 0
      %p47 = por %p45, %p46
      %p48 = scmp.ne.s32.totalorder %s34, %s35
      %p49 = scmp.eq.s32.totalorder %s27, 1
      %p50 = por %p48, %p49
      %p52 = scmp.ne.s32.totalorder %s35, %s51
      %p53 = scmp.eq.s32.totalorder %s27, 0
      %p54 = por %p52, %p53
      %s55 = ssub.s32 %s21, %s28
      %p56 = scmp.eq.s32.totalorder %s55, 0
      %s58 = sadd.s32 %s57, 1
      %s59 = scalar_select %p56, %s57, %s58
      %p62 = pneg %p56
      %p63 = scmp.eq.s32.totalorder %s21, 1
      %p64 = por %p62, %p63
      %p65 = scmp.ne.s32.totalorder %s57, %s60
      %p66 = scmp.eq.s32.totalorder %s21, 0
      %p67 = por %p65, %p66
      %p68 = scmp.ne.s32.totalorder %s57, %s60
      %p69 = scmp.eq.s32.totalorder %s26, 1
      %p70 = por %p68, %p69
      %p71 = scmp.ne.s32.totalorder %s60, %s61
      %p72 = scmp.eq.s32.totalorder %s26, 0
      %p73 = por %p71, %p72
      %p74 = scmp.ne.s32.totalorder %s60, %s61
      %p75 = scmp.eq.s32.totalorder %s27, 1
      %p76 = por %p74, %p75
      %p78 = scmp.ne.s32.totalorder %s61, %s77
      %p79 = scmp.eq.s32.totalorder %s27, 0
      %p80 = por %p78, %p79
      %s82 = sadd.s32 %s81, 1
      %p85 = scmp.eq.s32.totalorder %s21, 1
      %p86 = scmp.ne.s32.totalorder %s81, %s83
      %p87 = scmp.eq.s32.totalorder %s21, 0
      %p88 = por %p86, %p87
      %p89 = scmp.ne.s32.totalorder %s81, %s83
      %p90 = scmp.eq.s32.totalorder %s26, 1
      %p91 = por %p89, %p90
      %p92 = scmp.ne.s32.totalorder %s83, %s84
      %p93 = scmp.eq.s32.totalorder %s26, 0
      %p94 = por %p92, %p93
      %p95 = scmp.ne.s32.totalorder %s83, %s84
      %p96 = scmp.eq.s32.totalorder %s27, 1
      %p97 = por %p95, %p96
      %p99 = scmp.ne.s32.totalorder %s84, %s98
      %p100 = scmp.eq.s32.totalorder %s27, 0
      %p101 = por %p99, %p100
      %s103 = sadd.s32 %s102, 1
      %p106 = scmp.eq.s32.totalorder %s21, 1
      %p107 = scmp.ne.s32.totalorder %s102, %s104
      %p108 = scmp.eq.s32.totalorder %s21, 0
      %p109 = por %p107, %p108
      %p110 = scmp.ne.s32.totalorder %s102, %s104
      %p111 = scmp.eq.s32.totalorder %s26, 1
      %p112 = por %p110, %p111
      %p113 = scmp.ne.s32.totalorder %s104, %s105
      %p114 = scmp.eq.s32.totalorder %s26, 0
      %p115 = por %p113, %p114
      %p116 = scmp.ne.s32.totalorder %s104, %s105
      %p117 = scmp.eq.s32.totalorder %s27, 1
      %p118 = por %p116, %p117
      %p120 = scmp.ne.s32.totalorder %s105, %s119
      %p121 = scmp.eq.s32.totalorder %s27, 0
      %p122 = por %p120, %p121
      %s124 = sadd.s32 %s123, 1
      %p127 = scmp.eq.s32.totalorder %s21, 1
      %p128 = scmp.ne.s32.totalorder %s123, %s125
      %p129 = scmp.eq.s32.totalorder %s21, 0
      %p130 = por %p128, %p129
      %p131 = scmp.ne.s32.totalorder %s123, %s125
      %p132 = scmp.eq.s32.totalorder %s26, 1
      %p133 = por %p131, %p132
      %p134 = scmp.ne.s32.totalorder %s125, %s126
      %p135 = scmp.eq.s32.totalorder %s26, 0
      %p136 = por %p134, %p135
      %p137 = scmp.ne.s32.totalorder %s125, %s126
      %p138 = scmp.eq.s32.totalorder %s27, 1
      %p139 = por %p137, %p138
      %p141 = scmp.ne.s32.totalorder %s126, %s140
      %p142 = scmp.eq.s32.totalorder %s27, 0
      %p143 = por %p141, %p142
      %s145 = sadd.s32 %s144, 1
      %p148 = scmp.eq.s32.totalorder %s21, 1
      %p149 = scmp.ne.s32.totalorder %s144, %s146
      %p150 = scmp.eq.s32.totalorder %s21, 0
      %p151 = por %p149, %p150
      %p152 = scmp.ne.s32.totalorder %s144, %s146
      %p153 = scmp.eq.s32.totalorder %s26, 1
      %p154 = por %p152, %p153
      %p155 = scmp.ne.s32.totalorder %s146, %s147
      %p156 = scmp.eq.s32.totalorder %s26, 0
      %p157 = por %p155, %p156
      %p158 = scmp.ne.s32.totalorder %s146, %s147
      %p159 = scmp.eq.s32.totalorder %s27, 1
      %p160 = por %p158, %p159
      %p162 = scmp.ne.s32.totalorder %s147, %s161
      %p163 = scmp.eq.s32.totalorder %s27, 0
      %p164 = por %p162, %p163
      %s166 = sadd.s32 %s165, 1
      %p169 = scmp.eq.s32.totalorder %s21, 1
      %p170 = scmp.ne.s32.totalorder %s165, %s167
      %p171 = scmp.eq.s32.totalorder %s21, 0
      %p172 = por %p170, %p171
      %p173 = scmp.ne.s32.totalorder %s165, %s167
      %p174 = scmp.eq.s32.totalorder %s26, 1
      %p175 = por %p173, %p174
      %p176 = scmp.ne.s32.totalorder %s167, %s168
      %p177 = scmp.eq.s32.totalorder %s26, 0
      %p178 = por %p176, %p177
      %p179 = scmp.ne.s32.totalorder %s167, %s168
      %p180 = scmp.eq.s32.totalorder %s27, 1
      %p181 = por %p179, %p180
      %p183 = scmp.ne.s32.totalorder %s168, %s182
      %p184 = scmp.eq.s32.totalorder %s27, 0
      %p185 = por %p183, %p184
      %s187 = sadd.s32 %s186, 1
      %p190 = scmp.eq.s32.totalorder %s21, 1
      %p191 = scmp.ne.s32.totalorder %s186, %s188
      %p192 = scmp.eq.s32.totalorder %s21, 0
      %p193 = por %p191, %p192
      %p194 = scmp.ne.s32.totalorder %s186, %s188
      %p195 = scmp.eq.s32.totalorder %s26, 1
      %p196 = por %p194, %p195
      %p197 = scmp.ne.s32.totalorder %s188, %s189
      %p198 = scmp.eq.s32.totalorder %s26, 0
      %p199 = por %p197, %p198
      %p200 = scmp.ne.s32.totalorder %s188, %s189
      %p201 = scmp.eq.s32.totalorder %s27, 1
      %p202 = por %p200, %p201
      %p204 = scmp.ne.s32.totalorder %s189, %s203
      %p205 = scmp.eq.s32.totalorder %s27, 0
      %p206 = por %p204, %p205
      %s208 = sadd.s32 %s207, 1
      %p211 = scmp.eq.s32.totalorder %s21, 1
      %p212 = scmp.ne.s32.totalorder %s207, %s209
      %p213 = scmp.eq.s32.totalorder %s21, 0
      %p214 = por %p212, %p213
      %p215 = scmp.ne.s32.totalorder %s207, %s209
      %p216 = scmp.eq.s32.totalorder %s26, 1
      %p217 = por %p215, %p216
      %p218 = scmp.ne.s32.totalorder %s209, %s210
      %p219 = scmp.eq.s32.totalorder %s26, 0
      %p220 = por %p218, %p219
      %p221 = scmp.ne.s32.totalorder %s209, %s210
      %p222 = scmp.eq.s32.totalorder %s27, 1
      %p223 = por %p221, %p222
      %p225 = scmp.ne.s32.totalorder %s210, %s224
      %p226 = scmp.eq.s32.totalorder %s27, 0
      %p227 = por %p225, %p226
      %s229 = sadd.s32 %s228, 1
      %p232 = scmp.eq.s32.totalorder %s21, 1
      %p233 = scmp.ne.s32.totalorder %s228, %s230
      %p234 = scmp.eq.s32.totalorder %s21, 0
      %p235 = por %p233, %p234
      %p236 = scmp.ne.s32.totalorder %s228, %s230
      %p237 = scmp.eq.s32.totalorder %s26, 1
      %p238 = por %p236, %p237
      %p239 = scmp.ne.s32.totalorder %s230, %s231
      %p240 = scmp.eq.s32.totalorder %s26, 0
      %p241 = por %p239, %p240
      %p242 = scmp.ne.s32.totalorder %s230, %s231
      %p243 = scmp.eq.s32.totalorder %s27, 1
      %p244 = por %p242, %p243
      %p246 = scmp.ne.s32.totalorder %s231, %s245
      %p247 = scmp.eq.s32.totalorder %s27, 0
      %p248 = por %p246, %p247
      %s250 = sadd.s32 %s249, 1
      %p253 = scmp.eq.s32.totalorder %s21, 1
      %p254 = scmp.ne.s32.totalorder %s249, %s251
      %p255 = scmp.eq.s32.totalorder %s21, 0
      %p256 = por %p254, %p255
      %p257 = scmp.ne.s32.totalorder %s249, %s251
      %p258 = scmp.eq.s32.totalorder %s26, 1
      %p259 = por %p257, %p258
      %p260 = scmp.ne.s32.totalorder %s251, %s252
      %p261 = scmp.eq.s32.totalorder %s26, 0
      %p262 = por %p260, %p261
      %p263 = scmp.ne.s32.totalorder %s251, %s252
      %p264 = scmp.eq.s32.totalorder %s27, 1
      %p265 = por %p263, %p264
      %p267 = scmp.ne.s32.totalorder %s252, %s266
      %p268 = scmp.eq.s32.totalorder %s27, 0
      %p269 = por %p267, %p268
      %s271 = sadd.s32 %s270, 1
      %p274 = scmp.eq.s32.totalorder %s21, 1
      %p275 = scmp.ne.s32.totalorder %s270, %s272
      %p276 = scmp.eq.s32.totalorder %s21, 0
      %p277 = por %p275, %p276
      %p278 = scmp.ne.s32.totalorder %s270, %s272
      %p279 = scmp.eq.s32.totalorder %s26, 1
      %p280 = por %p278, %p279
      %p281 = scmp.ne.s32.totalorder %s272, %s273
      %p282 = scmp.eq.s32.totalorder %s26, 0
      %p283 = por %p281, %p282
      %p284 = scmp.ne.s32.totalorder %s272, %s273
      %p285 = scmp.eq.s32.totalorder %s27, 1
      %p286 = por %p284, %p285
      %p288 = scmp.ne.s32.totalorder %s273, %s287
      %p289 = scmp.eq.s32.totalorder %s27, 0
      %p290 = por %p288, %p289
      %s291 = ssub.s32 %s21, %s28
      %p292 = scmp.eq.s32.totalorder %s291, 0
      %s294 = sadd.s32 %s293, 1
      %s295 = scalar_select %p292, %s293, %s294
      %p298 = pneg %p292
      %p299 = scmp.eq.s32.totalorder %s21, 1
      %p300 = por %p298, %p299
      %p301 = scmp.ne.s32.totalorder %s293, %s296
      %p302 = scmp.eq.s32.totalorder %s21, 0
      %p303 = por %p301, %p302
      %p304 = scmp.ne.s32.totalorder %s293, %s296
      %p305 = scmp.eq.s32.totalorder %s26, 1
      %p306 = por %p304, %p305
      %p307 = scmp.ne.s32.totalorder %s296, %s297
      %p308 = scmp.eq.s32.totalorder %s26, 0
      %p309 = por %p307, %p308
      %p310 = scmp.ne.s32.totalorder %s296, %s297
      %p311 = scmp.eq.s32.totalorder %s27, 1
      %p312 = por %p310, %p311
      %p314 = scmp.ne.s32.totalorder %s297, %s313
      %p315 = scmp.eq.s32.totalorder %s27, 0
      %p316 = por %p314, %p315
      %p317 = scmp.le.s32.totalorder 1, %s21
      %p318 = scmp.lt.s32.totalorder %s21, 3
      %p319 = pnand %p317, %p318
      %p320 = pneg %p319
      // Predicated region
      $region9: #{_lambda_.5} parent=5 // pred_check
        _
      $region10: #{_lambda_.5} parent=5 // pred_check_branch
        %322 = sbr.rel (%p319) target = $region12
      $region11: #{_lambda_.5} parent=5 // pred_region
        %s323 = ssub.s32 %s21, 1
        // Predicated region
        $region13: #{_lambda_.5} parent=11 // pred_check
          %p324 = pneg %p94
        $region14: #{_lambda_.5} parent=11 // pred_check_branch
          %326 = sbr.rel (%p324) target = $region16
        $region15: #{_lambda_.5} parent=11 // pred_region
          _
        $region16: #{_lambda_.5} parent=11 // pred_fallthru
          _
        // Predicated region
        $region17: #{_lambda_.5} parent=11 // pred_check
          %p327 = pneg %p115
        $region18: #{_lambda_.5} parent=11 // pred_check_branch
          %329 = sbr.rel (%p327) target = $region20
        $region19: #{_lambda_.5} parent=11 // pred_region
          _
        $region20: #{_lambda_.5} parent=11 // pred_fallthru
          _
        // Predicated region
        $region21: #{_lambda_.5} parent=11 // pred_check
          %p330 = pneg %p136
        $region22: #{_lambda_.5} parent=11 // pred_check_branch
          %332 = sbr.rel (%p330) target = $region24
        $region23: #{_lambda_.5} parent=11 // pred_region
          _
        $region24: #{_lambda_.5} parent=11 // pred_fallthru
          _
        // Predicated region
        $region25: #{_lambda_.5} parent=11 // pred_check
          %p333 = pneg %p157
        $region26: #{_lambda_.5} parent=11 // pred_check_branch
          %335 = sbr.rel (%p333) target = $region28
        $region27: #{_lambda_.5} parent=11 // pred_region
          _
        $region28: #{_lambda_.5} parent=11 // pred_fallthru
          _
        // Predicated region
        $region29: #{_lambda_.5} parent=11 // pred_check
          %p336 = pneg %p178
        $region30: #{_lambda_.5} parent=11 // pred_check_branch
          %338 = sbr.rel (%p336) target = $region32
        $region31: #{_lambda_.5} parent=11 // pred_region
          _
        $region32: #{_lambda_.5} parent=11 // pred_fallthru
          _
        // Predicated region
        $region33: #{_lambda_.5} parent=11 // pred_check
          %p339 = pneg %p199
        $region34: #{_lambda_.5} parent=11 // pred_check_branch
          %341 = sbr.rel (%p339) target = $region36
        $region35: #{_lambda_.5} parent=11 // pred_region
          _
        $region36: #{_lambda_.5} parent=11 // pred_fallthru
          _
        // Predicated region
        $region37: #{_lambda_.5} parent=11 // pred_check
          %p342 = pneg %p220
        $region38: #{_lambda_.5} parent=11 // pred_check_branch
          %344 = sbr.rel (%p342) target = $region40
        $region39: #{_lambda_.5} parent=11 // pred_region
          _
        $region40: #{_lambda_.5} parent=11 // pred_fallthru
          _
        // Predicated region
        $region41: #{_lambda_.5} parent=11 // pred_check
          %p345 = pneg %p241
        $region42: #{_lambda_.5} parent=11 // pred_check_branch
          %347 = sbr.rel (%p345) target = $region44
        $region43: #{_lambda_.5} parent=11 // pred_region
          _
        $region44: #{_lambda_.5} parent=11 // pred_fallthru
          _
        // Predicated region
        $region45: #{_lambda_.5} parent=11 // pred_check
          %p348 = pneg %p262
        $region46: #{_lambda_.5} parent=11 // pred_check_branch
          %350 = sbr.rel (%p348) target = $region48
        $region47: #{_lambda_.5} parent=11 // pred_region
          _
        $region48: #{_lambda_.5} parent=11 // pred_fallthru
          _
        // Predicated region
        $region49: #{_lambda_.5} parent=11 // pred_check
          %p351 = pneg %p283
        $region50: #{_lambda_.5} parent=11 // pred_check_branch
          %353 = sbr.rel (%p351) target = $region52
        $region51: #{_lambda_.5} parent=11 // pred_region
          _
        $region52: #{_lambda_.5} parent=11 // pred_fallthru
          _
      $region12: #{_lambda_.5} parent=5 // pred_fallthru
        _
      %p354 = scmp.lt.s32.totalorder %s21, 2
      // Predicated region
      $region53: #{_lambda_.5} parent=5 // pred_check
        %p355 = pneg %p354
      $region54: #{_lambda_.5} parent=5 // pred_check_branch
        %357 = sbr.rel (%p355) target = $region56
      $region55: #{_lambda_.5} parent=5 // pred_region
        // Predicated region
        $region57: #{_lambda_.5} parent=55 // pred_check
          %p358 = pneg %p41
        $region58: #{_lambda_.5} parent=55 // pred_check_branch
          %360 = sbr.rel (%p358) target = $region60
        $region59: #{_lambda_.5} parent=55 // pred_region
          %p361 = scmp.lt.s32.totalorder %s21, 1
          %s362 = scalar_select %p361, %s21, 1
          %s363 = smul.addr %s362, 8
          %s364 = scalar_lea.vmem %s0, %s363
        $region60: #{_lambda_.5} parent=55 // pred_fallthru
          _
        // Predicated region
        $region61: #{_lambda_.5} parent=55 // pred_check
          %p365 = pneg %p67
        $region62: #{_lambda_.5} parent=55 // pred_check_branch
          %367 = sbr.rel (%p365) target = $region64
        $region63: #{_lambda_.5} parent=55 // pred_region
          %p368 = scmp.lt.s32.totalorder %s21, 1
          %s369 = scalar_select %p368, %s21, 1
          %s370 = smul.addr %s369, 8
          %s371 = scalar_lea.vmem %s1, %s370
        $region64: #{_lambda_.5} parent=55 // pred_fallthru
          _
      $region56: #{_lambda_.5} parent=5 // pred_fallthru
        _
      %p372 = scmp.le.s32.totalorder 1, %s21
      %p373 = scmp.lt.s32.totalorder %s21, 3
      %p374 = pnand %p372, %p373
      %p375 = pneg %p374
      // Predicated region
      $region65: #{_lambda_.5} parent=5 // pred_check
        _
      $region66: #{_lambda_.5} parent=5 // pred_check_branch
        %377 = sbr.rel (%p374) target = $region68
      $region67: #{_lambda_.5} parent=5 // pred_region
        %s378 = ssub.s32 %s21, 1
        %p379 = scmp.lt.s32.totalorder %s26, 1
        %s380 = scalar_select %p379, %s26, 1
        %s381 = smul.addr %s380, 8
        %s382 = scalar_lea.vmem %s0, %s381
        %p383 = pneg %p47
        %p384 = pneg %p44
        %p385 = scmp.lt.s32.totalorder %s26, 1
        %s386 = scalar_select %p385, %s26, 1
        %s387 = smul.addr %s386, 8
        %s388 = scalar_lea.vmem %s1, %s387
        %p389 = pneg %p73
        %p390 = pneg %p70
        %p391 = pneg %p94
        %p392 = pneg %p91
        %p393 = pneg %p115
        %p394 = pneg %p112
        %p395 = pneg %p136
        %p396 = pneg %p133
        %p397 = pneg %p157
        %p398 = pneg %p154
        %p399 = pneg %p178
        %p400 = pneg %p175
        %p401 = pneg %p199
        %p402 = pneg %p196
        %p403 = pneg %p220
        %p404 = pneg %p217
        %p405 = pneg %p241
        %p406 = pneg %p238
        %p407 = pneg %p262
        %p408 = pneg %p259
        %p409 = pneg %p283
        %p410 = pneg %p280
        %p411 = pneg %p309
        %p412 = pneg %p306
        %s413 = sand.u32 %s296, 1
        %s414 = scalar_lea.sflag [#allocation3], %s413
        %s415 = sand.u32 %s296, 1
        %s416 = scalar_lea.vmem [#allocation2], %s415
        %p417 = scmp.lt.s32.totalorder %s26, 1
        %s418 = scalar_select %p417, %s26, 1
        %s419 = smul.addr %s418, 8
        %s420 = scalar_lea.vmem %s0, %s419
        %p421 = scmp.lt.s32.totalorder %s26, 1
        %s422 = scalar_select %p421, %s26, 1
        %s423 = smul.addr %s422, 8
        %s424 = scalar_lea.vmem %s1, %s423
        %v425 = vld [vmem:[%s2] sm:$0xff]
        %v426 = vld [vmem:[%s2 + $0x8] sm:$0xff]
        %v427 = vld [vmem:[%s2 + $0x10] sm:$0xff]
        %v428 = vld [vmem:[%s2 + $0x18] sm:$0xff]
        %v429 = vld [vmem:[%s2 + $0x20] sm:$0xff]
        %v430 = vld [vmem:[%s2 + $0x28] sm:$0xff]
        %v431 = vld [vmem:[%s2 + $0x30] sm:$0xff]
        %v432 = vld [vmem:[%s2 + $0x38] sm:$0xff]
        %v433 = vld [vmem:[%s2 + $0x40] sm:$0xff]
        %v434 = vld [vmem:[%s2 + $0x48] sm:$0xff]
        %v435 = vld [vmem:[%s2 + $0x50] sm:$0xff]
        %v436 = vld [vmem:[%s2 + $0x58] sm:$0xff]
        %v437 = vld [vmem:[%s2 + $0x60] sm:$0xff]
        %v438 = vld [vmem:[%s2 + $0x68] sm:$0xff]
        %v439 = vld [vmem:[%s2 + $0x70] sm:$0xff]
        %v440 = vld [vmem:[%s2 + $0x78] sm:$0xff]
        %v441 = vld [vmem:[%s3] sm:$0x1]
        %v442 = vld [vmem:[%s4] sm:$0xff]
        %v443 = vld [vmem:[%s4 + $0x8] sm:$0xff]
        %v444 = vld [vmem:[%s4 + $0x10] sm:$0xff]
        %v445 = vld [vmem:[%s4 + $0x18] sm:$0xff]
        %v446 = vld [vmem:[%s5] sm:$0xff]
        %v447 = vld [vmem:[%s5 + $0x8] sm:$0xff]
        %v448 = vld [vmem:[%s420] sm:$0xff]
        %v450 = vlaneseq
        %v451 = vshrl.u32 %v450, 7
        %v452 = vsub.s32 0, %v451
        %v453 = vrot.slane %v441, %v452
        %455 = vmatprep.subr.mxu0 0.0
        %456 = vmatpush1.msra.mxu0 %v440
        %457 = vmatprep.subr.mxu0 0.0
        %458 = vmatpush1.msra.mxu0 %v439
        %459 = vmatprep.subr.mxu0 0.0
        %460 = vmatpush1.msra.mxu0 %v438
        %461 = vmatprep.subr.mxu0 0.0
        %462 = vmatpush1.msra.mxu0 %v437
        %463 = vmatprep.subr.mxu0 0.0
        %464 = vmatpush1.msra.mxu0 %v436
        %465 = vmatprep.subr.mxu0 0.0
        %466 = vmatpush1.msra.mxu0 %v435
        %467 = vmatprep.subr.mxu0 0.0
        %468 = vmatpush1.msra.mxu0 %v434
        %469 = vmatprep.subr.mxu0 0.0
        %470 = vmatpush1.msra.mxu0 %v433
        %471 = vmatprep.subr.mxu0 0.0
        %472 = vmatpush1.msra.mxu0 %v432
        %473 = vmatprep.subr.mxu0 0.0
        %474 = vmatpush1.msra.mxu0 %v431
        %475 = vmatprep.subr.mxu0 0.0
        %476 = vmatpush1.msra.mxu0 %v430
        %477 = vmatprep.subr.mxu0 0.0
        %478 = vmatpush1.msra.mxu0 %v429
        %479 = vmatprep.subr.mxu0 0.0
        %480 = vmatpush1.msra.mxu0 %v428
        %481 = vmatprep.subr.mxu0 0.0
        %482 = vmatpush1.msra.mxu0 %v427
        %483 = vmatprep.subr.mxu0 0.0
        %484 = vmatpush1.msra.mxu0 %v426
        %485 = vmatprep.subr.mxu0 0.0
        %486 = vmatpush1.msra.mxu0 %v425
        %487 = vmatprep.subr.mxu0 0.0
        %488 = vmatpush2.msra.mxu0 0.0
        %489 = vmatprep.subr.mxu0 0.0
        %490 = vmatpush2.msra.mxu0 0.0
        %491 = vmatprep.subr.mxu0 0.0
        %492 = vmatpush2.msra.mxu0 0.0
        %493 = vmatprep.subr.mxu0 0.0
        %494 = vmatpush2.msra.mxu0 0.0
        %495 = vmatprep.subr.mxu0 0.0
        %496 = vmatpush2.msra.mxu0 0.0
        %497 = vmatprep.subr.mxu0 0.0
        %498 = vmatpush2.msra.mxu0 0.0
        %499 = vmatprep.subr.mxu0 0.0
        %500 = vmatpush2.msra.mxu0 0.0
        %501 = vmatprep.subr.mxu0 0.0
        %502 = vmatpush2.msra.mxu0 0.0
        %503 = vmatprep.subr.mxu0 0.0
        %504 = vmatpush2.msra.mxu0 0.0
        %505 = vmatprep.subr.mxu0 0.0
        %506 = vmatpush2.msra.mxu0 0.0
        %507 = vmatprep.subr.mxu0 0.0
        %508 = vmatpush2.msra.mxu0 0.0
        %509 = vmatprep.subr.mxu0 0.0
        %510 = vmatpush2.msra.mxu0 0.0
        %511 = vmatprep.subr.mxu0 0.0
        %512 = vmatpush2.msra.mxu0 0.0
        %513 = vmatprep.subr.mxu0 0.0
        %514 = vmatpush2.msra.mxu0 0.0
        %515 = vmatprep.subr.mxu0 0.0
        %516 = vmatpush2.msra.mxu0 0.0
        %517 = vmatprep.subr.mxu0 0.0
        %518 = vmatpush2.msra.mxu0 0.0
        %519 = vmatprep.mubr.f32.mxu0 0.0
        %520 = vmatmul.mubr.f32.gmra.mxu0 %v448
        %v521 = vpop.f32.mrf.mxu0
        %v522 = vadd.f32 %v453, %v521
        %v523 = vpop.f32.mrf.mxu0
        %524 = vdwg.mxu0
        %v525 = vtanh.pop %v522
        %vm526 = vcmask 261120
        %v528 = vsel %vm526, %v525, 0
        %530 = vmatprep.subr.mxu0 0.0
        %531 = vmatpush1.msra.mxu0 0.0
        %532 = vmatprep.subr.mxu0 0.0
        %533 = vmatpush1.msra.mxu0 0.0
        %534 = vmatprep.subr.mxu0 0.0
        %535 = vmatpush1.msra.mxu0 0.0
        %536 = vmatprep.subr.mxu0 0.0
        %537 = vmatpush1.msra.mxu0 0.0
        %538 = vmatprep.subr.mxu0 0.0
        %539 = vmatpush1.msra.mxu0 0.0
        %540 = vmatprep.subr.mxu0 0.0
        %541 = vmatpush1.msra.mxu0 0.0
        %542 = vmatprep.subr.mxu0 0.0
        %543 = vmatpush1.msra.mxu0 0.0
        %544 = vmatprep.subr.mxu0 0.0
        %545 = vmatpush1.msra.mxu0 0.0
        %546 = vmatprep.subr.mxu0 0.0
        %547 = vmatpush1.msra.mxu0 0.0
        %548 = vmatprep.subr.mxu0 0.0
        %549 = vmatpush1.msra.mxu0 0.0
        %550 = vmatprep.subr.mxu0 0.0
        %551 = vmatpush1.msra.mxu0 0.0
        %552 = vmatprep.subr.mxu0 0.0
        %553 = vmatpush1.msra.mxu0 0.0
        %554 = vmatprep.subr.mxu0 0.0
        %555 = vmatpush1.msra.mxu0 %v445
        %556 = vmatprep.subr.mxu0 0.0
        %557 = vmatpush1.msra.mxu0 %v444
        %558 = vmatprep.subr.mxu0 0.0
        %559 = vmatpush1.msra.mxu0 %v443
        %560 = vmatprep.subr.mxu0 0.0
        %561 = vmatpush1.msra.mxu0 %v442
        %562 = vmatprep.subr.mxu0 0.0
        %563 = vmatpush2.msra.mxu0 0.0
        %564 = vmatprep.subr.mxu0 0.0
        %565 = vmatpush2.msra.mxu0 0.0
        %566 = vmatprep.subr.mxu0 0.0
        %567 = vmatpush2.msra.mxu0 0.0
        %568 = vmatprep.subr.mxu0 0.0
        %569 = vmatpush2.msra.mxu0 0.0
        %570 = vmatprep.subr.mxu0 0.0
        %571 = vmatpush2.msra.mxu0 0.0
        %572 = vmatprep.subr.mxu0 0.0
        %573 = vmatpush2.msra.mxu0 0.0
        %574 = vmatprep.subr.mxu0 0.0
        %575 = vmatpush2.msra.mxu0 0.0
        %576 = vmatprep.subr.mxu0 0.0
        %577 = vmatpush2.msra.mxu0 0.0
        %578 = vmatprep.subr.mxu0 0.0
        %579 = vmatpush2.msra.mxu0 0.0
        %580 = vmatprep.subr.mxu0 0.0
        %581 = vmatpush2.msra.mxu0 0.0
        %582 = vmatprep.subr.mxu0 0.0
        %583 = vmatpush2.msra.mxu0 0.0
        %584 = vmatprep.subr.mxu0 0.0
        %585 = vmatpush2.msra.mxu0 0.0
        %586 = vmatprep.subr.mxu0 0.0
        %587 = vmatpush2.msra.mxu0 0.0
        %588 = vmatprep.subr.mxu0 0.0
        %589 = vmatpush2.msra.mxu0 0.0
        %590 = vmatprep.subr.mxu0 0.0
        %591 = vmatpush2.msra.mxu0 0.0
        %592 = vmatprep.subr.mxu0 0.0
        %593 = vmatpush2.msra.mxu0 0.0
        %594 = vmatprep.mubr.f32.mxu0 0.0
        %595 = vmatmul.mubr.f32.gmra.mxu0 %v528
        %v596 = vpop.f32.mrf.mxu0
        %v597 = vadd.f32 0.0, %v596
        %v598 = vpop.f32.mrf.mxu0
        %599 = vdwg.mxu0
        %v600 = vtanh.pop %v597
        %vm601 = vcmask 130048
        %v603 = vsel %vm601, %v600, 0
        %605 = vmatprep.subr.mxu0 0.0
        %606 = vmatpush1.msra.mxu0 0.0
        %607 = vmatprep.subr.mxu0 0.0
        %608 = vmatpush1.msra.mxu0 0.0
        %609 = vmatprep.subr.mxu0 0.0
        %610 = vmatpush1.msra.mxu0 0.0
        %611 = vmatprep.subr.mxu0 0.0
        %612 = vmatpush1.msra.mxu0 0.0
        %613 = vmatprep.subr.mxu0 0.0
        %614 = vmatpush1.msra.mxu0 0.0
        %615 = vmatprep.subr.mxu0 0.0
        %616 = vmatpush1.msra.mxu0 0.0
        %617 = vmatprep.subr.mxu0 0.0
        %618 = vmatpush1.msra.mxu0 0.0
        %619 = vmatprep.subr.mxu0 0.0
        %620 = vmatpush1.msra.mxu0 0.0
        %621 = vmatprep.subr.mxu0 0.0
        %622 = vmatpush1.msra.mxu0 0.0
        %623 = vmatprep.subr.mxu0 0.0
        %624 = vmatpush1.msra.mxu0 0.0
        %625 = vmatprep.subr.mxu0 0.0
        %626 = vmatpush1.msra.mxu0 0.0
        %627 = vmatprep.subr.mxu0 0.0
        %628 = vmatpush1.msra.mxu0 0.0
        %629 = vmatprep.subr.mxu0 0.0
        %630 = vmatpush1.msra.mxu0 0.0
        %631 = vmatprep.subr.mxu0 0.0
        %632 = vmatpush1.msra.mxu0 0.0
        %633 = vmatprep.subr.mxu0 0.0
        %634 = vmatpush1.msra.mxu0 %v447
        %635 = vmatprep.subr.mxu0 0.0
        %636 = vmatpush1.msra.mxu0 %v446
        %637 = vmatprep.subr.mxu0 0.0
        %638 = vmatpush2.msra.mxu0 0.0
        %639 = vmatprep.subr.mxu0 0.0
        %640 = vmatpush2.msra.mxu0 0.0
        %641 = vmatprep.subr.mxu0 0.0
        %642 = vmatpush2.msra.mxu0 0.0
        %643 = vmatprep.subr.mxu0 0.0
        %644 = vmatpush2.msra.mxu0 0.0
        %645 = vmatprep.subr.mxu0 0.0
        %646 = vmatpush2.msra.mxu0 0.0
        %647 = vmatprep.subr.mxu0 0.0
        %648 = vmatpush2.msra.mxu0 0.0
        %649 = vmatprep.subr.mxu0 0.0
        %650 = vmatpush2.msra.mxu0 0.0
        %651 = vmatprep.subr.mxu0 0.0
        %652 = vmatpush2.msra.mxu0 0.0
        %653 = vmatprep.subr.mxu0 0.0
        %654 = vmatpush2.msra.mxu0 0.0
        %655 = vmatprep.subr.mxu0 0.0
        %656 = vmatpush2.msra.mxu0 0.0
        %657 = vmatprep.subr.mxu0 0.0
        %658 = vmatpush2.msra.mxu0 0.0
        %659 = vmatprep.subr.mxu0 0.0
        %660 = vmatpush2.msra.mxu0 0.0
        %661 = vmatprep.subr.mxu0 0.0
        %662 = vmatpush2.msra.mxu0 0.0
        %663 = vmatprep.subr.mxu0 0.0
        %664 = vmatpush2.msra.mxu0 0.0
        %665 = vmatprep.subr.mxu0 0.0
        %666 = vmatpush2.msra.mxu0 0.0
        %667 = vmatprep.subr.mxu0 0.0
        %668 = vmatpush2.msra.mxu0 0.0
        %669 = vmatprep.mubr.f32.mxu0 0.0
        %670 = vmatmul.mubr.f32.gmra.mxu0 %v603
        %v671 = vpop.f32.mrf.mxu0
        %v672 = vadd.f32 0.0, %v671
        %v673 = vpop.f32.mrf.mxu0
        %674 = vdwg.mxu0
        %vm675 = vcmask 15360
        %v676 = vsel %vm675, %v672, -inf
        %v677 = vrot.slane %v676, 4
        %v678 = vmax.f32 %v676, %v677
        %v679 = vrot.slane %v678, 2
        %v680 = vmax.f32 %v678, %v679
        %v681 = vrot.slane %v680, 1
        %v682 = vmax.f32 %v680, %v681
        %v683 = vsub.f32 %v672, %v682
        %v684 = vmul.f32 %v683, 1.442695
        %v685 = vpow.pop %v684
        %v686 = vsel %vm675, %v685, 0.0
        %v687 = vrot.slane %v686, 4
        %v688 = vadd.f32 %v686, %v687
        %v689 = vrot.slane %v688, 2
        %v690 = vadd.f32 %v688, %v689
        %v691 = vrot.slane %v690, 1
        %v692 = vadd.f32 %v690, %v691
        %v693 = vrcp.pop %v692
        %v694 = vmul.f32 %v685, %v693
        %695 = vxpose.xlu0.b32.start [1/16] %v694, 128
        %696 = vxpose.xlu0.b32.cont [2/16] 0.0, 128
        %697 = vxpose.xlu0.b32.cont [3/16] 0.0, 128
        %698 = vxpose.xlu0.b32.cont [4/16] 0.0, 128
        %699 = vxpose.xlu0.b32.cont [5/16] 0.0, 128
        %700 = vxpose.xlu0.b32.cont [6/16] 0.0, 128
        %701 = vxpose.xlu0.b32.cont [7/16] 0.0, 128
        %702 = vxpose.xlu0.b32.cont [8/16] 0.0, 128
        %703 = vxpose.xlu0.b32.cont [9/16] 0.0, 128
        %704 = vxpose.xlu0.b32.cont [10/16] 0.0, 128
        %705 = vxpose.xlu0.b32.cont [11/16] 0.0, 128
        %706 = vxpose.xlu0.b32.cont [12/16] 0.0, 128
        %707 = vxpose.xlu0.b32.cont [13/16] 0.0, 128
        %708 = vxpose.xlu0.b32.cont [14/16] 0.0, 128
        %709 = vxpose.xlu0.b32.cont [15/16] 0.0, 128
        %710 = vxpose.xlu0.b32.end [16/16] 0.0, 128
        %v711 = vpop.trf.xlu0
        %v712 = vpop.trf.xlu0
        %v713 = vpop.trf.xlu0
        %v714 = vpop.trf.xlu0
        %v715 = vpop.trf.xlu0
        %v716 = vpop.trf.xlu0
        %v717 = vpop.trf.xlu0
        %v718 = vpop.trf.xlu0
        %v719 = vpop.trf.xlu0
        %v720 = vpop.trf.xlu0
        %v721 = vpop.trf.xlu0
        %v722 = vpop.trf.xlu0
        %v723 = vpop.trf.xlu0
        %v724 = vpop.trf.xlu0
        %v725 = vpop.trf.xlu0
        %v726 = vpop.trf.xlu0
        %vm727 = vcmask 64512
        %v729 = vsel %vm727, %v711, 0
        %731 = vmatprep.subr.mxu0 0.0
        %732 = vmatpush1.msra.mxu0 0.0
        %733 = vmatprep.subr.mxu0 0.0
        %734 = vmatpush1.msra.mxu0 0.0
        %735 = vmatprep.subr.mxu0 0.0
        %736 = vmatpush1.msra.mxu0 0.0
        %737 = vmatprep.subr.mxu0 0.0
        %738 = vmatpush1.msra.mxu0 0.0
        %739 = vmatprep.subr.mxu0 0.0
        %740 = vmatpush1.msra.mxu0 0.0
        %741 = vmatprep.subr.mxu0 0.0
        %742 = vmatpush1.msra.mxu0 0.0
        %743 = vmatprep.subr.mxu0 0.0
        %744 = vmatpush1.msra.mxu0 0.0
        %745 = vmatprep.subr.mxu0 0.0
        %746 = vmatpush1.msra.mxu0 0.0
        %747 = vmatprep.subr.mxu0 0.0
        %748 = vmatpush1.msra.mxu0 0.0
        %749 = vmatprep.subr.mxu0 0.0
        %750 = vmatpush1.msra.mxu0 0.0
        %751 = vmatprep.subr.mxu0 0.0
        %752 = vmatpush1.msra.mxu0 0.0
        %753 = vmatprep.subr.mxu0 0.0
        %754 = vmatpush1.msra.mxu0 0.0
        %755 = vmatprep.subr.mxu0 0.0
        %756 = vmatpush1.msra.mxu0 0.0
        %757 = vmatprep.subr.mxu0 0.0
        %758 = vmatpush1.msra.mxu0 0.0
        %759 = vmatprep.subr.mxu0 0.0
        %760 = vmatpush1.msra.mxu0 0.0
        %761 = vmatprep.subr.mxu0 0.0
        %762 = vmatpush1.msra.mxu0 %v525
        %763 = vmatprep.subr.mxu0 0.0
        %764 = vmatpush2.msra.mxu0 0.0
        %765 = vmatprep.subr.mxu0 0.0
        %766 = vmatpush2.msra.mxu0 0.0
        %767 = vmatprep.subr.mxu0 0.0
        %768 = vmatpush2.msra.mxu0 0.0
        %769 = vmatprep.subr.mxu0 0.0
        %770 = vmatpush2.msra.mxu0 0.0
        %771 = vmatprep.subr.mxu0 0.0
        %772 = vmatpush2.msra.mxu0 0.0
        %773 = vmatprep.subr.mxu0 0.0
        %774 = vmatpush2.msra.mxu0 0.0
        %775 = vmatprep.subr.mxu0 0.0
        %776 = vmatpush2.msra.mxu0 0.0
        %777 = vmatprep.subr.mxu0 0.0
        %778 = vmatpush2.msra.mxu0 0.0
        %779 = vmatprep.subr.mxu0 0.0
        %780 = vmatpush2.msra.mxu0 0.0
        %781 = vmatprep.subr.mxu0 0.0
        %782 = vmatpush2.msra.mxu0 0.0
        %783 = vmatprep.subr.mxu0 0.0
        %784 = vmatpush2.msra.mxu0 0.0
        %785 = vmatprep.subr.mxu0 0.0
        %786 = vmatpush2.msra.mxu0 0.0
        %787 = vmatprep.subr.mxu0 0.0
        %788 = vmatpush2.msra.mxu0 0.0
        %789 = vmatprep.subr.mxu0 0.0
        %790 = vmatpush2.msra.mxu0 0.0
        %791 = vmatprep.subr.mxu0 0.0
        %792 = vmatpush2.msra.mxu0 0.0
        %793 = vmatprep.subr.mxu0 0.0
        %794 = vmatpush2.msra.mxu0 0.0
        %795 = vmatprep.mubr.f32.mxu0 0.0
        %796 = vmatmul.mubr.f32.gmra.mxu0 %v729
        %v797 = vpop.f32.mrf.mxu0
        %v798 = vadd.f32 0.0, %v797
        %v799 = vpop.f32.mrf.mxu0
        %800 = vdwg.mxu0
        %v801 = vld [vmem:[%s6] sm:$0xff]
        %v802 = vld [vmem:[%s6 + $0x8] sm:$0xff]
        %v803 = vld [vmem:[%s6 + $0x10] sm:$0xff]
        %v804 = vld [vmem:[%s6 + $0x18] sm:$0xff]
        %v805 = vld [vmem:[%s6 + $0x20] sm:$0xff]
        %v806 = vld [vmem:[%s6 + $0x28] sm:$0xff]
        %v807 = vld [vmem:[%s6 + $0x30] sm:$0xff]
        %v808 = vld [vmem:[%s6 + $0x38] sm:$0xff]
        %v809 = vld [vmem:[%s7] sm:$0x1]
        %v811 = vsel %vm526, %v798, 0
        %813 = vmatprep.subr.mxu0 0.0
        %814 = vmatpush1.msra.mxu0 0.0
        %815 = vmatprep.subr.mxu0 0.0
        %816 = vmatpush1.msra.mxu0 0.0
        %817 = vmatprep.subr.mxu0 0.0
        %818 = vmatpush1.msra.mxu0 0.0
        %819 = vmatprep.subr.mxu0 0.0
        %820 = vmatpush1.msra.mxu0 0.0
        %821 = vmatprep.subr.mxu0 0.0
        %822 = vmatpush1.msra.mxu0 0.0
        %823 = vmatprep.subr.mxu0 0.0
        %824 = vmatpush1.msra.mxu0 0.0
        %825 = vmatprep.subr.mxu0 0.0
        %826 = vmatpush1.msra.mxu0 0.0
        %827 = vmatprep.subr.mxu0 0.0
        %828 = vmatpush1.msra.mxu0 0.0
        %829 = vmatprep.subr.mxu0 0.0
        %830 = vmatpush1.msra.mxu0 0.0
        %831 = vmatprep.subr.mxu0 0.0
        %832 = vmatpush1.msra.mxu0 0.0
        %833 = vmatprep.subr.mxu0 0.0
        %834 = vmatpush1.msra.mxu0 0.0
        %835 = vmatprep.subr.mxu0 0.0
        %836 = vmatpush1.msra.mxu0 0.0
        %837 = vmatprep.subr.mxu0 0.0
        %838 = vmatpush1.msra.mxu0 %v804
        %839 = vmatprep.subr.mxu0 0.0
        %840 = vmatpush1.msra.mxu0 %v803
        %841 = vmatprep.subr.mxu0 0.0
        %842 = vmatpush1.msra.mxu0 %v802
        %843 = vmatprep.subr.mxu0 0.0
        %844 = vmatpush1.msra.mxu0 %v801
        %845 = vmatprep.subr.mxu0 0.0
        %846 = vmatpush2.msra.mxu0 0.0
        %847 = vmatprep.subr.mxu0 0.0
        %848 = vmatpush2.msra.mxu0 0.0
        %849 = vmatprep.subr.mxu0 0.0
        %850 = vmatpush2.msra.mxu0 0.0
        %851 = vmatprep.subr.mxu0 0.0
        %852 = vmatpush2.msra.mxu0 0.0
        %853 = vmatprep.subr.mxu0 0.0
        %854 = vmatpush2.msra.mxu0 0.0
        %855 = vmatprep.subr.mxu0 0.0
        %856 = vmatpush2.msra.mxu0 0.0
        %857 = vmatprep.subr.mxu0 0.0
        %858 = vmatpush2.msra.mxu0 0.0
        %859 = vmatprep.subr.mxu0 0.0
        %860 = vmatpush2.msra.mxu0 0.0
        %861 = vmatprep.subr.mxu0 0.0
        %862 = vmatpush2.msra.mxu0 0.0
        %863 = vmatprep.subr.mxu0 0.0
        %864 = vmatpush2.msra.mxu0 0.0
        %865 = vmatprep.subr.mxu0 0.0
        %866 = vmatpush2.msra.mxu0 0.0
        %867 = vmatprep.subr.mxu0 0.0
        %868 = vmatpush2.msra.mxu0 0.0
        %869 = vmatprep.subr.mxu0 0.0
        %870 = vmatpush2.msra.mxu0 0.0
        %871 = vmatprep.subr.mxu0 0.0
        %872 = vmatpush2.msra.mxu0 0.0
        %873 = vmatprep.subr.mxu0 0.0
        %874 = vmatpush2.msra.mxu0 0.0
        %875 = vmatprep.subr.mxu0 0.0
        %876 = vmatpush2.msra.mxu0 0.0
        %877 = vmatprep.mubr.f32.mxu0 0.0
        %878 = vmatmul.mubr.f32.gmra.mxu0 %v811
        %v879 = vpop.f32.mrf.mxu0
        %v880 = vadd.f32 0.0, %v879
        %v881 = vpop.f32.mrf.mxu0
        %882 = vdwg.mxu0
        %v883 = vadd.f32 %v809, %v880
        %v884 = vrot.slane %v798, 1
        %v885 = vsel %vm526, %v884, 0
        %887 = vmatprep.subr.mxu0 0.0
        %888 = vmatpush1.msra.mxu0 0.0
        %889 = vmatprep.subr.mxu0 0.0
        %890 = vmatpush1.msra.mxu0 0.0
        %891 = vmatprep.subr.mxu0 0.0
        %892 = vmatpush1.msra.mxu0 0.0
        %893 = vmatprep.subr.mxu0 0.0
        %894 = vmatpush1.msra.mxu0 0.0
        %895 = vmatprep.subr.mxu0 0.0
        %896 = vmatpush1.msra.mxu0 0.0
        %897 = vmatprep.subr.mxu0 0.0
        %898 = vmatpush1.msra.mxu0 0.0
        %899 = vmatprep.subr.mxu0 0.0
        %900 = vmatpush1.msra.mxu0 0.0
        %901 = vmatprep.subr.mxu0 0.0
        %902 = vmatpush1.msra.mxu0 0.0
        %903 = vmatprep.subr.mxu0 0.0
        %904 = vmatpush1.msra.mxu0 0.0
        %905 = vmatprep.subr.mxu0 0.0
        %906 = vmatpush1.msra.mxu0 0.0
        %907 = vmatprep.subr.mxu0 0.0
        %908 = vmatpush1.msra.mxu0 0.0
        %909 = vmatprep.subr.mxu0 0.0
        %910 = vmatpush1.msra.mxu0 0.0
        %911 = vmatprep.subr.mxu0 0.0
        %912 = vmatpush1.msra.mxu0 %v808
        %913 = vmatprep.subr.mxu0 0.0
        %914 = vmatpush1.msra.mxu0 %v807
        %915 = vmatprep.subr.mxu0 0.0
        %916 = vmatpush1.msra.mxu0 %v806
        %917 = vmatprep.subr.mxu0 0.0
        %918 = vmatpush1.msra.mxu0 %v805
        %919 = vmatprep.subr.mxu0 0.0
        %920 = vmatpush2.msra.mxu0 0.0
        %921 = vmatprep.subr.mxu0 0.0
        %922 = vmatpush2.msra.mxu0 0.0
        %923 = vmatprep.subr.mxu0 0.0
        %924 = vmatpush2.msra.mxu0 0.0
        %925 = vmatprep.subr.mxu0 0.0
        %926 = vmatpush2.msra.mxu0 0.0
        %927 = vmatprep.subr.mxu0 0.0
        %928 = vmatpush2.msra.mxu0 0.0
        %929 = vmatprep.subr.mxu0 0.0
        %930 = vmatpush2.msra.mxu0 0.0
        %931 = vmatprep.subr.mxu0 0.0
        %932 = vmatpush2.msra.mxu0 0.0
        %933 = vmatprep.subr.mxu0 0.0
        %934 = vmatpush2.msra.mxu0 0.0
        %935 = vmatprep.subr.mxu0 0.0
        %936 = vmatpush2.msra.mxu0 0.0
        %937 = vmatprep.subr.mxu0 0.0
        %938 = vmatpush2.msra.mxu0 0.0
        %939 = vmatprep.subr.mxu0 0.0
        %940 = vmatpush2.msra.mxu0 0.0
        %941 = vmatprep.subr.mxu0 0.0
        %942 = vmatpush2.msra.mxu0 0.0
        %943 = vmatprep.subr.mxu0 0.0
        %944 = vmatpush2.msra.mxu0 0.0
        %945 = vmatprep.subr.mxu0 0.0
        %946 = vmatpush2.msra.mxu0 0.0
        %947 = vmatprep.subr.mxu0 0.0
        %948 = vmatpush2.msra.mxu0 0.0
        %949 = vmatprep.subr.mxu0 0.0
        %950 = vmatpush2.msra.mxu0 0.0
        %951 = vmatprep.mubr.f32.mxu0 0.0
        %952 = vmatmul.mubr.f32.gmra.mxu0 %v885
        %v953 = vpop.f32.mrf.mxu0
        %v954 = vadd.f32 0.0, %v953
        %v955 = vpop.f32.mrf.mxu0
        %956 = vdwg.mxu0
        %v957 = vadd.f32 %v883, %v954
        %v958 = vld [vmem:[%s424] sm:$0x3f]
        %959 = vmatprep.subr.mxu0 0.0
        %960 = vmatpush1.msra.mxu0 %v440
        %961 = vmatprep.subr.mxu0 0.0
        %962 = vmatpush1.msra.mxu0 %v439
        %963 = vmatprep.subr.mxu0 0.0
        %964 = vmatpush1.msra.mxu0 %v438
        %965 = vmatprep.subr.mxu0 0.0
        %966 = vmatpush1.msra.mxu0 %v437
        %967 = vmatprep.subr.mxu0 0.0
        %968 = vmatpush1.msra.mxu0 %v436
        %969 = vmatprep.subr.mxu0 0.0
        %970 = vmatpush1.msra.mxu0 %v435
        %971 = vmatprep.subr.mxu0 0.0
        %972 = vmatpush1.msra.mxu0 %v434
        %973 = vmatprep.subr.mxu0 0.0
        %974 = vmatpush1.msra.mxu0 %v433
        %975 = vmatprep.subr.mxu0 0.0
        %976 = vmatpush1.msra.mxu0 %v432
        %977 = vmatprep.subr.mxu0 0.0
        %978 = vmatpush1.msra.mxu0 %v431
        %979 = vmatprep.subr.mxu0 0.0
        %980 = vmatpush1.msra.mxu0 %v430
        %981 = vmatprep.subr.mxu0 0.0
        %982 = vmatpush1.msra.mxu0 %v429
        %983 = vmatprep.subr.mxu0 0.0
        %984 = vmatpush1.msra.mxu0 %v428
        %985 = vmatprep.subr.mxu0 0.0
        %986 = vmatpush1.msra.mxu0 %v427
        %987 = vmatprep.subr.mxu0 0.0
        %988 = vmatpush1.msra.mxu0 %v426
        %989 = vmatprep.subr.mxu0 0.0
        %990 = vmatpush1.msra.mxu0 %v425
        %991 = vmatprep.subr.mxu0 0.0
        %992 = vmatpush2.msra.mxu0 0.0
        %993 = vmatprep.subr.mxu0 0.0
        %994 = vmatpush2.msra.mxu0 0.0
        %995 = vmatprep.subr.mxu0 0.0
        %996 = vmatpush2.msra.mxu0 0.0
        %997 = vmatprep.subr.mxu0 0.0
        %998 = vmatpush2.msra.mxu0 0.0
        %999 = vmatprep.subr.mxu0 0.0
        %1000 = vmatpush2.msra.mxu0 0.0
        %1001 = vmatprep.subr.mxu0 0.0
        %1002 = vmatpush2.msra.mxu0 0.0
        %1003 = vmatprep.subr.mxu0 0.0
        %1004 = vmatpush2.msra.mxu0 0.0
        %1005 = vmatprep.subr.mxu0 0.0
        %1006 = vmatpush2.msra.mxu0 0.0
        %1007 = vmatprep.subr.mxu0 0.0
        %1008 = vmatpush2.msra.mxu0 0.0
        %1009 = vmatprep.subr.mxu0 0.0
        %1010 = vmatpush2.msra.mxu0 0.0
        %1011 = vmatprep.subr.mxu0 0.0
        %1012 = vmatpush2.msra.mxu0 0.0
        %1013 = vmatprep.subr.mxu0 0.0
        %1014 = vmatpush2.msra.mxu0 0.0
        %1015 = vmatprep.subr.mxu0 0.0
        %1016 = vmatpush2.msra.mxu0 0.0
        %1017 = vmatprep.subr.mxu0 0.0
        %1018 = vmatpush2.msra.mxu0 0.0
        %1019 = vmatprep.subr.mxu0 0.0
        %1020 = vmatpush2.msra.mxu0 0.0
        %1021 = vmatprep.subr.mxu0 0.0
        %1022 = vmatpush2.msra.mxu0 0.0
        %1023 = vmatprep.mubr.f32.mxu0 0.0
        %1024 = vmatmul.mubr.f32.gmra.mxu0 %v958
        %v1025 = vpop.f32.mrf.mxu0
        %v1026 = vadd.f32 %v453, %v1025
        %v1027 = vpop.f32.mrf.mxu0
        %1028 = vdwg.mxu0
        %v1029 = vtanh.pop %v1026
        %v1031 = vsel %vm526, %v1029, 0
        %1033 = vmatprep.subr.mxu0 0.0
        %1034 = vmatpush1.msra.mxu0 0.0
        %1035 = vmatprep.subr.mxu0 0.0
        %1036 = vmatpush1.msra.mxu0 0.0
        %1037 = vmatprep.subr.mxu0 0.0
        %1038 = vmatpush1.msra.mxu0 0.0
        %1039 = vmatprep.subr.mxu0 0.0
        %1040 = vmatpush1.msra.mxu0 0.0
        %1041 = vmatprep.subr.mxu0 0.0
        %1042 = vmatpush1.msra.mxu0 0.0
        %1043 = vmatprep.subr.mxu0 0.0
        %1044 = vmatpush1.msra.mxu0 0.0
        %1045 = vmatprep.subr.mxu0 0.0
        %1046 = vmatpush1.msra.mxu0 0.0
        %1047 = vmatprep.subr.mxu0 0.0
        %1048 = vmatpush1.msra.mxu0 0.0
        %1049 = vmatprep.subr.mxu0 0.0
        %1050 = vmatpush1.msra.mxu0 0.0
        %1051 = vmatprep.subr.mxu0 0.0
        %1052 = vmatpush1.msra.mxu0 0.0
        %1053 = vmatprep.subr.mxu0 0.0
        %1054 = vmatpush1.msra.mxu0 0.0
        %1055 = vmatprep.subr.mxu0 0.0
        %1056 = vmatpush1.msra.mxu0 0.0
        %1057 = vmatprep.subr.mxu0 0.0
        %1058 = vmatpush1.msra.mxu0 %v445
        %1059 = vmatprep.subr.mxu0 0.0
        %1060 = vmatpush1.msra.mxu0 %v444
        %1061 = vmatprep.subr.mxu0 0.0
        %1062 = vmatpush1.msra.mxu0 %v443
        %1063 = vmatprep.subr.mxu0 0.0
        %1064 = vmatpush1.msra.mxu0 %v442
        %1065 = vmatprep.subr.mxu0 0.0
        %1066 = vmatpush2.msra.mxu0 0.0
        %1067 = vmatprep.subr.mxu0 0.0
        %1068 = vmatpush2.msra.mxu0 0.0
        %1069 = vmatprep.subr.mxu0 0.0
        %1070 = vmatpush2.msra.mxu0 0.0
        %1071 = vmatprep.subr.mxu0 0.0
        %1072 = vmatpush2.msra.mxu0 0.0
        %1073 = vmatprep.subr.mxu0 0.0
        %1074 = vmatpush2.msra.mxu0 0.0
        %1075 = vmatprep.subr.mxu0 0.0
        %1076 = vmatpush2.msra.mxu0 0.0
        %1077 = vmatprep.subr.mxu0 0.0
        %1078 = vmatpush2.msra.mxu0 0.0
        %1079 = vmatprep.subr.mxu0 0.0
        %1080 = vmatpush2.msra.mxu0 0.0
        %1081 = vmatprep.subr.mxu0 0.0
        %1082 = vmatpush2.msra.mxu0 0.0
        %1083 = vmatprep.subr.mxu0 0.0
        %1084 = vmatpush2.msra.mxu0 0.0
        %1085 = vmatprep.subr.mxu0 0.0
        %1086 = vmatpush2.msra.mxu0 0.0
        %1087 = vmatprep.subr.mxu0 0.0
        %1088 = vmatpush2.msra.mxu0 0.0
        %1089 = vmatprep.subr.mxu0 0.0
        %1090 = vmatpush2.msra.mxu0 0.0
        %1091 = vmatprep.subr.mxu0 0.0
        %1092 = vmatpush2.msra.mxu0 0.0
        %1093 = vmatprep.subr.mxu0 0.0
        %1094 = vmatpush2.msra.mxu0 0.0
        %1095 = vmatprep.subr.mxu0 0.0
        %1096 = vmatpush2.msra.mxu0 0.0
        %1097 = vmatprep.mubr.f32.mxu0 0.0
        %1098 = vmatmul.mubr.f32.gmra.mxu0 %v1031
        %v1099 = vpop.f32.mrf.mxu0
        %v1100 = vadd.f32 0.0, %v1099
        %v1101 = vpop.f32.mrf.mxu0
        %1102 = vdwg.mxu0
        %v1103 = vtanh.pop %v1100
        %v1105 = vsel %vm601, %v1103, 0
        %1107 = vmatprep.subr.mxu0 0.0
        %1108 = vmatpush1.msra.mxu0 0.0
        %1109 = vmatprep.subr.mxu0 0.0
        %1110 = vmatpush1.msra.mxu0 0.0
        %1111 = vmatprep.subr.mxu0 0.0
        %1112 = vmatpush1.msra.mxu0 0.0
        %1113 = vmatprep.subr.mxu0 0.0
        %1114 = vmatpush1.msra.mxu0 0.0
        %1115 = vmatprep.subr.mxu0 0.0
        %1116 = vmatpush1.msra.mxu0 0.0
        %1117 = vmatprep.subr.mxu0 0.0
        %1118 = vmatpush1.msra.mxu0 0.0
        %1119 = vmatprep.subr.mxu0 0.0
        %1120 = vmatpush1.msra.mxu0 0.0
        %1121 = vmatprep.subr.mxu0 0.0
        %1122 = vmatpush1.msra.mxu0 0.0
        %1123 = vmatprep.subr.mxu0 0.0
        %1124 = vmatpush1.msra.mxu0 0.0
        %1125 = vmatprep.subr.mxu0 0.0
        %1126 = vmatpush1.msra.mxu0 0.0
        %1127 = vmatprep.subr.mxu0 0.0
        %1128 = vmatpush1.msra.mxu0 0.0
        %1129 = vmatprep.subr.mxu0 0.0
        %1130 = vmatpush1.msra.mxu0 0.0
        %1131 = vmatprep.subr.mxu0 0.0
        %1132 = vmatpush1.msra.mxu0 0.0
        %1133 = vmatprep.subr.mxu0 0.0
        %1134 = vmatpush1.msra.mxu0 0.0
        %1135 = vmatprep.subr.mxu0 0.0
        %1136 = vmatpush1.msra.mxu0 %v447
        %1137 = vmatprep.subr.mxu0 0.0
        %1138 = vmatpush1.msra.mxu0 %v446
        %1139 = vmatprep.subr.mxu0 0.0
        %1140 = vmatpush2.msra.mxu0 0.0
        %1141 = vmatprep.subr.mxu0 0.0
        %1142 = vmatpush2.msra.mxu0 0.0
        %1143 = vmatprep.subr.mxu0 0.0
        %1144 = vmatpush2.msra.mxu0 0.0
        %1145 = vmatprep.subr.mxu0 0.0
        %1146 = vmatpush2.msra.mxu0 0.0
        %1147 = vmatprep.subr.mxu0 0.0
        %1148 = vmatpush2.msra.mxu0 0.0
        %1149 = vmatprep.subr.mxu0 0.0
        %1150 = vmatpush2.msra.mxu0 0.0
        %1151 = vmatprep.subr.mxu0 0.0
        %1152 = vmatpush2.msra.mxu0 0.0
        %1153 = vmatprep.subr.mxu0 0.0
        %1154 = vmatpush2.msra.mxu0 0.0
        %1155 = vmatprep.subr.mxu0 0.0
        %1156 = vmatpush2.msra.mxu0 0.0
        %1157 = vmatprep.subr.mxu0 0.0
        %1158 = vmatpush2.msra.mxu0 0.0
        %1159 = vmatprep.subr.mxu0 0.0
        %1160 = vmatpush2.msra.mxu0 0.0
        %1161 = vmatprep.subr.mxu0 0.0
        %1162 = vmatpush2.msra.mxu0 0.0
        %1163 = vmatprep.subr.mxu0 0.0
        %1164 = vmatpush2.msra.mxu0 0.0
        %1165 = vmatprep.subr.mxu0 0.0
        %1166 = vmatpush2.msra.mxu0 0.0
        %1167 = vmatprep.subr.mxu0 0.0
        %1168 = vmatpush2.msra.mxu0 0.0
        %1169 = vmatprep.subr.mxu0 0.0
        %1170 = vmatpush2.msra.mxu0 0.0
        %1171 = vmatprep.mubr.f32.mxu0 0.0
        %1172 = vmatmul.mubr.f32.gmra.mxu0 %v1105
        %v1173 = vpop.f32.mrf.mxu0
        %v1174 = vadd.f32 0.0, %v1173
        %v1175 = vpop.f32.mrf.mxu0
        %1176 = vdwg.mxu0
        %vm1177 = vcmask 13312
        %v1178 = vsel %vm1177, %v1174, -inf
        %v1179 = vrot.slane %v1178, 4
        %v1180 = vmax.f32 %v1178, %v1179
        %v1181 = vrot.slane %v1180, 2
        %v1182 = vmax.f32 %v1180, %v1181
        %v1183 = vrot.slane %v1182, 1
        %v1184 = vmax.f32 %v1182, %v1183
        %v1185 = vsub.f32 %v1174, %v1184
        %v1186 = vmul.f32 %v1185, 1.442695
        %v1187 = vpow.pop %v1186
        %v1188 = vsel %vm1177, %v1187, 0.0
        %v1189 = vrot.slane %v1188, 4
        %v1190 = vadd.f32 %v1188, %v1189
        %v1191 = vrot.slane %v1190, 2
        %v1192 = vadd.f32 %v1190, %v1191
        %v1193 = vrot.slane %v1192, 1
        %v1194 = vadd.f32 %v1192, %v1193
        %v1195 = vrcp.pop %v1194
        %v1196 = vmul.f32 %v1187, %v1195
        %1197 = vxpose.xlu0.b32.start [1/16] %v1196, 128
        %1198 = vxpose.xlu0.b32.cont [2/16] 0.0, 128
        %1199 = vxpose.xlu0.b32.cont [3/16] 0.0, 128
        %1200 = vxpose.xlu0.b32.cont [4/16] 0.0, 128
        %1201 = vxpose.xlu0.b32.cont [5/16] 0.0, 128
        %1202 = vxpose.xlu0.b32.cont [6/16] 0.0, 128
        %1203 = vxpose.xlu0.b32.cont [7/16] 0.0, 128
        %1204 = vxpose.xlu0.b32.cont [8/16] 0.0, 128
        %1205 = vxpose.xlu0.b32.cont [9/16] 0.0, 128
        %1206 = vxpose.xlu0.b32.cont [10/16] 0.0, 128
        %1207 = vxpose.xlu0.b32.cont [11/16] 0.0, 128
        %1208 = vxpose.xlu0.b32.cont [12/16] 0.0, 128
        %1209 = vxpose.xlu0.b32.cont [13/16] 0.0, 128
        %1210 = vxpose.xlu0.b32.cont [14/16] 0.0, 128
        %1211 = vxpose.xlu0.b32.cont [15/16] 0.0, 128
        %1212 = vxpose.xlu0.b32.end [16/16] 0.0, 128
        %v1213 = vpop.trf.xlu0
        %v1214 = vpop.trf.xlu0
        %v1215 = vpop.trf.xlu0
        %v1216 = vpop.trf.xlu0
        %v1217 = vpop.trf.xlu0
        %v1218 = vpop.trf.xlu0
        %v1219 = vpop.trf.xlu0
        %v1220 = vpop.trf.xlu0
        %v1221 = vpop.trf.xlu0
        %v1222 = vpop.trf.xlu0
        %v1223 = vpop.trf.xlu0
        %v1224 = vpop.trf.xlu0
        %v1225 = vpop.trf.xlu0
        %v1226 = vpop.trf.xlu0
        %v1227 = vpop.trf.xlu0
        %v1228 = vpop.trf.xlu0
        %vm1229 = vcmask 48128
        %v1231 = vsel %vm1229, %v1213, 0
        %vm1233 = vcmask 1045504
        %v1234 = vsel %vm1233, %v1029, 0
        %1236 = vmatprep.subr.mxu0 0.0
        %1237 = vmatpush1.msra.mxu0 0.0
        %1238 = vmatprep.subr.mxu0 0.0
        %1239 = vmatpush1.msra.mxu0 0.0
        %1240 = vmatprep.subr.mxu0 0.0
        %1241 = vmatpush1.msra.mxu0 0.0
        %1242 = vmatprep.subr.mxu0 0.0
        %1243 = vmatpush1.msra.mxu0 0.0
        %1244 = vmatprep.subr.mxu0 0.0
        %1245 = vmatpush1.msra.mxu0 0.0
        %1246 = vmatprep.subr.mxu0 0.0
        %1247 = vmatpush1.msra.mxu0 0.0
        %1248 = vmatprep.subr.mxu0 0.0
        %1249 = vmatpush1.msra.mxu0 0.0
        %1250 = vmatprep.subr.mxu0 0.0
        %1251 = vmatpush1.msra.mxu0 0.0
        %1252 = vmatprep.subr.mxu0 0.0
        %1253 = vmatpush1.msra.mxu0 0.0
        %1254 = vmatprep.subr.mxu0 0.0
        %1255 = vmatpush1.msra.mxu0 0.0
        %1256 = vmatprep.subr.mxu0 0.0
        %1257 = vmatpush1.msra.mxu0 0.0
        %1258 = vmatprep.subr.mxu0 0.0
        %1259 = vmatpush1.msra.mxu0 0.0
        %1260 = vmatprep.subr.mxu0 0.0
        %1261 = vmatpush1.msra.mxu0 0.0
        %1262 = vmatprep.subr.mxu0 0.0
        %1263 = vmatpush1.msra.mxu0 0.0
        %1264 = vmatprep.subr.mxu0 0.0
        %1265 = vmatpush1.msra.mxu0 0.0
        %1266 = vmatprep.subr.mxu0 0.0
        %1267 = vmatpush1.msra.mxu0 %v1234
        %1268 = vmatprep.subr.mxu0 0.0
        %1269 = vmatpush2.msra.mxu0 0.0
        %1270 = vmatprep.subr.mxu0 0.0
        %1271 = vmatpush2.msra.mxu0 0.0
        %1272 = vmatprep.subr.mxu0 0.0
        %1273 = vmatpush2.msra.mxu0 0.0
        %1274 = vmatprep.subr.mxu0 0.0
        %1275 = vmatpush2.msra.mxu0 0.0
        %1276 = vmatprep.subr.mxu0 0.0
        %1277 = vmatpush2.msra.mxu0 0.0
        %1278 = vmatprep.subr.mxu0 0.0
        %1279 = vmatpush2.msra.mxu0 0.0
        %1280 = vmatprep.subr.mxu0 0.0
        %1281 = vmatpush2.msra.mxu0 0.0
        %1282 = vmatprep.subr.mxu0 0.0
        %1283 = vmatpush2.msra.mxu0 0.0
        %1284 = vmatprep.subr.mxu0 0.0
        %1285 = vmatpush2.msra.mxu0 0.0
        %1286 = vmatprep.subr.mxu0 0.0
        %1287 = vmatpush2.msra.mxu0 0.0
        %1288 = vmatprep.subr.mxu0 0.0
        %1289 = vmatpush2.msra.mxu0 0.0
        %1290 = vmatprep.subr.mxu0 0.0
        %1291 = vmatpush2.msra.mxu0 0.0
        %1292 = vmatprep.subr.mxu0 0.0
        %1293 = vmatpush2.msra.mxu0 0.0
        %1294 = vmatprep.subr.mxu0 0.0
        %1295 = vmatpush2.msra.mxu0 0.0
        %1296 = vmatprep.subr.mxu0 0.0
        %1297 = vmatpush2.msra.mxu0 0.0
        %1298 = vmatprep.subr.mxu0 0.0
        %1299 = vmatpush2.msra.mxu0 0.0
        %1300 = vmatprep.mubr.f32.mxu0 0.0
        %1301 = vmatmul.mubr.f32.gmra.mxu0 %v1231
        %v1302 = vpop.f32.mrf.mxu0
        %v1303 = vadd.f32 0.0, %v1302
        %v1304 = vpop.f32.mrf.mxu0
        %1305 = vdwg.mxu0
        %v1306 = vld [vmem:[%s8] sm:$0xff]
        %v1307 = vld [vmem:[%s8 + $0x8] sm:$0xff]
        %v1308 = vld [vmem:[%s8 + $0x10] sm:$0xff]
        %v1309 = vld [vmem:[%s8 + $0x18] sm:$0xff]
        %v1310 = vld [vmem:[%s8 + $0x20] sm:$0xff]
        %v1311 = vld [vmem:[%s8 + $0x28] sm:$0xff]
        %v1312 = vld [vmem:[%s8 + $0x30] sm:$0xff]
        %v1313 = vld [vmem:[%s8 + $0x38] sm:$0xff]
        %v1314 = vld [vmem:[%s9] sm:$0x1]
        %v1316 = vsel %vm526, %v1303, 0
        %1318 = vmatprep.subr.mxu0 0.0
        %1319 = vmatpush1.msra.mxu0 0.0
        %1320 = vmatprep.subr.mxu0 0.0
        %1321 = vmatpush1.msra.mxu0 0.0
        %1322 = vmatprep.subr.mxu0 0.0
        %1323 = vmatpush1.msra.mxu0 0.0
        %1324 = vmatprep.subr.mxu0 0.0
        %1325 = vmatpush1.msra.mxu0 0.0
        %1326 = vmatprep.subr.mxu0 0.0
        %1327 = vmatpush1.msra.mxu0 0.0
        %1328 = vmatprep.subr.mxu0 0.0
        %1329 = vmatpush1.msra.mxu0 0.0
        %1330 = vmatprep.subr.mxu0 0.0
        %1331 = vmatpush1.msra.mxu0 0.0
        %1332 = vmatprep.subr.mxu0 0.0
        %1333 = vmatpush1.msra.mxu0 0.0
        %1334 = vmatprep.subr.mxu0 0.0
        %1335 = vmatpush1.msra.mxu0 0.0
        %1336 = vmatprep.subr.mxu0 0.0
        %1337 = vmatpush1.msra.mxu0 0.0
        %1338 = vmatprep.subr.mxu0 0.0
        %1339 = vmatpush1.msra.mxu0 0.0
        %1340 = vmatprep.subr.mxu0 0.0
        %1341 = vmatpush1.msra.mxu0 0.0
        %1342 = vmatprep.subr.mxu0 0.0
        %1343 = vmatpush1.msra.mxu0 %v1309
        %1344 = vmatprep.subr.mxu0 0.0
        %1345 = vmatpush1.msra.mxu0 %v1308
        %1346 = vmatprep.subr.mxu0 0.0
        %1347 = vmatpush1.msra.mxu0 %v1307
        %1348 = vmatprep.subr.mxu0 0.0
        %1349 = vmatpush1.msra.mxu0 %v1306
        %1350 = vmatprep.subr.mxu0 0.0
        %1351 = vmatpush2.msra.mxu0 0.0
        %1352 = vmatprep.subr.mxu0 0.0
        %1353 = vmatpush2.msra.mxu0 0.0
        %1354 = vmatprep.subr.mxu0 0.0
        %1355 = vmatpush2.msra.mxu0 0.0
        %1356 = vmatprep.subr.mxu0 0.0
        %1357 = vmatpush2.msra.mxu0 0.0
        %1358 = vmatprep.subr.mxu0 0.0
        %1359 = vmatpush2.msra.mxu0 0.0
        %1360 = vmatprep.subr.mxu0 0.0
        %1361 = vmatpush2.msra.mxu0 0.0
        %1362 = vmatprep.subr.mxu0 0.0
        %1363 = vmatpush2.msra.mxu0 0.0
        %1364 = vmatprep.subr.mxu0 0.0
        %1365 = vmatpush2.msra.mxu0 0.0
        %1366 = vmatprep.subr.mxu0 0.0
        %1367 = vmatpush2.msra.mxu0 0.0
        %1368 = vmatprep.subr.mxu0 0.0
        %1369 = vmatpush2.msra.mxu0 0.0
        %1370 = vmatprep.subr.mxu0 0.0
        %1371 = vmatpush2.msra.mxu0 0.0
        %1372 = vmatprep.subr.mxu0 0.0
        %1373 = vmatpush2.msra.mxu0 0.0
        %1374 = vmatprep.subr.mxu0 0.0
        %1375 = vmatpush2.msra.mxu0 0.0
        %1376 = vmatprep.subr.mxu0 0.0
        %1377 = vmatpush2.msra.mxu0 0.0
        %1378 = vmatprep.subr.mxu0 0.0
        %1379 = vmatpush2.msra.mxu0 0.0
        %1380 = vmatprep.subr.mxu0 0.0
        %1381 = vmatpush2.msra.mxu0 0.0
        %1382 = vmatprep.mubr.f32.mxu0 0.0
        %1383 = vmatmul.mubr.f32.gmra.mxu0 %v1316
        %v1384 = vpop.f32.mrf.mxu0
        %v1385 = vadd.f32 0.0, %v1384
        %v1386 = vpop.f32.mrf.mxu0
        %1387 = vdwg.mxu0
        %v1388 = vadd.f32 %v1314, %v1385
        %v1389 = vrot.slane %v1303, 1
        %v1390 = vsel %vm526, %v1389, 0
        %1392 = vmatprep.subr.mxu0 0.0
        %1393 = vmatpush1.msra.mxu0 0.0
        %1394 = vmatprep.subr.mxu0 0.0
        %1395 = vmatpush1.msra.mxu0 0.0
        %1396 = vmatprep.subr.mxu0 0.0
        %1397 = vmatpush1.msra.mxu0 0.0
        %1398 = vmatprep.subr.mxu0 0.0
        %1399 = vmatpush1.msra.mxu0 0.0
        %1400 = vmatprep.subr.mxu0 0.0
        %1401 = vmatpush1.msra.mxu0 0.0
        %1402 = vmatprep.subr.mxu0 0.0
        %1403 = vmatpush1.msra.mxu0 0.0
        %1404 = vmatprep.subr.mxu0 0.0
        %1405 = vmatpush1.msra.mxu0 0.0
        %1406 = vmatprep.subr.mxu0 0.0
        %1407 = vmatpush1.msra.mxu0 0.0
        %1408 = vmatprep.subr.mxu0 0.0
        %1409 = vmatpush1.msra.mxu0 0.0
        %1410 = vmatprep.subr.mxu0 0.0
        %1411 = vmatpush1.msra.mxu0 0.0
        %1412 = vmatprep.subr.mxu0 0.0
        %1413 = vmatpush1.msra.mxu0 0.0
        %1414 = vmatprep.subr.mxu0 0.0
        %1415 = vmatpush1.msra.mxu0 0.0
        %1416 = vmatprep.subr.mxu0 0.0
        %1417 = vmatpush1.msra.mxu0 %v1313
        %1418 = vmatprep.subr.mxu0 0.0
        %1419 = vmatpush1.msra.mxu0 %v1312
        %1420 = vmatprep.subr.mxu0 0.0
        %1421 = vmatpush1.msra.mxu0 %v1311
        %1422 = vmatprep.subr.mxu0 0.0
        %1423 = vmatpush1.msra.mxu0 %v1310
        %1424 = vmatprep.subr.mxu0 0.0
        %1425 = vmatpush2.msra.mxu0 0.0
        %1426 = vmatprep.subr.mxu0 0.0
        %1427 = vmatpush2.msra.mxu0 0.0
        %1428 = vmatprep.subr.mxu0 0.0
        %1429 = vmatpush2.msra.mxu0 0.0
        %1430 = vmatprep.subr.mxu0 0.0
        %1431 = vmatpush2.msra.mxu0 0.0
        %1432 = vmatprep.subr.mxu0 0.0
        %1433 = vmatpush2.msra.mxu0 0.0
        %1434 = vmatprep.subr.mxu0 0.0
        %1435 = vmatpush2.msra.mxu0 0.0
        %1436 = vmatprep.subr.mxu0 0.0
        %1437 = vmatpush2.msra.mxu0 0.0
        %1438 = vmatprep.subr.mxu0 0.0
        %1439 = vmatpush2.msra.mxu0 0.0
        %1440 = vmatprep.subr.mxu0 0.0
        %1441 = vmatpush2.msra.mxu0 0.0
        %1442 = vmatprep.subr.mxu0 0.0
        %1443 = vmatpush2.msra.mxu0 0.0
        %1444 = vmatprep.subr.mxu0 0.0
        %1445 = vmatpush2.msra.mxu0 0.0
        %1446 = vmatprep.subr.mxu0 0.0
        %1447 = vmatpush2.msra.mxu0 0.0
        %1448 = vmatprep.subr.mxu0 0.0
        %1449 = vmatpush2.msra.mxu0 0.0
        %1450 = vmatprep.subr.mxu0 0.0
        %1451 = vmatpush2.msra.mxu0 0.0
        %1452 = vmatprep.subr.mxu0 0.0
        %1453 = vmatpush2.msra.mxu0 0.0
        %1454 = vmatprep.subr.mxu0 0.0
        %1455 = vmatpush2.msra.mxu0 0.0
        %1456 = vmatprep.mubr.f32.mxu0 0.0
        %1457 = vmatmul.mubr.f32.gmra.mxu0 %v1390
        %v1458 = vpop.f32.mrf.mxu0
        %v1459 = vadd.f32 0.0, %v1458
        %v1460 = vpop.f32.mrf.mxu0
        %1461 = vdwg.mxu0
        %v1462 = vadd.f32 %v1388, %v1459
        %v1463 = vmul.f32 %v957, %v1462
        %v1464 = vld [vmem:[%s10] sm:$0xff]
        %v1465 = vld [vmem:[%s10 + $0x8] sm:$0xff]
        %v1466 = vld [vmem:[%s10 + $0x10] sm:$0xff]
        %v1467 = vld [vmem:[%s10 + $0x18] sm:$0xff]
        %v1468 = vld [vmem:[%s11] sm:$0x1]
        %v1470 = vsel %vm526, %v1463, 0
        %1472 = vmatprep.subr.mxu0 0.0
        %1473 = vmatpush1.msra.mxu0 0.0
        %1474 = vmatprep.subr.mxu0 0.0
        %1475 = vmatpush1.msra.mxu0 0.0
        %1476 = vmatprep.subr.mxu0 0.0
        %1477 = vmatpush1.msra.mxu0 0.0
        %1478 = vmatprep.subr.mxu0 0.0
        %1479 = vmatpush1.msra.mxu0 0.0
        %1480 = vmatprep.subr.mxu0 0.0
        %1481 = vmatpush1.msra.mxu0 0.0
        %1482 = vmatprep.subr.mxu0 0.0
        %1483 = vmatpush1.msra.mxu0 0.0
        %1484 = vmatprep.subr.mxu0 0.0
        %1485 = vmatpush1.msra.mxu0 0.0
        %1486 = vmatprep.subr.mxu0 0.0
        %1487 = vmatpush1.msra.mxu0 0.0
        %1488 = vmatprep.subr.mxu0 0.0
        %1489 = vmatpush1.msra.mxu0 0.0
        %1490 = vmatprep.subr.mxu0 0.0
        %1491 = vmatpush1.msra.mxu0 0.0
        %1492 = vmatprep.subr.mxu0 0.0
        %1493 = vmatpush1.msra.mxu0 0.0
        %1494 = vmatprep.subr.mxu0 0.0
        %1495 = vmatpush1.msra.mxu0 0.0
        %1496 = vmatprep.subr.mxu0 0.0
        %1497 = vmatpush1.msra.mxu0 %v1467
        %1498 = vmatprep.subr.mxu0 0.0
        %1499 = vmatpush1.msra.mxu0 %v1466
        %1500 = vmatprep.subr.mxu0 0.0
        %1501 = vmatpush1.msra.mxu0 %v1465
        %1502 = vmatprep.subr.mxu0 0.0
        %1503 = vmatpush1.msra.mxu0 %v1464
        %1504 = vmatprep.subr.mxu0 0.0
        %1505 = vmatpush2.msra.mxu0 0.0
        %1506 = vmatprep.subr.mxu0 0.0
        %1507 = vmatpush2.msra.mxu0 0.0
        %1508 = vmatprep.subr.mxu0 0.0
        %1509 = vmatpush2.msra.mxu0 0.0
        %1510 = vmatprep.subr.mxu0 0.0
        %1511 = vmatpush2.msra.mxu0 0.0
        %1512 = vmatprep.subr.mxu0 0.0
        %1513 = vmatpush2.msra.mxu0 0.0
        %1514 = vmatprep.subr.mxu0 0.0
        %1515 = vmatpush2.msra.mxu0 0.0
        %1516 = vmatprep.subr.mxu0 0.0
        %1517 = vmatpush2.msra.mxu0 0.0
        %1518 = vmatprep.subr.mxu0 0.0
        %1519 = vmatpush2.msra.mxu0 0.0
        %1520 = vmatprep.subr.mxu0 0.0
        %1521 = vmatpush2.msra.mxu0 0.0
        %1522 = vmatprep.subr.mxu0 0.0
        %1523 = vmatpush2.msra.mxu0 0.0
        %1524 = vmatprep.subr.mxu0 0.0
        %1525 = vmatpush2.msra.mxu0 0.0
        %1526 = vmatprep.subr.mxu0 0.0
        %1527 = vmatpush2.msra.mxu0 0.0
        %1528 = vmatprep.subr.mxu0 0.0
        %1529 = vmatpush2.msra.mxu0 0.0
        %1530 = vmatprep.subr.mxu0 0.0
        %1531 = vmatpush2.msra.mxu0 0.0
        %1532 = vmatprep.subr.mxu0 0.0
        %1533 = vmatpush2.msra.mxu0 0.0
        %1534 = vmatprep.subr.mxu0 0.0
        %1535 = vmatpush2.msra.mxu0 0.0
        %1536 = vmatprep.mubr.f32.mxu0 0.0
        %1537 = vmatmul.mubr.f32.gmra.mxu0 %v1470
        %v1538 = vpop.f32.mrf.mxu0
        %v1539 = vadd.f32 %v1468, %v1538
        %v1540 = vpop.f32.mrf.mxu0
        %1541 = vdwg.mxu0
        %vm1542 = vcmask 16384
        %1543 = vst.msk [vmem:[%s416] sm:$0x1] %vm1542, %v1539
        %s1544 = sand.u32 %s296, 1
        %s1545 = scalar_lea.sflag [#allocation3], %s1544
        %s1546 = sand.u32 %s296, 1
        %s1547 = scalar_lea.vmem [#allocation2], %s1546
        // Predicated region
        $region69: #{_lambda_.5} parent=67 // pred_check
          %p1548 = pneg %p306
        $region70: #{_lambda_.5} parent=67 // pred_check_branch
          %1550 = sbr.rel (%p1548) target = $region72
        $region71: #{_lambda_.5} parent=67 // pred_region
          %s1552 = ssub.s32 16, 16
          %1553 = vsyncadd %s1545, %s1552
          %s1554 = smul.addr %s26, 16
          %s1555 = scalar_lea.hbm %s12, %s1554
          %s1557 = sshll.u32 %s1547, 4
          %s1558 = int_to_ptr.vmem [resolvable:$true] %s1557
          %1560 = dma.vmem_to_hbm [thread:$0]  %s1558, 16, %s1555, %s1545
        $region72: #{_lambda_.5} parent=67 // pred_fallthru
          _
      $region68: #{_lambda_.5} parent=5 // pred_fallthru
        _
      %p1561 = scmp.le.s32.totalorder 2, %s21
      // Predicated region
      $region73: #{_lambda_.5} parent=5 // pred_check
        %p1562 = pneg %p1561
      $region74: #{_lambda_.5} parent=5 // pred_check_branch
        %1564 = sbr.rel (%p1562) target = $region76
      $region75: #{_lambda_.5} parent=5 // pred_region
        %s1565 = ssub.s32 %s21, 2
        // Predicated region
        $region77: #{_lambda_.5} parent=75 // pred_check
          %p1566 = pneg %p312
        $region78: #{_lambda_.5} parent=75 // pred_check_branch
          %1568 = sbr.rel (%p1566) target = $region80
        $region79: #{_lambda_.5} parent=75 // pred_region
          %s1569 = sand.u32 %s297, 1
          %s1570 = scalar_lea.sflag [#allocation3], %s1569
          %s1571 = sand.u32 %s297, 1
          %s1572 = scalar_lea.vmem [#allocation2], %s1571
          %1573 = dma.done %s1570, 16
        $region80: #{_lambda_.5} parent=75 // pred_fallthru
          _
      $region76: #{_lambda_.5} parent=5 // pred_fallthru
        _
    $region6: #{_lambda_.5} parent=1 // loop_footer
      %s25 = sadd.s32 1, %s21
    $region7: #{_lambda_.5} parent=1 // loop_footer_branch
      %20 = sbr.rel target = $region3
    $region8: #{_lambda_.5} parent=1 // loop_exit
      _
    %1574 = vsyncpa [#allocation3], 1
    %s1575 = scalar_lea.sflag [#allocation3], 1
    %1576 = vsyncpa %s1575, 1

// kernel: _lambda_.4
$region0: #{_lambda_.4}
  #allocation0 [shape = 'u32[]', space=smem, size = 0x4, offset = 0x4, fixed_abs, tag = 'smem constant byte address 0x4 - core index']
  #allocation1 [shape = 'u32[144,128]{1,0:T(1,128)}', space=vmem, size = 0x12000, scoped, tag = 'internal scratch']
  #allocation2 [shape = 'f32[12,128]{1,0:T(8,128)}', space=vmem, size = 0x2000, scoped, tag = 'scratch operand']
  #allocation3 [shape = 'f32[12,64]{1,0:T(8,128)}', space=vmem, size = 0x2000, scoped, tag = 'scratch operand']
  #allocation4 [shape = 'f32[12,64]{1,0:T(8,128)}', space=vmem, size = 0x2000, scoped, tag = 'scratch operand']
  %s0 = inlined_call_operand.vmem [shape: f32[12,300], index: 0, kind: input, shape index: {}]
  %s1 = inlined_call_operand.vmem [shape: f32[300,128], index: 1, kind: input, shape index: {}]
  %s2 = inlined_call_operand.vmem [shape: f32[64,64], index: 2, kind: input, shape index: {}, may-alias: {2,3}]
  %s3 = inlined_call_operand.vmem [shape: f32[64,64], index: 3, kind: input, shape index: {}, may-alias: {2,3}]
  %s4 = inlined_call_operand.vmem [shape: f32[1,128], index: 4, kind: input, shape index: {}]
  %s5 = inlined_call_operand.vmem [shape: f32[12,128], index: 5, kind: output, shape index: {}]
  %s6 = sld [smem:[#allocation0]]
  $region30: #{_lambda_.4} parent=0
    _
  %s8 = ssub.s32 1, %s6
  %s9 = scalar_select 0, %s8, %s6
  // Predicated region
  $region2: #{_lambda_.4} parent=0 // pred_check
    _
  $region3: #{_lambda_.4} parent=0 // pred_check_branch
    %11 = sbr.rel (0) target = $region5
  $region4: #{_lambda_.4} parent=0 // pred_region
    _
  $region5: #{_lambda_.4} parent=0 // pred_fallthru
    _
  // Predicated region
  $region6: #{_lambda_.4} parent=0 // pred_check
    _
  $region7: #{_lambda_.4} parent=0 // pred_check_branch
    %13 = sbr.rel (0) target = $region9
  $region8: #{_lambda_.4} parent=0 // pred_region
    _
  $region9: #{_lambda_.4} parent=0 // pred_fallthru
    _
  // Predicated region
  $region10: #{_lambda_.4} parent=0 // pred_check
    _
  $region11: #{_lambda_.4} parent=0 // pred_check_branch
    %15 = sbr.rel (0) target = $region13
  $region12: #{_lambda_.4} parent=0 // pred_region
    _
  $region13: #{_lambda_.4} parent=0 // pred_fallthru
    _
  // Predicated region
  $region14: #{_lambda_.4} parent=0 // pred_check
    _
  $region15: #{_lambda_.4} parent=0 // pred_check_branch
    %17 = sbr.rel (0) target = $region17
  $region16: #{_lambda_.4} parent=0 // pred_region
    _
  $region17: #{_lambda_.4} parent=0 // pred_fallthru
    _
  // Predicated region
  $region18: #{_lambda_.4} parent=0 // pred_check
    _
  $region19: #{_lambda_.4} parent=0 // pred_check_branch
    %19 = sbr.rel (0) target = $region21
  $region20: #{_lambda_.4} parent=0 // pred_region
    _
  $region21: #{_lambda_.4} parent=0 // pred_fallthru
    _
  %v20 = vld [vmem:[%s0] sm:$0xff]
  %v21 = vld [vmem:[%s0 + $0x8] sm:$0xff]
  %v22 = vld [vmem:[%s0 + $0x10] sm:$0xff]
  %v23 = vld [vmem:[%s0 + $0x18] sm:$0xf]
  %v24 = vld [vmem:[%s0 + $0x20] sm:$0xf]
  %v25 = vld [vmem:[%s0 + $0x28] sm:$0xf]
  %v26 = vld [vmem:[%s1] sm:$0xff]
  %v27 = vld [vmem:[%s1 + $0x8] sm:$0xff]
  %v28 = vld [vmem:[%s1 + $0x10] sm:$0xff]
  %v29 = vld [vmem:[%s1 + $0x18] sm:$0xff]
  %v30 = vld [vmem:[%s1 + $0x20] sm:$0xff]
  %v31 = vld [vmem:[%s1 + $0x28] sm:$0xff]
  %v32 = vld [vmem:[%s1 + $0x30] sm:$0xff]
  %v33 = vld [vmem:[%s1 + $0x38] sm:$0xff]
  %v34 = vld [vmem:[%s1 + $0x40] sm:$0xff]
  %v35 = vld [vmem:[%s1 + $0x48] sm:$0xff]
  %v36 = vld [vmem:[%s1 + $0x50] sm:$0xff]
  %v37 = vld [vmem:[%s1 + $0x58] sm:$0xff]
  %v38 = vld [vmem:[%s1 + $0x60] sm:$0xff]
  %v39 = vld [vmem:[%s1 + $0x68] sm:$0xff]
  %v40 = vld [vmem:[%s1 + $0x70] sm:$0xff]
  %v41 = vld [vmem:[%s1 + $0x78] sm:$0xff]
  %v42 = vld [vmem:[%s1 + $0x80] sm:$0xff]
  %v43 = vld [vmem:[%s1 + $0x88] sm:$0xff]
  %v44 = vld [vmem:[%s1 + $0x90] sm:$0xff]
  %v45 = vld [vmem:[%s1 + $0x98] sm:$0xff]
  %v46 = vld [vmem:[%s1 + $0xa0] sm:$0xff]
  %v47 = vld [vmem:[%s1 + $0xa8] sm:$0xff]
  %v48 = vld [vmem:[%s1 + $0xb0] sm:$0xff]
  %v49 = vld [vmem:[%s1 + $0xb8] sm:$0xff]
  %v50 = vld [vmem:[%s1 + $0xc0] sm:$0xff]
  %v51 = vld [vmem:[%s1 + $0xc8] sm:$0xff]
  %v52 = vld [vmem:[%s1 + $0xd0] sm:$0xff]
  %v53 = vld [vmem:[%s1 + $0xd8] sm:$0xff]
  %v54 = vld [vmem:[%s1 + $0xe0] sm:$0xff]
  %v55 = vld [vmem:[%s1 + $0xe8] sm:$0xff]
  %v56 = vld [vmem:[%s1 + $0xf0] sm:$0xff]
  %v57 = vld [vmem:[%s1 + $0xf8] sm:$0xff]
  %v58 = vld [vmem:[%s1 + $0x100] sm:$0xff]
  %v59 = vld [vmem:[%s1 + $0x108] sm:$0xff]
  %v60 = vld [vmem:[%s1 + $0x110] sm:$0xff]
  %v61 = vld [vmem:[%s1 + $0x118] sm:$0xff]
  %v62 = vld [vmem:[%s1 + $0x120] sm:$0xff]
  %v63 = vld [vmem:[%s1 + $0x128] sm:$0xf]
  %v64 = vld [vmem:[%s4] sm:$0x1]
  %v66 = vlaneseq
  %v67 = vshrl.u32 %v66, 7
  %v68 = vsub.s32 0, %v67
  %v69 = vrot.slane %v64, %v68
  %vm71 = vcmask 359424
  %v73 = vsel %vm71, %v22, 0
  %v76 = vsel %vm71, %v25, 0
  %vm78 = vcmask 1043456
  %v80 = vsel %vm78, %v63, 0
  %82 = vmatprep.subr.mxu0 0.0
  %83 = vmatpush1.msra.mxu0 %v41
  %84 = vmatprep.subr.mxu0 0.0
  %85 = vmatpush1.msra.mxu0 %v40
  %86 = vmatprep.subr.mxu0 0.0
  %87 = vmatpush1.msra.mxu0 %v39
  %88 = vmatprep.subr.mxu0 0.0
  %89 = vmatpush1.msra.mxu0 %v38
  %90 = vmatprep.subr.mxu0 0.0
  %91 = vmatpush1.msra.mxu0 %v37
  %92 = vmatprep.subr.mxu0 0.0
  %93 = vmatpush1.msra.mxu0 %v36
  %94 = vmatprep.subr.mxu0 0.0
  %95 = vmatpush1.msra.mxu0 %v35
  %96 = vmatprep.subr.mxu0 0.0
  %97 = vmatpush1.msra.mxu0 %v34
  %98 = vmatprep.subr.mxu0 0.0
  %99 = vmatpush1.msra.mxu0 %v33
  %100 = vmatprep.subr.mxu0 0.0
  %101 = vmatpush1.msra.mxu0 %v32
  %102 = vmatprep.subr.mxu0 0.0
  %103 = vmatpush1.msra.mxu0 %v31
  %104 = vmatprep.subr.mxu0 0.0
  %105 = vmatpush1.msra.mxu0 %v30
  %106 = vmatprep.subr.mxu0 0.0
  %107 = vmatpush1.msra.mxu0 %v29
  %108 = vmatprep.subr.mxu0 0.0
  %109 = vmatpush1.msra.mxu0 %v28
  %110 = vmatprep.subr.mxu0 0.0
  %111 = vmatpush1.msra.mxu0 %v27
  %112 = vmatprep.subr.mxu0 0.0
  %113 = vmatpush1.msra.mxu0 %v26
  %114 = vmatprep.subr.mxu0 0.0
  %115 = vmatpush2.msra.mxu0 %v57
  %116 = vmatprep.subr.mxu0 0.0
  %117 = vmatpush2.msra.mxu0 %v56
  %118 = vmatprep.subr.mxu0 0.0
  %119 = vmatpush2.msra.mxu0 %v55
  %120 = vmatprep.subr.mxu0 0.0
  %121 = vmatpush2.msra.mxu0 %v54
  %122 = vmatprep.subr.mxu0 0.0
  %123 = vmatpush2.msra.mxu0 %v53
  %124 = vmatprep.subr.mxu0 0.0
  %125 = vmatpush2.msra.mxu0 %v52
  %126 = vmatprep.subr.mxu0 0.0
  %127 = vmatpush2.msra.mxu0 %v51
  %128 = vmatprep.subr.mxu0 0.0
  %129 = vmatpush2.msra.mxu0 %v50
  %130 = vmatprep.subr.mxu0 0.0
  %131 = vmatpush2.msra.mxu0 %v49
  %132 = vmatprep.subr.mxu0 0.0
  %133 = vmatpush2.msra.mxu0 %v48
  %134 = vmatprep.subr.mxu0 0.0
  %135 = vmatpush2.msra.mxu0 %v47
  %136 = vmatprep.subr.mxu0 0.0
  %137 = vmatpush2.msra.mxu0 %v46
  %138 = vmatprep.subr.mxu0 0.0
  %139 = vmatpush2.msra.mxu0 %v45
  %140 = vmatprep.subr.mxu0 0.0
  %141 = vmatpush2.msra.mxu0 %v44
  %142 = vmatprep.subr.mxu0 0.0
  %143 = vmatpush2.msra.mxu0 %v43
  %144 = vmatprep.subr.mxu0 0.0
  %145 = vmatpush2.msra.mxu0 %v42
  %146 = vmatprep.mubr.f32.mxu0 %v21
  %147 = vmatmul.mubr.f32.gmra.mxu0 %v20
  %v148 = vpop.f32.mrf.mxu0
  %v149 = vadd.f32 %v69, %v148
  %v150 = vpop.f32.mrf.mxu0
  %151 = vmatprep.mubr.f32.mxu0 %v24
  %152 = vmatmul.mubr.f32.gmra.mxu0 %v23
  %v153 = vpop.f32.mrf.mxu0
  %v154 = vadd.f32 %v69, %v153
  %v155 = vpop.f32.mrf.mxu0
  %156 = vdwg.mxu0
  %157 = vmatprep.subr.mxu0 0.0
  %158 = vmatpush1.msra.mxu0 0.0
  %159 = vmatprep.subr.mxu0 0.0
  %160 = vmatpush1.msra.mxu0 0.0
  %161 = vmatprep.subr.mxu0 0.0
  %162 = vmatpush1.msra.mxu0 0.0
  %163 = vmatprep.subr.mxu0 0.0
  %164 = vmatpush1.msra.mxu0 0.0
  %165 = vmatprep.subr.mxu0 0.0
  %166 = vmatpush1.msra.mxu0 0.0
  %167 = vmatprep.subr.mxu0 0.0
  %168 = vmatpush1.msra.mxu0 0.0
  %169 = vmatprep.subr.mxu0 0.0
  %170 = vmatpush1.msra.mxu0 0.0
  %171 = vmatprep.subr.mxu0 0.0
  %172 = vmatpush1.msra.mxu0 0.0
  %173 = vmatprep.subr.mxu0 0.0
  %174 = vmatpush1.msra.mxu0 0.0
  %175 = vmatprep.subr.mxu0 0.0
  %176 = vmatpush1.msra.mxu0 0.0
  %177 = vmatprep.subr.mxu0 0.0
  %178 = vmatpush1.msra.mxu0 %v80
  %179 = vmatprep.subr.mxu0 0.0
  %180 = vmatpush1.msra.mxu0 %v62
  %181 = vmatprep.subr.mxu0 0.0
  %182 = vmatpush1.msra.mxu0 %v61
  %183 = vmatprep.subr.mxu0 0.0
  %184 = vmatpush1.msra.mxu0 %v60
  %185 = vmatprep.subr.mxu0 0.0
  %186 = vmatpush1.msra.mxu0 %v59
  %187 = vmatprep.subr.mxu0 0.0
  %188 = vmatpush1.msra.mxu0 %v58
  %189 = vmatprep.subr.mxu0 0.0
  %190 = vmatpush2.msra.mxu0 0.0
  %191 = vmatprep.subr.mxu0 0.0
  %192 = vmatpush2.msra.mxu0 0.0
  %193 = vmatprep.subr.mxu0 0.0
  %194 = vmatpush2.msra.mxu0 0.0
  %195 = vmatprep.subr.mxu0 0.0
  %196 = vmatpush2.msra.mxu0 0.0
  %197 = vmatprep.subr.mxu0 0.0
  %198 = vmatpush2.msra.mxu0 0.0
  %199 = vmatprep.subr.mxu0 0.0
  %200 = vmatpush2.msra.mxu0 0.0
  %201 = vmatprep.subr.mxu0 0.0
  %202 = vmatpush2.msra.mxu0 0.0
  %203 = vmatprep.subr.mxu0 0.0
  %204 = vmatpush2.msra.mxu0 0.0
  %205 = vmatprep.subr.mxu0 0.0
  %206 = vmatpush2.msra.mxu0 0.0
  %207 = vmatprep.subr.mxu0 0.0
  %208 = vmatpush2.msra.mxu0 0.0
  %209 = vmatprep.subr.mxu0 0.0
  %210 = vmatpush2.msra.mxu0 0.0
  %211 = vmatprep.subr.mxu0 0.0
  %212 = vmatpush2.msra.mxu0 0.0
  %213 = vmatprep.subr.mxu0 0.0
  %214 = vmatpush2.msra.mxu0 0.0
  %215 = vmatprep.subr.mxu0 0.0
  %216 = vmatpush2.msra.mxu0 0.0
  %217 = vmatprep.subr.mxu0 0.0
  %218 = vmatpush2.msra.mxu0 0.0
  %219 = vmatprep.subr.mxu0 0.0
  %220 = vmatpush2.msra.mxu0 0.0
  %221 = vmatprep.mubr.f32.mxu0 0.0
  %222 = vmatmul.mubr.f32.gmra.mxu0 %v73
  %v223 = vpop.f32.mrf.mxu0
  %v224 = vadd.f32 %v149, %v223
  %v225 = vpop.f32.mrf.mxu0
  %226 = vmatprep.mubr.f32.mxu0 0.0
  %227 = vmatmul.mubr.f32.gmra.mxu0 %v76
  %v228 = vpop.f32.mrf.mxu0
  %v229 = vadd.f32 %v154, %v228
  %v230 = vpop.f32.mrf.mxu0
  %231 = vdwg.mxu0
  %232 = vst [vmem:[#allocation2] sm:$0xff] %v224
  %233 = vst [vmem:[#allocation2 + $0x8] sm:$0xf] %v229
  %v234 = vld [vmem:[%s2] sm:$0xff]
  %v235 = vld [vmem:[%s2 + $0x8] sm:$0xff]
  %v236 = vld [vmem:[%s2 + $0x10] sm:$0xff]
  %v237 = vld [vmem:[%s2 + $0x18] sm:$0xff]
  %v238 = vld [vmem:[%s2 + $0x20] sm:$0xff]
  %v239 = vld [vmem:[%s2 + $0x28] sm:$0xff]
  %v240 = vld [vmem:[%s2 + $0x30] sm:$0xff]
  %v241 = vld [vmem:[%s2 + $0x38] sm:$0xff]
  %vm242 = vcmask 523264
  %v244 = vsel %vm242, 0.0, 0
  %246 = vmatprep.subr.mxu0 0.0
  %247 = vmatpush1.msra.mxu0 0.0
  %248 = vmatprep.subr.mxu0 0.0
  %249 = vmatpush1.msra.mxu0 0.0
  %250 = vmatprep.subr.mxu0 0.0
  %251 = vmatpush1.msra.mxu0 0.0
  %252 = vmatprep.subr.mxu0 0.0
  %253 = vmatpush1.msra.mxu0 0.0
  %254 = vmatprep.subr.mxu0 0.0
  %255 = vmatpush1.msra.mxu0 0.0
  %256 = vmatprep.subr.mxu0 0.0
  %257 = vmatpush1.msra.mxu0 0.0
  %258 = vmatprep.subr.mxu0 0.0
  %259 = vmatpush1.msra.mxu0 0.0
  %260 = vmatprep.subr.mxu0 0.0
  %261 = vmatpush1.msra.mxu0 0.0
  %262 = vmatprep.subr.mxu0 0.0
  %263 = vmatpush1.msra.mxu0 %v241
  %264 = vmatprep.subr.mxu0 0.0
  %265 = vmatpush1.msra.mxu0 %v240
  %266 = vmatprep.subr.mxu0 0.0
  %267 = vmatpush1.msra.mxu0 %v239
  %268 = vmatprep.subr.mxu0 0.0
  %269 = vmatpush1.msra.mxu0 %v238
  %270 = vmatprep.subr.mxu0 0.0
  %271 = vmatpush1.msra.mxu0 %v237
  %272 = vmatprep.subr.mxu0 0.0
  %273 = vmatpush1.msra.mxu0 %v236
  %274 = vmatprep.subr.mxu0 0.0
  %275 = vmatpush1.msra.mxu0 %v235
  %276 = vmatprep.subr.mxu0 0.0
  %277 = vmatpush1.msra.mxu0 %v234
  %278 = vmatprep.subr.mxu0 0.0
  %279 = vmatpush2.msra.mxu0 0.0
  %280 = vmatprep.subr.mxu0 0.0
  %281 = vmatpush2.msra.mxu0 0.0
  %282 = vmatprep.subr.mxu0 0.0
  %283 = vmatpush2.msra.mxu0 0.0
  %284 = vmatprep.subr.mxu0 0.0
  %285 = vmatpush2.msra.mxu0 0.0
  %286 = vmatprep.subr.mxu0 0.0
  %287 = vmatpush2.msra.mxu0 0.0
  %288 = vmatprep.subr.mxu0 0.0
  %289 = vmatpush2.msra.mxu0 0.0
  %290 = vmatprep.subr.mxu0 0.0
  %291 = vmatpush2.msra.mxu0 0.0
  %292 = vmatprep.subr.mxu0 0.0
  %293 = vmatpush2.msra.mxu0 0.0
  %294 = vmatprep.subr.mxu0 0.0
  %295 = vmatpush2.msra.mxu0 0.0
  %296 = vmatprep.subr.mxu0 0.0
  %297 = vmatpush2.msra.mxu0 0.0
  %298 = vmatprep.subr.mxu0 0.0
  %299 = vmatpush2.msra.mxu0 0.0
  %300 = vmatprep.subr.mxu0 0.0
  %301 = vmatpush2.msra.mxu0 0.0
  %302 = vmatprep.subr.mxu0 0.0
  %303 = vmatpush2.msra.mxu0 0.0
  %304 = vmatprep.subr.mxu0 0.0
  %305 = vmatpush2.msra.mxu0 0.0
  %306 = vmatprep.subr.mxu0 0.0
  %307 = vmatpush2.msra.mxu0 0.0
  %308 = vmatprep.subr.mxu0 0.0
  %309 = vmatpush2.msra.mxu0 0.0
  %310 = vmatprep.mubr.f32.mxu0 0.0
  %311 = vmatmul.mubr.f32.gmra.mxu0 %v244
  %v312 = vpop.f32.mrf.mxu0
  %v313 = vadd.f32 0.0, %v312
  %v314 = vpop.f32.mrf.mxu0
  %315 = vdwg.mxu0
  %v316 = vld [vmem:[%s3] sm:$0xff]
  %v317 = vld [vmem:[%s3 + $0x8] sm:$0xff]
  %v318 = vld [vmem:[%s3 + $0x10] sm:$0xff]
  %v319 = vld [vmem:[%s3 + $0x18] sm:$0xff]
  %v320 = vld [vmem:[%s3 + $0x20] sm:$0xff]
  %v321 = vld [vmem:[%s3 + $0x28] sm:$0xff]
  %v322 = vld [vmem:[%s3 + $0x30] sm:$0xff]
  %v323 = vld [vmem:[%s3 + $0x38] sm:$0xff]
  %324 = vmatprep.subr.mxu0 0.0
  %325 = vmatpush1.msra.mxu0 0.0
  %326 = vmatprep.subr.mxu0 0.0
  %327 = vmatpush1.msra.mxu0 0.0
  %328 = vmatprep.subr.mxu0 0.0
  %329 = vmatpush1.msra.mxu0 0.0
  %330 = vmatprep.subr.mxu0 0.0
  %331 = vmatpush1.msra.mxu0 0.0
  %332 = vmatprep.subr.mxu0 0.0
  %333 = vmatpush1.msra.mxu0 0.0
  %334 = vmatprep.subr.mxu0 0.0
  %335 = vmatpush1.msra.mxu0 0.0
  %336 = vmatprep.subr.mxu0 0.0
  %337 = vmatpush1.msra.mxu0 0.0
  %338 = vmatprep.subr.mxu0 0.0
  %339 = vmatpush1.msra.mxu0 0.0
  %340 = vmatprep.subr.mxu0 0.0
  %341 = vmatpush1.msra.mxu0 %v323
  %342 = vmatprep.subr.mxu0 0.0
  %343 = vmatpush1.msra.mxu0 %v322
  %344 = vmatprep.subr.mxu0 0.0
  %345 = vmatpush1.msra.mxu0 %v321
  %346 = vmatprep.subr.mxu0 0.0
  %347 = vmatpush1.msra.mxu0 %v320
  %348 = vmatprep.subr.mxu0 0.0
  %349 = vmatpush1.msra.mxu0 %v319
  %350 = vmatprep.subr.mxu0 0.0
  %351 = vmatpush1.msra.mxu0 %v318
  %352 = vmatprep.subr.mxu0 0.0
  %353 = vmatpush1.msra.mxu0 %v317
  %354 = vmatprep.subr.mxu0 0.0
  %355 = vmatpush1.msra.mxu0 %v316
  %356 = vmatprep.subr.mxu0 0.0
  %357 = vmatpush2.msra.mxu0 0.0
  %358 = vmatprep.subr.mxu0 0.0
  %359 = vmatpush2.msra.mxu0 0.0
  %360 = vmatprep.subr.mxu0 0.0
  %361 = vmatpush2.msra.mxu0 0.0
  %362 = vmatprep.subr.mxu0 0.0
  %363 = vmatpush2.msra.mxu0 0.0
  %364 = vmatprep.subr.mxu0 0.0
  %365 = vmatpush2.msra.mxu0 0.0
  %366 = vmatprep.subr.mxu0 0.0
  %367 = vmatpush2.msra.mxu0 0.0
  %368 = vmatprep.subr.mxu0 0.0
  %369 = vmatpush2.msra.mxu0 0.0
  %370 = vmatprep.subr.mxu0 0.0
  %371 = vmatpush2.msra.mxu0 0.0
  %372 = vmatprep.subr.mxu0 0.0
  %373 = vmatpush2.msra.mxu0 0.0
  %374 = vmatprep.subr.mxu0 0.0
  %375 = vmatpush2.msra.mxu0 0.0
  %376 = vmatprep.subr.mxu0 0.0
  %377 = vmatpush2.msra.mxu0 0.0
  %378 = vmatprep.subr.mxu0 0.0
  %379 = vmatpush2.msra.mxu0 0.0
  %380 = vmatprep.subr.mxu0 0.0
  %381 = vmatpush2.msra.mxu0 0.0
  %382 = vmatprep.subr.mxu0 0.0
  %383 = vmatpush2.msra.mxu0 0.0
  %384 = vmatprep.subr.mxu0 0.0
  %385 = vmatpush2.msra.mxu0 0.0
  %386 = vmatprep.subr.mxu0 0.0
  %387 = vmatpush2.msra.mxu0 0.0
  %388 = vmatprep.mubr.f32.mxu0 0.0
  %389 = vmatmul.mubr.f32.gmra.mxu0 %v244
  %v390 = vpop.f32.mrf.mxu0
  %v391 = vadd.f32 0.0, %v390
  %v392 = vpop.f32.mrf.mxu0
  %393 = vdwg.mxu0
  %v394 = vld [vmem:[#allocation2] sm:$0x3]
  %v395 = vld [vmem:[#allocation2 + $0xa] sm:$0x3]
  %v396 = vadd.f32 %v394, %v313
  %v397 = vtanh.pop %v396
  %v398 = vmul.f32 %v397, 0.5
  %v399 = vadd.f32 %v398, 0.0
  %401 = vrot.lane.b32.xlu0 %v391, 64
  %v402 = vpop.permute.xlu0 %401
  %v404 = vadd.f32 %v395, %v402
  %v405 = vtanh.pop %v404
  %v406 = vmul.f32 %v405, 0.5
  %v407 = vadd.f32 %v406, 0.0
  %vm408 = vcmask 517120
  %409 = vst.msk [vmem:[#allocation3] sm:$0x3] %vm408, %v399
  %411 = vrot.lane.b32.xlu0 %v407, 64
  %v412 = vpop.permute.xlu0 %411
  %414 = vst.msk [vmem:[#allocation4 + $0xa] sm:$0x3] %vm408, %v412
  %v415 = vld [vmem:[%s2] sm:$0xff]
  %v416 = vld [vmem:[%s2 + $0x8] sm:$0xff]
  %v417 = vld [vmem:[%s2 + $0x10] sm:$0xff]
  %v418 = vld [vmem:[%s2 + $0x18] sm:$0xff]
  %v419 = vld [vmem:[%s2 + $0x20] sm:$0xff]
  %v420 = vld [vmem:[%s2 + $0x28] sm:$0xff]
  %v421 = vld [vmem:[%s2 + $0x30] sm:$0xff]
  %v422 = vld [vmem:[%s2 + $0x38] sm:$0xff]
  %v424 = vsel %vm242, %v399, 0
  %426 = vmatprep.subr.mxu0 0.0
  %427 = vmatpush1.msra.mxu0 0.0
  %428 = vmatprep.subr.mxu0 0.0
  %429 = vmatpush1.msra.mxu0 0.0
  %430 = vmatprep.subr.mxu0 0.0
  %431 = vmatpush1.msra.mxu0 0.0
  %432 = vmatprep.subr.mxu0 0.0
  %433 = vmatpush1.msra.mxu0 0.0
  %434 = vmatprep.subr.mxu0 0.0
  %435 = vmatpush1.msra.mxu0 0.0
  %436 = vmatprep.subr.mxu0 0.0
  %437 = vmatpush1.msra.mxu0 0.0
  %438 = vmatprep.subr.mxu0 0.0
  %439 = vmatpush1.msra.mxu0 0.0
  %440 = vmatprep.subr.mxu0 0.0
  %441 = vmatpush1.msra.mxu0 0.0
  %442 = vmatprep.subr.mxu0 0.0
  %443 = vmatpush1.msra.mxu0 %v422
  %444 = vmatprep.subr.mxu0 0.0
  %445 = vmatpush1.msra.mxu0 %v421
  %446 = vmatprep.subr.mxu0 0.0
  %447 = vmatpush1.msra.mxu0 %v420
  %448 = vmatprep.subr.mxu0 0.0
  %449 = vmatpush1.msra.mxu0 %v419
  %450 = vmatprep.subr.mxu0 0.0
  %451 = vmatpush1.msra.mxu0 %v418
  %452 = vmatprep.subr.mxu0 0.0
  %453 = vmatpush1.msra.mxu0 %v417
  %454 = vmatprep.subr.mxu0 0.0
  %455 = vmatpush1.msra.mxu0 %v416
  %456 = vmatprep.subr.mxu0 0.0
  %457 = vmatpush1.msra.mxu0 %v415
  %458 = vmatprep.subr.mxu0 0.0
  %459 = vmatpush2.msra.mxu0 0.0
  %460 = vmatprep.subr.mxu0 0.0
  %461 = vmatpush2.msra.mxu0 0.0
  %462 = vmatprep.subr.mxu0 0.0
  %463 = vmatpush2.msra.mxu0 0.0
  %464 = vmatprep.subr.mxu0 0.0
  %465 = vmatpush2.msra.mxu0 0.0
  %466 = vmatprep.subr.mxu0 0.0
  %467 = vmatpush2.msra.mxu0 0.0
  %468 = vmatprep.subr.mxu0 0.0
  %469 = vmatpush2.msra.mxu0 0.0
  %470 = vmatprep.subr.mxu0 0.0
  %471 = vmatpush2.msra.mxu0 0.0
  %472 = vmatprep.subr.mxu0 0.0
  %473 = vmatpush2.msra.mxu0 0.0
  %474 = vmatprep.subr.mxu0 0.0
  %475 = vmatpush2.msra.mxu0 0.0
  %476 = vmatprep.subr.mxu0 0.0
  %477 = vmatpush2.msra.mxu0 0.0
  %478 = vmatprep.subr.mxu0 0.0
  %479 = vmatpush2.msra.mxu0 0.0
  %480 = vmatprep.subr.mxu0 0.0
  %481 = vmatpush2.msra.mxu0 0.0
  %482 = vmatprep.subr.mxu0 0.0
  %483 = vmatpush2.msra.mxu0 0.0
  %484 = vmatprep.subr.mxu0 0.0
  %485 = vmatpush2.msra.mxu0 0.0
  %486 = vmatprep.subr.mxu0 0.0
  %487 = vmatpush2.msra.mxu0 0.0
  %488 = vmatprep.subr.mxu0 0.0
  %489 = vmatpush2.msra.mxu0 0.0
  %490 = vmatprep.mubr.f32.mxu0 0.0
  %491 = vmatmul.mubr.f32.gmra.mxu0 %v424
  %v492 = vpop.f32.mrf.mxu0
  %v493 = vadd.f32 0.0, %v492
  %v494 = vpop.f32.mrf.mxu0
  %495 = vdwg.mxu0
  %v496 = vld [vmem:[%s3] sm:$0xff]
  %v497 = vld [vmem:[%s3 + $0x8] sm:$0xff]
  %v498 = vld [vmem:[%s3 + $0x10] sm:$0xff]
  %v499 = vld [vmem:[%s3 + $0x18] sm:$0xff]
  %v500 = vld [vmem:[%s3 + $0x20] sm:$0xff]
  %v501 = vld [vmem:[%s3 + $0x28] sm:$0xff]
  %v502 = vld [vmem:[%s3 + $0x30] sm:$0xff]
  %v503 = vld [vmem:[%s3 + $0x38] sm:$0xff]
  %v504 = vsel %vm242, %v412, 0
  %506 = vmatprep.subr.mxu0 0.0
  %507 = vmatpush1.msra.mxu0 0.0
  %508 = vmatprep.subr.mxu0 0.0
  %509 = vmatpush1.msra.mxu0 0.0
  %510 = vmatprep.subr.mxu0 0.0
  %511 = vmatpush1.msra.mxu0 0.0
  %512 = vmatprep.subr.mxu0 0.0
  %513 = vmatpush1.msra.mxu0 0.0
  %514 = vmatprep.subr.mxu0 0.0
  %515 = vmatpush1.msra.mxu0 0.0
  %516 = vmatprep.subr.mxu0 0.0
  %517 = vmatpush1.msra.mxu0 0.0
  %518 = vmatprep.subr.mxu0 0.0
  %519 = vmatpush1.msra.mxu0 0.0
  %520 = vmatprep.subr.mxu0 0.0
  %521 = vmatpush1.msra.mxu0 0.0
  %522 = vmatprep.subr.mxu0 0.0
  %523 = vmatpush1.msra.mxu0 %v503
  %524 = vmatprep.subr.mxu0 0.0
  %525 = vmatpush1.msra.mxu0 %v502
  %526 = vmatprep.subr.mxu0 0.0
  %527 = vmatpush1.msra.mxu0 %v501
  %528 = vmatprep.subr.mxu0 0.0
  %529 = vmatpush1.msra.mxu0 %v500
  %530 = vmatprep.subr.mxu0 0.0
  %531 = vmatpush1.msra.mxu0 %v499
  %532 = vmatprep.subr.mxu0 0.0
  %533 = vmatpush1.msra.mxu0 %v498
  %534 = vmatprep.subr.mxu0 0.0
  %535 = vmatpush1.msra.mxu0 %v497
  %536 = vmatprep.subr.mxu0 0.0
  %537 = vmatpush1.msra.mxu0 %v496
  %538 = vmatprep.subr.mxu0 0.0
  %539 = vmatpush2.msra.mxu0 0.0
  %540 = vmatprep.subr.mxu0 0.0
  %541 = vmatpush2.msra.mxu0 0.0
  %542 = vmatprep.subr.mxu0 0.0
  %543 = vmatpush2.msra.mxu0 0.0
  %544 = vmatprep.subr.mxu0 0.0
  %545 = vmatpush2.msra.mxu0 0.0
  %546 = vmatprep.subr.mxu0 0.0
  %547 = vmatpush2.msra.mxu0 0.0
  %548 = vmatprep.subr.mxu0 0.0
  %549 = vmatpush2.msra.mxu0 0.0
  %550 = vmatprep.subr.mxu0 0.0
  %551 = vmatpush2.msra.mxu0 0.0
  %552 = vmatprep.subr.mxu0 0.0
  %553 = vmatpush2.msra.mxu0 0.0
  %554 = vmatprep.subr.mxu0 0.0
  %555 = vmatpush2.msra.mxu0 0.0
  %556 = vmatprep.subr.mxu0 0.0
  %557 = vmatpush2.msra.mxu0 0.0
  %558 = vmatprep.subr.mxu0 0.0
  %559 = vmatpush2.msra.mxu0 0.0
  %560 = vmatprep.subr.mxu0 0.0
  %561 = vmatpush2.msra.mxu0 0.0
  %562 = vmatprep.subr.mxu0 0.0
  %563 = vmatpush2.msra.mxu0 0.0
  %564 = vmatprep.subr.mxu0 0.0
  %565 = vmatpush2.msra.mxu0 0.0
  %566 = vmatprep.subr.mxu0 0.0
  %567 = vmatpush2.msra.mxu0 0.0
  %568 = vmatprep.subr.mxu0 0.0
  %569 = vmatpush2.msra.mxu0 0.0
  %570 = vmatprep.mubr.f32.mxu0 0.0
  %571 = vmatmul.mubr.f32.gmra.mxu0 %v504
  %v572 = vpop.f32.mrf.mxu0
  %v573 = vadd.f32 0.0, %v572
  %v574 = vpop.f32.mrf.mxu0
  %575 = vdwg.mxu0
  %v576 = vld [vmem:[#allocation2 + $0x2] sm:$0x3]
  %v577 = vld [vmem:[#allocation2 + $0x8] sm:$0x3]
  %v578 = vmul.f32 %v399, 0.5
  %v579 = vadd.f32 %v576, %v493
  %v580 = vtanh.pop %v579
  %v581 = vmul.f32 %v580, 0.5
  %v582 = vadd.f32 %v578, %v581
  %v583 = vmul.f32 %v407, 0.5
  %585 = vrot.lane.b32.xlu0 %v573, 64
  %v586 = vpop.permute.xlu0 %585
  %v588 = vadd.f32 %v577, %v586
  %v589 = vtanh.pop %v588
  %v590 = vmul.f32 %v589, 0.5
  %v591 = vadd.f32 %v583, %v590
  %592 = vst.msk [vmem:[#allocation3 + $0x2] sm:$0x3] %vm408, %v582
  %594 = vrot.lane.b32.xlu0 %v591, 64
  %v595 = vpop.permute.xlu0 %594
  %597 = vst.msk [vmem:[#allocation4 + $0x8] sm:$0x3] %vm408, %v595
  %v598 = vld [vmem:[%s2] sm:$0xff]
  %v599 = vld [vmem:[%s2 + $0x8] sm:$0xff]
  %v600 = vld [vmem:[%s2 + $0x10] sm:$0xff]
  %v601 = vld [vmem:[%s2 + $0x18] sm:$0xff]
  %v602 = vld [vmem:[%s2 + $0x20] sm:$0xff]
  %v603 = vld [vmem:[%s2 + $0x28] sm:$0xff]
  %v604 = vld [vmem:[%s2 + $0x30] sm:$0xff]
  %v605 = vld [vmem:[%s2 + $0x38] sm:$0xff]
  %v607 = vsel %vm242, %v582, 0
  %609 = vmatprep.subr.mxu0 0.0
  %610 = vmatpush1.msra.mxu0 0.0
  %611 = vmatprep.subr.mxu0 0.0
  %612 = vmatpush1.msra.mxu0 0.0
  %613 = vmatprep.subr.mxu0 0.0
  %614 = vmatpush1.msra.mxu0 0.0
  %615 = vmatprep.subr.mxu0 0.0
  %616 = vmatpush1.msra.mxu0 0.0
  %617 = vmatprep.subr.mxu0 0.0
  %618 = vmatpush1.msra.mxu0 0.0
  %619 = vmatprep.subr.mxu0 0.0
  %620 = vmatpush1.msra.mxu0 0.0
  %621 = vmatprep.subr.mxu0 0.0
  %622 = vmatpush1.msra.mxu0 0.0
  %623 = vmatprep.subr.mxu0 0.0
  %624 = vmatpush1.msra.mxu0 0.0
  %625 = vmatprep.subr.mxu0 0.0
  %626 = vmatpush1.msra.mxu0 %v605
  %627 = vmatprep.subr.mxu0 0.0
  %628 = vmatpush1.msra.mxu0 %v604
  %629 = vmatprep.subr.mxu0 0.0
  %630 = vmatpush1.msra.mxu0 %v603
  %631 = vmatprep.subr.mxu0 0.0
  %632 = vmatpush1.msra.mxu0 %v602
  %633 = vmatprep.subr.mxu0 0.0
  %634 = vmatpush1.msra.mxu0 %v601
  %635 = vmatprep.subr.mxu0 0.0
  %636 = vmatpush1.msra.mxu0 %v600
  %637 = vmatprep.subr.mxu0 0.0
  %638 = vmatpush1.msra.mxu0 %v599
  %639 = vmatprep.subr.mxu0 0.0
  %640 = vmatpush1.msra.mxu0 %v598
  %641 = vmatprep.subr.mxu0 0.0
  %642 = vmatpush2.msra.mxu0 0.0
  %643 = vmatprep.subr.mxu0 0.0
  %644 = vmatpush2.msra.mxu0 0.0
  %645 = vmatprep.subr.mxu0 0.0
  %646 = vmatpush2.msra.mxu0 0.0
  %647 = vmatprep.subr.mxu0 0.0
  %648 = vmatpush2.msra.mxu0 0.0
  %649 = vmatprep.subr.mxu0 0.0
  %650 = vmatpush2.msra.mxu0 0.0
  %651 = vmatprep.subr.mxu0 0.0
  %652 = vmatpush2.msra.mxu0 0.0
  %653 = vmatprep.subr.mxu0 0.0
  %654 = vmatpush2.msra.mxu0 0.0
  %655 = vmatprep.subr.mxu0 0.0
  %656 = vmatpush2.msra.mxu0 0.0
  %657 = vmatprep.subr.mxu0 0.0
  %658 = vmatpush2.msra.mxu0 0.0
  %659 = vmatprep.subr.mxu0 0.0
  %660 = vmatpush2.msra.mxu0 0.0
  %661 = vmatprep.subr.mxu0 0.0
  %662 = vmatpush2.msra.mxu0 0.0
  %663 = vmatprep.subr.mxu0 0.0
  %664 = vmatpush2.msra.mxu0 0.0
  %665 = vmatprep.subr.mxu0 0.0
  %666 = vmatpush2.msra.mxu0 0.0
  %667 = vmatprep.subr.mxu0 0.0
  %668 = vmatpush2.msra.mxu0 0.0
  %669 = vmatprep.subr.mxu0 0.0
  %670 = vmatpush2.msra.mxu0 0.0
  %671 = vmatprep.subr.mxu0 0.0
  %672 = vmatpush2.msra.mxu0 0.0
  %673 = vmatprep.mubr.f32.mxu0 0.0
  %674 = vmatmul.mubr.f32.gmra.mxu0 %v607
  %v675 = vpop.f32.mrf.mxu0
  %v676 = vadd.f32 0.0, %v675
  %v677 = vpop.f32.mrf.mxu0
  %678 = vdwg.mxu0
  %v679 = vld [vmem:[%s3] sm:$0xff]
  %v680 = vld [vmem:[%s3 + $0x8] sm:$0xff]
  %v681 = vld [vmem:[%s3 + $0x10] sm:$0xff]
  %v682 = vld [vmem:[%s3 + $0x18] sm:$0xff]
  %v683 = vld [vmem:[%s3 + $0x20] sm:$0xff]
  %v684 = vld [vmem:[%s3 + $0x28] sm:$0xff]
  %v685 = vld [vmem:[%s3 + $0x30] sm:$0xff]
  %v686 = vld [vmem:[%s3 + $0x38] sm:$0xff]
  %v687 = vsel %vm242, %v595, 0
  %689 = vmatprep.subr.mxu0 0.0
  %690 = vmatpush1.msra.mxu0 0.0
  %691 = vmatprep.subr.mxu0 0.0
  %692 = vmatpush1.msra.mxu0 0.0
  %693 = vmatprep.subr.mxu0 0.0
  %694 = vmatpush1.msra.mxu0 0.0
  %695 = vmatprep.subr.mxu0 0.0
  %696 = vmatpush1.msra.mxu0 0.0
  %697 = vmatprep.subr.mxu0 0.0
  %698 = vmatpush1.msra.mxu0 0.0
  %699 = vmatprep.subr.mxu0 0.0
  %700 = vmatpush1.msra.mxu0 0.0
  %701 = vmatprep.subr.mxu0 0.0
  %702 = vmatpush1.msra.mxu0 0.0
  %703 = vmatprep.subr.mxu0 0.0
  %704 = vmatpush1.msra.mxu0 0.0
  %705 = vmatprep.subr.mxu0 0.0
  %706 = vmatpush1.msra.mxu0 %v686
  %707 = vmatprep.subr.mxu0 0.0
  %708 = vmatpush1.msra.mxu0 %v685
  %709 = vmatprep.subr.mxu0 0.0
  %710 = vmatpush1.msra.mxu0 %v684
  %711 = vmatprep.subr.mxu0 0.0
  %712 = vmatpush1.msra.mxu0 %v683
  %713 = vmatprep.subr.mxu0 0.0
  %714 = vmatpush1.msra.mxu0 %v682
  %715 = vmatprep.subr.mxu0 0.0
  %716 = vmatpush1.msra.mxu0 %v681
  %717 = vmatprep.subr.mxu0 0.0
  %718 = vmatpush1.msra.mxu0 %v680
  %719 = vmatprep.subr.mxu0 0.0
  %720 = vmatpush1.msra.mxu0 %v679
  %721 = vmatprep.subr.mxu0 0.0
  %722 = vmatpush2.msra.mxu0 0.0
  %723 = vmatprep.subr.mxu0 0.0
  %724 = vmatpush2.msra.mxu0 0.0
  %725 = vmatprep.subr.mxu0 0.0
  %726 = vmatpush2.msra.mxu0 0.0
  %727 = vmatprep.subr.mxu0 0.0
  %728 = vmatpush2.msra.mxu0 0.0
  %729 = vmatprep.subr.mxu0 0.0
  %730 = vmatpush2.msra.mxu0 0.0
  %731 = vmatprep.subr.mxu0 0.0
  %732 = vmatpush2.msra.mxu0 0.0
  %733 = vmatprep.subr.mxu0 0.0
  %734 = vmatpush2.msra.mxu0 0.0
  %735 = vmatprep.subr.mxu0 0.0
  %736 = vmatpush2.msra.mxu0 0.0
  %737 = vmatprep.subr.mxu0 0.0
  %738 = vmatpush2.msra.mxu0 0.0
  %739 = vmatprep.subr.mxu0 0.0
  %740 = vmatpush2.msra.mxu0 0.0
  %741 = vmatprep.subr.mxu0 0.0
  %742 = vmatpush2.msra.mxu0 0.0
  %743 = vmatprep.subr.mxu0 0.0
  %744 = vmatpush2.msra.mxu0 0.0
  %745 = vmatprep.subr.mxu0 0.0
  %746 = vmatpush2.msra.mxu0 0.0
  %747 = vmatprep.subr.mxu0 0.0
  %748 = vmatpush2.msra.mxu0 0.0
  %749 = vmatprep.subr.mxu0 0.0
  %750 = vmatpush2.msra.mxu0 0.0
  %751 = vmatprep.subr.mxu0 0.0
  %752 = vmatpush2.msra.mxu0 0.0
  %753 = vmatprep.mubr.f32.mxu0 0.0
  %754 = vmatmul.mubr.f32.gmra.mxu0 %v687
  %v755 = vpop.f32.mrf.mxu0
  %v756 = vadd.f32 0.0, %v755
  %v757 = vpop.f32.mrf.mxu0
  %758 = vdwg.mxu0
  %v759 = vld [vmem:[#allocation2 + $0x4] sm:$0x3]
  %v760 = vld [vmem:[#allocation2 + $0x6] sm:$0x3]
  %v761 = vmul.f32 %v582, 0.5
  %v762 = vadd.f32 %v759, %v676
  %v763 = vtanh.pop %v762
  %v764 = vmul.f32 %v763, 0.5
  %v765 = vadd.f32 %v761, %v764
  %v766 = vmul.f32 %v591, 0.5
  %768 = vrot.lane.b32.xlu0 %v756, 64
  %v769 = vpop.permute.xlu0 %768
  %v771 = vadd.f32 %v760, %v769
  %v772 = vtanh.pop %v771
  %v773 = vmul.f32 %v772, 0.5
  %v774 = vadd.f32 %v766, %v773
  %775 = vst.msk [vmem:[#allocation3 + $0x4] sm:$0x3] %vm408, %v765
  %777 = vrot.lane.b32.xlu0 %v774, 64
  %v778 = vpop.permute.xlu0 %777
  %780 = vst.msk [vmem:[#allocation4 + $0x6] sm:$0x3] %vm408, %v778
  %v781 = vld [vmem:[%s2] sm:$0xff]
  %v782 = vld [vmem:[%s2 + $0x8] sm:$0xff]
  %v783 = vld [vmem:[%s2 + $0x10] sm:$0xff]
  %v784 = vld [vmem:[%s2 + $0x18] sm:$0xff]
  %v785 = vld [vmem:[%s2 + $0x20] sm:$0xff]
  %v786 = vld [vmem:[%s2 + $0x28] sm:$0xff]
  %v787 = vld [vmem:[%s2 + $0x30] sm:$0xff]
  %v788 = vld [vmem:[%s2 + $0x38] sm:$0xff]
  %v790 = vsel %vm242, %v765, 0
  %792 = vmatprep.subr.mxu0 0.0
  %793 = vmatpush1.msra.mxu0 0.0
  %794 = vmatprep.subr.mxu0 0.0
  %795 = vmatpush1.msra.mxu0 0.0
  %796 = vmatprep.subr.mxu0 0.0
  %797 = vmatpush1.msra.mxu0 0.0
  %798 = vmatprep.subr.mxu0 0.0
  %799 = vmatpush1.msra.mxu0 0.0
  %800 = vmatprep.subr.mxu0 0.0
  %801 = vmatpush1.msra.mxu0 0.0
  %802 = vmatprep.subr.mxu0 0.0
  %803 = vmatpush1.msra.mxu0 0.0
  %804 = vmatprep.subr.mxu0 0.0
  %805 = vmatpush1.msra.mxu0 0.0
  %806 = vmatprep.subr.mxu0 0.0
  %807 = vmatpush1.msra.mxu0 0.0
  %808 = vmatprep.subr.mxu0 0.0
  %809 = vmatpush1.msra.mxu0 %v788
  %810 = vmatprep.subr.mxu0 0.0
  %811 = vmatpush1.msra.mxu0 %v787
  %812 = vmatprep.subr.mxu0 0.0
  %813 = vmatpush1.msra.mxu0 %v786
  %814 = vmatprep.subr.mxu0 0.0
  %815 = vmatpush1.msra.mxu0 %v785
  %816 = vmatprep.subr.mxu0 0.0
  %817 = vmatpush1.msra.mxu0 %v784
  %818 = vmatprep.subr.mxu0 0.0
  %819 = vmatpush1.msra.mxu0 %v783
  %820 = vmatprep.subr.mxu0 0.0
  %821 = vmatpush1.msra.mxu0 %v782
  %822 = vmatprep.subr.mxu0 0.0
  %823 = vmatpush1.msra.mxu0 %v781
  %824 = vmatprep.subr.mxu0 0.0
  %825 = vmatpush2.msra.mxu0 0.0
  %826 = vmatprep.subr.mxu0 0.0
  %827 = vmatpush2.msra.mxu0 0.0
  %828 = vmatprep.subr.mxu0 0.0
  %829 = vmatpush2.msra.mxu0 0.0
  %830 = vmatprep.subr.mxu0 0.0
  %831 = vmatpush2.msra.mxu0 0.0
  %832 = vmatprep.subr.mxu0 0.0
  %833 = vmatpush2.msra.mxu0 0.0
  %834 = vmatprep.subr.mxu0 0.0
  %835 = vmatpush2.msra.mxu0 0.0
  %836 = vmatprep.subr.mxu0 0.0
  %837 = vmatpush2.msra.mxu0 0.0
  %838 = vmatprep.subr.mxu0 0.0
  %839 = vmatpush2.msra.mxu0 0.0
  %840 = vmatprep.subr.mxu0 0.0
  %841 = vmatpush2.msra.mxu0 0.0
  %842 = vmatprep.subr.mxu0 0.0
  %843 = vmatpush2.msra.mxu0 0.0
  %844 = vmatprep.subr.mxu0 0.0
  %845 = vmatpush2.msra.mxu0 0.0
  %846 = vmatprep.subr.mxu0 0.0
  %847 = vmatpush2.msra.mxu0 0.0
  %848 = vmatprep.subr.mxu0 0.0
  %849 = vmatpush2.msra.mxu0 0.0
  %850 = vmatprep.subr.mxu0 0.0
  %851 = vmatpush2.msra.mxu0 0.0
  %852 = vmatprep.subr.mxu0 0.0
  %853 = vmatpush2.msra.mxu0 0.0
  %854 = vmatprep.subr.mxu0 0.0
  %855 = vmatpush2.msra.mxu0 0.0
  %856 = vmatprep.mubr.f32.mxu0 0.0
  %857 = vmatmul.mubr.f32.gmra.mxu0 %v790
  %v858 = vpop.f32.mrf.mxu0
  %v859 = vadd.f32 0.0, %v858
  %v860 = vpop.f32.mrf.mxu0
  %861 = vdwg.mxu0
  %v862 = vld [vmem:[%s3] sm:$0xff]
  %v863 = vld [vmem:[%s3 + $0x8] sm:$0xff]
  %v864 = vld [vmem:[%s3 + $0x10] sm:$0xff]
  %v865 = vld [vmem:[%s3 + $0x18] sm:$0xff]
  %v866 = vld [vmem:[%s3 + $0x20] sm:$0xff]
  %v867 = vld [vmem:[%s3 + $0x28] sm:$0xff]
  %v868 = vld [vmem:[%s3 + $0x30] sm:$0xff]
  %v869 = vld [vmem:[%s3 + $0x38] sm:$0xff]
  %v870 = vsel %vm242, %v778, 0
  %872 = vmatprep.subr.mxu0 0.0
  %873 = vmatpush1.msra.mxu0 0.0
  %874 = vmatprep.subr.mxu0 0.0
  %875 = vmatpush1.msra.mxu0 0.0
  %876 = vmatprep.subr.mxu0 0.0
  %877 = vmatpush1.msra.mxu0 0.0
  %878 = vmatprep.subr.mxu0 0.0
  %879 = vmatpush1.msra.mxu0 0.0
  %880 = vmatprep.subr.mxu0 0.0
  %881 = vmatpush1.msra.mxu0 0.0
  %882 = vmatprep.subr.mxu0 0.0
  %883 = vmatpush1.msra.mxu0 0.0
  %884 = vmatprep.subr.mxu0 0.0
  %885 = vmatpush1.msra.mxu0 0.0
  %886 = vmatprep.subr.mxu0 0.0
  %887 = vmatpush1.msra.mxu0 0.0
  %888 = vmatprep.subr.mxu0 0.0
  %889 = vmatpush1.msra.mxu0 %v869
  %890 = vmatprep.subr.mxu0 0.0
  %891 = vmatpush1.msra.mxu0 %v868
  %892 = vmatprep.subr.mxu0 0.0
  %893 = vmatpush1.msra.mxu0 %v867
  %894 = vmatprep.subr.mxu0 0.0
  %895 = vmatpush1.msra.mxu0 %v866
  %896 = vmatprep.subr.mxu0 0.0
  %897 = vmatpush1.msra.mxu0 %v865
  %898 = vmatprep.subr.mxu0 0.0
  %899 = vmatpush1.msra.mxu0 %v864
  %900 = vmatprep.subr.mxu0 0.0
  %901 = vmatpush1.msra.mxu0 %v863
  %902 = vmatprep.subr.mxu0 0.0
  %903 = vmatpush1.msra.mxu0 %v862
  %904 = vmatprep.subr.mxu0 0.0
  %905 = vmatpush2.msra.mxu0 0.0
  %906 = vmatprep.subr.mxu0 0.0
  %907 = vmatpush2.msra.mxu0 0.0
  %908 = vmatprep.subr.mxu0 0.0
  %909 = vmatpush2.msra.mxu0 0.0
  %910 = vmatprep.subr.mxu0 0.0
  %911 = vmatpush2.msra.mxu0 0.0
  %912 = vmatprep.subr.mxu0 0.0
  %913 = vmatpush2.msra.mxu0 0.0
  %914 = vmatprep.subr.mxu0 0.0
  %915 = vmatpush2.msra.mxu0 0.0
  %916 = vmatprep.subr.mxu0 0.0
  %917 = vmatpush2.msra.mxu0 0.0
  %918 = vmatprep.subr.mxu0 0.0
  %919 = vmatpush2.msra.mxu0 0.0
  %920 = vmatprep.subr.mxu0 0.0
  %921 = vmatpush2.msra.mxu0 0.0
  %922 = vmatprep.subr.mxu0 0.0
  %923 = vmatpush2.msra.mxu0 0.0
  %924 = vmatprep.subr.mxu0 0.0
  %925 = vmatpush2.msra.mxu0 0.0
  %926 = vmatprep.subr.mxu0 0.0
  %927 = vmatpush2.msra.mxu0 0.0
  %928 = vmatprep.subr.mxu0 0.0
  %929 = vmatpush2.msra.mxu0 0.0
  %930 = vmatprep.subr.mxu0 0.0
  %931 = vmatpush2.msra.mxu0 0.0
  %932 = vmatprep.subr.mxu0 0.0
  %933 = vmatpush2.msra.mxu0 0.0
  %934 = vmatprep.subr.mxu0 0.0
  %935 = vmatpush2.msra.mxu0 0.0
  %936 = vmatprep.mubr.f32.mxu0 0.0
  %937 = vmatmul.mubr.f32.gmra.mxu0 %v870
  %v938 = vpop.f32.mrf.mxu0
  %v939 = vadd.f32 0.0, %v938
  %v940 = vpop.f32.mrf.mxu0
  %941 = vdwg.mxu0
  %v942 = vld [vmem:[#allocation2 + $0x6] sm:$0x3]
  %v943 = vld [vmem:[#allocation2 + $0x4] sm:$0x3]
  %v944 = vmul.f32 %v765, 0.5
  %v945 = vadd.f32 %v942, %v859
  %v946 = vtanh.pop %v945
  %v947 = vmul.f32 %v946, 0.5
  %v948 = vadd.f32 %v944, %v947
  %v949 = vmul.f32 %v774, 0.5
  %951 = vrot.lane.b32.xlu0 %v939, 64
  %v952 = vpop.permute.xlu0 %951
  %v954 = vadd.f32 %v943, %v952
  %v955 = vtanh.pop %v954
  %v956 = vmul.f32 %v955, 0.5
  %v957 = vadd.f32 %v949, %v956
  %958 = vst.msk [vmem:[#allocation3 + $0x6] sm:$0x3] %vm408, %v948
  %960 = vrot.lane.b32.xlu0 %v957, 64
  %v961 = vpop.permute.xlu0 %960
  %963 = vst.msk [vmem:[#allocation4 + $0x4] sm:$0x3] %vm408, %v961
  %v964 = vld [vmem:[%s2] sm:$0xff]
  %v965 = vld [vmem:[%s2 + $0x8] sm:$0xff]
  %v966 = vld [vmem:[%s2 + $0x10] sm:$0xff]
  %v967 = vld [vmem:[%s2 + $0x18] sm:$0xff]
  %v968 = vld [vmem:[%s2 + $0x20] sm:$0xff]
  %v969 = vld [vmem:[%s2 + $0x28] sm:$0xff]
  %v970 = vld [vmem:[%s2 + $0x30] sm:$0xff]
  %v971 = vld [vmem:[%s2 + $0x38] sm:$0xff]
  %v973 = vsel %vm242, %v948, 0
  %975 = vmatprep.subr.mxu0 0.0
  %976 = vmatpush1.msra.mxu0 0.0
  %977 = vmatprep.subr.mxu0 0.0
  %978 = vmatpush1.msra.mxu0 0.0
  %979 = vmatprep.subr.mxu0 0.0
  %980 = vmatpush1.msra.mxu0 0.0
  %981 = vmatprep.subr.mxu0 0.0
  %982 = vmatpush1.msra.mxu0 0.0
  %983 = vmatprep.subr.mxu0 0.0
  %984 = vmatpush1.msra.mxu0 0.0
  %985 = vmatprep.subr.mxu0 0.0
  %986 = vmatpush1.msra.mxu0 0.0
  %987 = vmatprep.subr.mxu0 0.0
  %988 = vmatpush1.msra.mxu0 0.0
  %989 = vmatprep.subr.mxu0 0.0
  %990 = vmatpush1.msra.mxu0 0.0
  %991 = vmatprep.subr.mxu0 0.0
  %992 = vmatpush1.msra.mxu0 %v971
  %993 = vmatprep.subr.mxu0 0.0
  %994 = vmatpush1.msra.mxu0 %v970
  %995 = vmatprep.subr.mxu0 0.0
  %996 = vmatpush1.msra.mxu0 %v969
  %997 = vmatprep.subr.mxu0 0.0
  %998 = vmatpush1.msra.mxu0 %v968
  %999 = vmatprep.subr.mxu0 0.0
  %1000 = vmatpush1.msra.mxu0 %v967
  %1001 = vmatprep.subr.mxu0 0.0
  %1002 = vmatpush1.msra.mxu0 %v966
  %1003 = vmatprep.subr.mxu0 0.0
  %1004 = vmatpush1.msra.mxu0 %v965
  %1005 = vmatprep.subr.mxu0 0.0
  %1006 = vmatpush1.msra.mxu0 %v964
  %1007 = vmatprep.subr.mxu0 0.0
  %1008 = vmatpush2.msra.mxu0 0.0
  %1009 = vmatprep.subr.mxu0 0.0
  %1010 = vmatpush2.msra.mxu0 0.0
  %1011 = vmatprep.subr.mxu0 0.0
  %1012 = vmatpush2.msra.mxu0 0.0
  %1013 = vmatprep.subr.mxu0 0.0
  %1014 = vmatpush2.msra.mxu0 0.0
  %1015 = vmatprep.subr.mxu0 0.0
  %1016 = vmatpush2.msra.mxu0 0.0
  %1017 = vmatprep.subr.mxu0 0.0
  %1018 = vmatpush2.msra.mxu0 0.0
  %1019 = vmatprep.subr.mxu0 0.0
  %1020 = vmatpush2.msra.mxu0 0.0
  %1021 = vmatprep.subr.mxu0 0.0
  %1022 = vmatpush2.msra.mxu0 0.0
  %1023 = vmatprep.subr.mxu0 0.0
  %1024 = vmatpush2.msra.mxu0 0.0
  %1025 = vmatprep.subr.mxu0 0.0
  %1026 = vmatpush2.msra.mxu0 0.0
  %1027 = vmatprep.subr.mxu0 0.0
  %1028 = vmatpush2.msra.mxu0 0.0
  %1029 = vmatprep.subr.mxu0 0.0
  %1030 = vmatpush2.msra.mxu0 0.0
  %1031 = vmatprep.subr.mxu0 0.0
  %1032 = vmatpush2.msra.mxu0 0.0
  %1033 = vmatprep.subr.mxu0 0.0
  %1034 = vmatpush2.msra.mxu0 0.0
  %1035 = vmatprep.subr.mxu0 0.0
  %1036 = vmatpush2.msra.mxu0 0.0
  %1037 = vmatprep.subr.mxu0 0.0
  %1038 = vmatpush2.msra.mxu0 0.0
  %1039 = vmatprep.mubr.f32.mxu0 0.0
  %1040 = vmatmul.mubr.f32.gmra.mxu0 %v973
  %v1041 = vpop.f32.mrf.mxu0
  %v1042 = vadd.f32 0.0, %v1041
  %v1043 = vpop.f32.mrf.mxu0
  %1044 = vdwg.mxu0
  %v1045 = vld [vmem:[%s3] sm:$0xff]
  %v1046 = vld [vmem:[%s3 + $0x8] sm:$0xff]
  %v1047 = vld [vmem:[%s3 + $0x10] sm:$0xff]
  %v1048 = vld [vmem:[%s3 + $0x18] sm:$0xff]
  %v1049 = vld [vmem:[%s3 + $0x20] sm:$0xff]
  %v1050 = vld [vmem:[%s3 + $0x28] sm:$0xff]
  %v1051 = vld [vmem:[%s3 + $0x30] sm:$0xff]
  %v1052 = vld [vmem:[%s3 + $0x38] sm:$0xff]
  %v1053 = vsel %vm242, %v961, 0
  %1055 = vmatprep.subr.mxu0 0.0
  %1056 = vmatpush1.msra.mxu0 0.0
  %1057 = vmatprep.subr.mxu0 0.0
  %1058 = vmatpush1.msra.mxu0 0.0
  %1059 = vmatprep.subr.mxu0 0.0
  %1060 = vmatpush1.msra.mxu0 0.0
  %1061 = vmatprep.subr.mxu0 0.0
  %1062 = vmatpush1.msra.mxu0 0.0
  %1063 = vmatprep.subr.mxu0 0.0
  %1064 = vmatpush1.msra.mxu0 0.0
  %1065 = vmatprep.subr.mxu0 0.0
  %1066 = vmatpush1.msra.mxu0 0.0
  %1067 = vmatprep.subr.mxu0 0.0
  %1068 = vmatpush1.msra.mxu0 0.0
  %1069 = vmatprep.subr.mxu0 0.0
  %1070 = vmatpush1.msra.mxu0 0.0
  %1071 = vmatprep.subr.mxu0 0.0
  %1072 = vmatpush1.msra.mxu0 %v1052
  %1073 = vmatprep.subr.mxu0 0.0
  %1074 = vmatpush1.msra.mxu0 %v1051
  %1075 = vmatprep.subr.mxu0 0.0
  %1076 = vmatpush1.msra.mxu0 %v1050
  %1077 = vmatprep.subr.mxu0 0.0
  %1078 = vmatpush1.msra.mxu0 %v1049
  %1079 = vmatprep.subr.mxu0 0.0
  %1080 = vmatpush1.msra.mxu0 %v1048
  %1081 = vmatprep.subr.mxu0 0.0
  %1082 = vmatpush1.msra.mxu0 %v1047
  %1083 = vmatprep.subr.mxu0 0.0
  %1084 = vmatpush1.msra.mxu0 %v1046
  %1085 = vmatprep.subr.mxu0 0.0
  %1086 = vmatpush1.msra.mxu0 %v1045
  %1087 = vmatprep.subr.mxu0 0.0
  %1088 = vmatpush2.msra.mxu0 0.0
  %1089 = vmatprep.subr.mxu0 0.0
  %1090 = vmatpush2.msra.mxu0 0.0
  %1091 = vmatprep.subr.mxu0 0.0
  %1092 = vmatpush2.msra.mxu0 0.0
  %1093 = vmatprep.subr.mxu0 0.0
  %1094 = vmatpush2.msra.mxu0 0.0
  %1095 = vmatprep.subr.mxu0 0.0
  %1096 = vmatpush2.msra.mxu0 0.0
  %1097 = vmatprep.subr.mxu0 0.0
  %1098 = vmatpush2.msra.mxu0 0.0
  %1099 = vmatprep.subr.mxu0 0.0
  %1100 = vmatpush2.msra.mxu0 0.0
  %1101 = vmatprep.subr.mxu0 0.0
  %1102 = vmatpush2.msra.mxu0 0.0
  %1103 = vmatprep.subr.mxu0 0.0
  %1104 = vmatpush2.msra.mxu0 0.0
  %1105 = vmatprep.subr.mxu0 0.0
  %1106 = vmatpush2.msra.mxu0 0.0
  %1107 = vmatprep.subr.mxu0 0.0
  %1108 = vmatpush2.msra.mxu0 0.0
  %1109 = vmatprep.subr.mxu0 0.0
  %1110 = vmatpush2.msra.mxu0 0.0
  %1111 = vmatprep.subr.mxu0 0.0
  %1112 = vmatpush2.msra.mxu0 0.0
  %1113 = vmatprep.subr.mxu0 0.0
  %1114 = vmatpush2.msra.mxu0 0.0
  %1115 = vmatprep.subr.mxu0 0.0
  %1116 = vmatpush2.msra.mxu0 0.0
  %1117 = vmatprep.subr.mxu0 0.0
  %1118 = vmatpush2.msra.mxu0 0.0
  %1119 = vmatprep.mubr.f32.mxu0 0.0
  %1120 = vmatmul.mubr.f32.gmra.mxu0 %v1053
  %v1121 = vpop.f32.mrf.mxu0
  %v1122 = vadd.f32 0.0, %v1121
  %v1123 = vpop.f32.mrf.mxu0
  %1124 = vdwg.mxu0
  %v1125 = vld [vmem:[#allocation2 + $0x8] sm:$0x3]
  %v1126 = vld [vmem:[#allocation2 + $0x2] sm:$0x3]
  %v1127 = vmul.f32 %v948, 0.5
  %v1128 = vadd.f32 %v1125, %v1042
  %v1129 = vtanh.pop %v1128
  %v1130 = vmul.f32 %v1129, 0.5
  %v1131 = vadd.f32 %v1127, %v1130
  %v1132 = vmul.f32 %v957, 0.5
  %1134 = vrot.lane.b32.xlu0 %v1122, 64
  %v1135 = vpop.permute.xlu0 %1134
  %v1137 = vadd.f32 %v1126, %v1135
  %v1138 = vtanh.pop %v1137
  %v1139 = vmul.f32 %v1138, 0.5
  %v1140 = vadd.f32 %v1132, %v1139
  %1141 = vst.msk [vmem:[#allocation3 + $0x8] sm:$0x3] %vm408, %v1131
  %1143 = vrot.lane.b32.xlu0 %v1140, 64
  %v1144 = vpop.permute.xlu0 %1143
  %1146 = vst.msk [vmem:[#allocation4 + $0x2] sm:$0x3] %vm408, %v1144
  %v1147 = vld [vmem:[%s2] sm:$0xff]
  %v1148 = vld [vmem:[%s2 + $0x8] sm:$0xff]
  %v1149 = vld [vmem:[%s2 + $0x10] sm:$0xff]
  %v1150 = vld [vmem:[%s2 + $0x18] sm:$0xff]
  %v1151 = vld [vmem:[%s2 + $0x20] sm:$0xff]
  %v1152 = vld [vmem:[%s2 + $0x28] sm:$0xff]
  %v1153 = vld [vmem:[%s2 + $0x30] sm:$0xff]
  %v1154 = vld [vmem:[%s2 + $0x38] sm:$0xff]
  %v1156 = vsel %vm242, %v1131, 0
  %1158 = vmatprep.subr.mxu0 0.0
  %1159 = vmatpush1.msra.mxu0 0.0
  %1160 = vmatprep.subr.mxu0 0.0
  %1161 = vmatpush1.msra.mxu0 0.0
  %1162 = vmatprep.subr.mxu0 0.0
  %1163 = vmatpush1.msra.mxu0 0.0
  %1164 = vmatprep.subr.mxu0 0.0
  %1165 = vmatpush1.msra.mxu0 0.0
  %1166 = vmatprep.subr.mxu0 0.0
  %1167 = vmatpush1.msra.mxu0 0.0
  %1168 = vmatprep.subr.mxu0 0.0
  %1169 = vmatpush1.msra.mxu0 0.0
  %1170 = vmatprep.subr.mxu0 0.0
  %1171 = vmatpush1.msra.mxu0 0.0
  %1172 = vmatprep.subr.mxu0 0.0
  %1173 = vmatpush1.msra.mxu0 0.0
  %1174 = vmatprep.subr.mxu0 0.0
  %1175 = vmatpush1.msra.mxu0 %v1154
  %1176 = vmatprep.subr.mxu0 0.0
  %1177 = vmatpush1.msra.mxu0 %v1153
  %1178 = vmatprep.subr.mxu0 0.0
  %1179 = vmatpush1.msra.mxu0 %v1152
  %1180 = vmatprep.subr.mxu0 0.0
  %1181 = vmatpush1.msra.mxu0 %v1151
  %1182 = vmatprep.subr.mxu0 0.0
  %1183 = vmatpush1.msra.mxu0 %v1150
  %1184 = vmatprep.subr.mxu0 0.0
  %1185 = vmatpush1.msra.mxu0 %v1149
  %1186 = vmatprep.subr.mxu0 0.0
  %1187 = vmatpush1.msra.mxu0 %v1148
  %1188 = vmatprep.subr.mxu0 0.0
  %1189 = vmatpush1.msra.mxu0 %v1147
  %1190 = vmatprep.subr.mxu0 0.0
  %1191 = vmatpush2.msra.mxu0 0.0
  %1192 = vmatprep.subr.mxu0 0.0
  %1193 = vmatpush2.msra.mxu0 0.0
  %1194 = vmatprep.subr.mxu0 0.0
  %1195 = vmatpush2.msra.mxu0 0.0
  %1196 = vmatprep.subr.mxu0 0.0
  %1197 = vmatpush2.msra.mxu0 0.0
  %1198 = vmatprep.subr.mxu0 0.0
  %1199 = vmatpush2.msra.mxu0 0.0
  %1200 = vmatprep.subr.mxu0 0.0
  %1201 = vmatpush2.msra.mxu0 0.0
  %1202 = vmatprep.subr.mxu0 0.0
  %1203 = vmatpush2.msra.mxu0 0.0
  %1204 = vmatprep.subr.mxu0 0.0
  %1205 = vmatpush2.msra.mxu0 0.0
  %1206 = vmatprep.subr.mxu0 0.0
  %1207 = vmatpush2.msra.mxu0 0.0
  %1208 = vmatprep.subr.mxu0 0.0
  %1209 = vmatpush2.msra.mxu0 0.0
  %1210 = vmatprep.subr.mxu0 0.0
  %1211 = vmatpush2.msra.mxu0 0.0
  %1212 = vmatprep.subr.mxu0 0.0
  %1213 = vmatpush2.msra.mxu0 0.0
  %1214 = vmatprep.subr.mxu0 0.0
  %1215 = vmatpush2.msra.mxu0 0.0
  %1216 = vmatprep.subr.mxu0 0.0
  %1217 = vmatpush2.msra.mxu0 0.0
  %1218 = vmatprep.subr.mxu0 0.0
  %1219 = vmatpush2.msra.mxu0 0.0
  %1220 = vmatprep.subr.mxu0 0.0
  %1221 = vmatpush2.msra.mxu0 0.0
  %1222 = vmatprep.mubr.f32.mxu0 0.0
  %1223 = vmatmul.mubr.f32.gmra.mxu0 %v1156
  %v1224 = vpop.f32.mrf.mxu0
  %v1225 = vadd.f32 0.0, %v1224
  %v1226 = vpop.f32.mrf.mxu0
  %1227 = vdwg.mxu0
  %v1228 = vld [vmem:[%s3] sm:$0xff]
  %v1229 = vld [vmem:[%s3 + $0x8] sm:$0xff]
  %v1230 = vld [vmem:[%s3 + $0x10] sm:$0xff]
  %v1231 = vld [vmem:[%s3 + $0x18] sm:$0xff]
  %v1232 = vld [vmem:[%s3 + $0x20] sm:$0xff]
  %v1233 = vld [vmem:[%s3 + $0x28] sm:$0xff]
  %v1234 = vld [vmem:[%s3 + $0x30] sm:$0xff]
  %v1235 = vld [vmem:[%s3 + $0x38] sm:$0xff]
  %v1236 = vsel %vm242, %v1144, 0
  %1238 = vmatprep.subr.mxu0 0.0
  %1239 = vmatpush1.msra.mxu0 0.0
  %1240 = vmatprep.subr.mxu0 0.0
  %1241 = vmatpush1.msra.mxu0 0.0
  %1242 = vmatprep.subr.mxu0 0.0
  %1243 = vmatpush1.msra.mxu0 0.0
  %1244 = vmatprep.subr.mxu0 0.0
  %1245 = vmatpush1.msra.mxu0 0.0
  %1246 = vmatprep.subr.mxu0 0.0
  %1247 = vmatpush1.msra.mxu0 0.0
  %1248 = vmatprep.subr.mxu0 0.0
  %1249 = vmatpush1.msra.mxu0 0.0
  %1250 = vmatprep.subr.mxu0 0.0
  %1251 = vmatpush1.msra.mxu0 0.0
  %1252 = vmatprep.subr.mxu0 0.0
  %1253 = vmatpush1.msra.mxu0 0.0
  %1254 = vmatprep.subr.mxu0 0.0
  %1255 = vmatpush1.msra.mxu0 %v1235
  %1256 = vmatprep.subr.mxu0 0.0
  %1257 = vmatpush1.msra.mxu0 %v1234
  %1258 = vmatprep.subr.mxu0 0.0
  %1259 = vmatpush1.msra.mxu0 %v1233
  %1260 = vmatprep.subr.mxu0 0.0
  %1261 = vmatpush1.msra.mxu0 %v1232
  %1262 = vmatprep.subr.mxu0 0.0
  %1263 = vmatpush1.msra.mxu0 %v1231
  %1264 = vmatprep.subr.mxu0 0.0
  %1265 = vmatpush1.msra.mxu0 %v1230
  %1266 = vmatprep.subr.mxu0 0.0
  %1267 = vmatpush1.msra.mxu0 %v1229
  %1268 = vmatprep.subr.mxu0 0.0
  %1269 = vmatpush1.msra.mxu0 %v1228
  %1270 = vmatprep.subr.mxu0 0.0
  %1271 = vmatpush2.msra.mxu0 0.0
  %1272 = vmatprep.subr.mxu0 0.0
  %1273 = vmatpush2.msra.mxu0 0.0
  %1274 = vmatprep.subr.mxu0 0.0
  %1275 = vmatpush2.msra.mxu0 0.0
  %1276 = vmatprep.subr.mxu0 0.0
  %1277 = vmatpush2.msra.mxu0 0.0
  %1278 = vmatprep.subr.mxu0 0.0
  %1279 = vmatpush2.msra.mxu0 0.0
  %1280 = vmatprep.subr.mxu0 0.0
  %1281 = vmatpush2.msra.mxu0 0.0
  %1282 = vmatprep.subr.mxu0 0.0
  %1283 = vmatpush2.msra.mxu0 0.0
  %1284 = vmatprep.subr.mxu0 0.0
  %1285 = vmatpush2.msra.mxu0 0.0
  %1286 = vmatprep.subr.mxu0 0.0
  %1287 = vmatpush2.msra.mxu0 0.0
  %1288 = vmatprep.subr.mxu0 0.0
  %1289 = vmatpush2.msra.mxu0 0.0
  %1290 = vmatprep.subr.mxu0 0.0
  %1291 = vmatpush2.msra.mxu0 0.0
  %1292 = vmatprep.subr.mxu0 0.0
  %1293 = vmatpush2.msra.mxu0 0.0
  %1294 = vmatprep.subr.mxu0 0.0
  %1295 = vmatpush2.msra.mxu0 0.0
  %1296 = vmatprep.subr.mxu0 0.0
  %1297 = vmatpush2.msra.mxu0 0.0
  %1298 = vmatprep.subr.mxu0 0.0
  %1299 = vmatpush2.msra.mxu0 0.0
  %1300 = vmatprep.subr.mxu0 0.0
  %1301 = vmatpush2.msra.mxu0 0.0
  %1302 = vmatprep.mubr.f32.mxu0 0.0
  %1303 = vmatmul.mubr.f32.gmra.mxu0 %v1236
  %v1304 = vpop.f32.mrf.mxu0
  %v1305 = vadd.f32 0.0, %v1304
  %v1306 = vpop.f32.mrf.mxu0
  %1307 = vdwg.mxu0
  %v1308 = vld [vmem:[#allocation2 + $0xa] sm:$0x3]
  %v1309 = vld [vmem:[#allocation2] sm:$0x3]
  %v1310 = vmul.f32 %v1131, 0.5
  %v1311 = vadd.f32 %v1308, %v1225
  %v1312 = vtanh.pop %v1311
  %v1313 = vmul.f32 %v1312, 0.5
  %v1314 = vadd.f32 %v1310, %v1313
  %v1315 = vmul.f32 %v1140, 0.5
  %1317 = vrot.lane.b32.xlu0 %v1305, 64
  %v1318 = vpop.permute.xlu0 %1317
  %v1320 = vadd.f32 %v1309, %v1318
  %v1321 = vtanh.pop %v1320
  %v1322 = vmul.f32 %v1321, 0.5
  %v1323 = vadd.f32 %v1315, %v1322
  %1324 = vst.msk [vmem:[#allocation3 + $0xa] sm:$0x3] %vm408, %v1314
  %1326 = vrot.lane.b32.xlu0 %v1323, 64
  %v1327 = vpop.permute.xlu0 %1326
  %1329 = vst.msk [vmem:[#allocation4] sm:$0x3] %vm408, %v1327
  %v1330 = vld [vmem:[#allocation3] sm:$0xff]
  %v1331 = vld [vmem:[#allocation3 + $0x8] sm:$0xf]
  %v1332 = vld [vmem:[#allocation4] sm:$0xff]
  %v1333 = vld [vmem:[#allocation4 + $0x8] sm:$0xf]
  %1336 = vrot.lane.b32.xlu0 %v1332, 64
  %v1337 = vpop.permute.xlu0 %1336
  %1338 = vrot.lane.b32.xlu0 %v1333, 64
  %v1339 = vpop.permute.xlu0 %1338
  %v1342 = vsel %vm242, %v1330, %v1337
  %v1343 = vsel %vm242, %v1331, %v1339
  %1344 = vst [vmem:[%s5] sm:$0xff] %v1342
  %1345 = vst [vmem:[%s5 + $0x8] sm:$0xf] %v1343
  // Predicated region
  $region22: #{_lambda_.4} parent=0 // pred_check
    _
  $region23: #{_lambda_.4} parent=0 // pred_check_branch
    %1347 = sbr.rel (0) target = $region25
  $region24: #{_lambda_.4} parent=0 // pred_region
    _
  $region25: #{_lambda_.4} parent=0 // pred_fallthru
    _
  // Predicated region
  $region26: #{_lambda_.4} parent=0 // pred_check
    _
  $region27: #{_lambda_.4} parent=0 // pred_check_branch
    %1349 = sbr.rel (0) target = $region29
  $region28: #{_lambda_.4} parent=0 // pred_region
    _
  $region29: #{_lambda_.4} parent=0 // pred_fallthru
    _

// kernel: _lambda_.3
$region0: #{_lambda_.3}
  #allocation0 [shape = 'u32[]', space=smem, size = 0x4, offset = 0x4, fixed_abs, tag = 'smem constant byte address 0x4 - core index']
  #allocation1 [shape = 'u32[144,128]{1,0:T(1,128)}', space=vmem, size = 0x12000, scoped, tag = 'internal scratch']
  #allocation2 [shape = 'f32[16,128]{1,0:T(8,128)}', space=vmem, size = 0x2000, scoped, tag = 'scratch operand']
  #allocation3 [shape = 'f32[16,64]{1,0:T(8,128)}', space=vmem, size = 0x2000, scoped, tag = 'scratch operand']
  #allocation4 [shape = 'f32[16,64]{1,0:T(8,128)}', space=vmem, size = 0x2000, scoped, tag = 'scratch operand']
  %s0 = inlined_call_operand.vmem [shape: f32[16,300], index: 0, kind: input, shape index: {}]
  %s1 = inlined_call_operand.hbm [shape: f32[300,128], index: 1, kind: input, shape index: {}]
  %s2 = inlined_call_operand.vmem [shape: f32[64,64], index: 2, kind: input, shape index: {}, may-alias: {2,3}]
  %s3 = inlined_call_operand.vmem [shape: f32[64,64], index: 3, kind: input, shape index: {}, may-alias: {2,3}]
  %s4 = inlined_call_operand.vmem [shape: f32[1,128], index: 4, kind: input, shape index: {}]
  %s5 = inlined_call_operand.vmem [shape: f32[16,128], index: 5, kind: output, shape index: {}]
  %s6 = sld [smem:[#allocation0]]
  $region34: #{_lambda_.3} parent=0
    _
  %s8 = ssub.s32 1, %s6
  %s9 = scalar_select 0, %s8, %s6
  $region1: #{_lambda_.3} parent=0
    #allocation5 [shape = 'u8[155648]{0}', space=vmem, size = 0x26000, scoped, tag = 'input window, operand 1, single buffered']
    #allocation6 [shape = 's32[1]{0}', space=sflag, size = 0x4, scoped, tag = 'scoped memory for _lambda_.3']
    %10 = vsyncpa [#allocation6], 0
    // Predicated region
    $region2: #{_lambda_.3} parent=1 // pred_check
      _
    $region3: #{_lambda_.3} parent=1 // pred_check_branch
      %12 = sbr.rel (0) target = $region5
    $region4: #{_lambda_.3} parent=1 // pred_region
      _
    $region5: #{_lambda_.3} parent=1 // pred_fallthru
      _
    // Predicated region
    $region6: #{_lambda_.3} parent=1 // pred_check
      _
    $region7: #{_lambda_.3} parent=1 // pred_check_branch
      %14 = sbr.rel (0) target = $region9
    $region8: #{_lambda_.3} parent=1 // pred_region
      %s16 = ssub.s32 4864, 4864
      %17 = vsyncadd [#allocation6], %s16
      %s18 = sshll.u32 [#allocation5], 4
      %s19 = int_to_ptr.vmem [resolvable:$true] %s18
      %24 = dma.hbm_to_vmem [thread:$0]  %s1, 4864, %s19, [#allocation6], 128, 128, 8
    $region9: #{_lambda_.3} parent=1 // pred_fallthru
      _
    // Predicated region
    $region10: #{_lambda_.3} parent=1 // pred_check
      _
    $region11: #{_lambda_.3} parent=1 // pred_check_branch
      %26 = sbr.rel (0) target = $region13
    $region12: #{_lambda_.3} parent=1 // pred_region
      _
    $region13: #{_lambda_.3} parent=1 // pred_fallthru
      _
    // Predicated region
    $region14: #{_lambda_.3} parent=1 // pred_check
      _
    $region15: #{_lambda_.3} parent=1 // pred_check_branch
      %28 = sbr.rel (0) target = $region17
    $region16: #{_lambda_.3} parent=1 // pred_region
      _
    $region17: #{_lambda_.3} parent=1 // pred_fallthru
      _
    // Predicated region
    $region18: #{_lambda_.3} parent=1 // pred_check
      _
    $region19: #{_lambda_.3} parent=1 // pred_check_branch
      %30 = sbr.rel (0) target = $region21
    $region20: #{_lambda_.3} parent=1 // pred_region
      _
    $region21: #{_lambda_.3} parent=1 // pred_fallthru
      _
    // Predicated region
    $region22: #{_lambda_.3} parent=1 // pred_check
      _
    $region23: #{_lambda_.3} parent=1 // pred_check_branch
      %32 = sbr.rel (0) target = $region25
    $region24: #{_lambda_.3} parent=1 // pred_region
      %33 = dma.done [#allocation6], 4864
    $region25: #{_lambda_.3} parent=1 // pred_fallthru
      _
    %v34 = vld [vmem:[%s0] sm:$0xff]
    %v35 = vld [vmem:[%s0 + $0x8] sm:$0xff]
    %v36 = vld [vmem:[%s0 + $0x10] sm:$0xff]
    %v37 = vld [vmem:[%s0 + $0x18] sm:$0xff]
    %v38 = vld [vmem:[%s0 + $0x20] sm:$0xff]
    %v39 = vld [vmem:[%s0 + $0x28] sm:$0xff]
    %v40 = vld [vmem:[#allocation5] sm:$0xff]
    %v41 = vld [vmem:[#allocation5 + $0x8] sm:$0xff]
    %v42 = vld [vmem:[#allocation5 + $0x10] sm:$0xff]
    %v43 = vld [vmem:[#allocation5 + $0x18] sm:$0xff]
    %v44 = vld [vmem:[#allocation5 + $0x20] sm:$0xff]
    %v45 = vld [vmem:[#allocation5 + $0x28] sm:$0xff]
    %v46 = vld [vmem:[#allocation5 + $0x30] sm:$0xff]
    %v47 = vld [vmem:[#allocation5 + $0x38] sm:$0xff]
    %v48 = vld [vmem:[#allocation5 + $0x40] sm:$0xff]
    %v49 = vld [vmem:[#allocation5 + $0x48] sm:$0xff]
    %v50 = vld [vmem:[#allocation5 + $0x50] sm:$0xff]
    %v51 = vld [vmem:[#allocation5 + $0x58] sm:$0xff]
    %v52 = vld [vmem:[#allocation5 + $0x60] sm:$0xff]
    %v53 = vld [vmem:[#allocation5 + $0x68] sm:$0xff]
    %v54 = vld [vmem:[#allocation5 + $0x70] sm:$0xff]
    %v55 = vld [vmem:[#allocation5 + $0x78] sm:$0xff]
    %v56 = vld [vmem:[#allocation5 + $0x80] sm:$0xff]
    %v57 = vld [vmem:[#allocation5 + $0x88] sm:$0xff]
    %v58 = vld [vmem:[#allocation5 + $0x90] sm:$0xff]
    %v59 = vld [vmem:[#allocation5 + $0x98] sm:$0xff]
    %v60 = vld [vmem:[#allocation5 + $0xa0] sm:$0xff]
    %v61 = vld [vmem:[#allocation5 + $0xa8] sm:$0xff]
    %v62 = vld [vmem:[#allocation5 + $0xb0] sm:$0xff]
    %v63 = vld [vmem:[#allocation5 + $0xb8] sm:$0xff]
    %v64 = vld [vmem:[#allocation5 + $0xc0] sm:$0xff]
    %v65 = vld [vmem:[#allocation5 + $0xc8] sm:$0xff]
    %v66 = vld [vmem:[#allocation5 + $0xd0] sm:$0xff]
    %v67 = vld [vmem:[#allocation5 + $0xd8] sm:$0xff]
    %v68 = vld [vmem:[#allocation5 + $0xe0] sm:$0xff]
    %v69 = vld [vmem:[#allocation5 + $0xe8] sm:$0xff]
    %v70 = vld [vmem:[#allocation5 + $0xf0] sm:$0xff]
    %v71 = vld [vmem:[#allocation5 + $0xf8] sm:$0xff]
    %v72 = vld [vmem:[#allocation5 + $0x100] sm:$0xff]
    %v73 = vld [vmem:[#allocation5 + $0x108] sm:$0xff]
    %v74 = vld [vmem:[#allocation5 + $0x110] sm:$0xff]
    %v75 = vld [vmem:[#allocation5 + $0x118] sm:$0xff]
    %v76 = vld [vmem:[#allocation5 + $0x120] sm:$0xff]
    %v77 = vld [vmem:[#allocation5 + $0x128] sm:$0xf]
    %v78 = vld [vmem:[%s4] sm:$0x1]
    %v80 = vlaneseq
    %v81 = vshrl.u32 %v80, 7
    %v82 = vsub.s32 0, %v81
    %v83 = vrot.slane %v78, %v82
    %vm85 = vcmask 359424
    %v87 = vsel %vm85, %v36, 0
    %v90 = vsel %vm85, %v39, 0
    %vm92 = vcmask 1043456
    %v94 = vsel %vm92, %v77, 0
    %96 = vmatprep.subr.mxu0 0.0
    %97 = vmatpush1.msra.mxu0 %v55
    %98 = vmatprep.subr.mxu0 0.0
    %99 = vmatpush1.msra.mxu0 %v54
    %100 = vmatprep.subr.mxu0 0.0
    %101 = vmatpush1.msra.mxu0 %v53
    %102 = vmatprep.subr.mxu0 0.0
    %103 = vmatpush1.msra.mxu0 %v52
    %104 = vmatprep.subr.mxu0 0.0
    %105 = vmatpush1.msra.mxu0 %v51
    %106 = vmatprep.subr.mxu0 0.0
    %107 = vmatpush1.msra.mxu0 %v50
    %108 = vmatprep.subr.mxu0 0.0
    %109 = vmatpush1.msra.mxu0 %v49
    %110 = vmatprep.subr.mxu0 0.0
    %111 = vmatpush1.msra.mxu0 %v48
    %112 = vmatprep.subr.mxu0 0.0
    %113 = vmatpush1.msra.mxu0 %v47
    %114 = vmatprep.subr.mxu0 0.0
    %115 = vmatpush1.msra.mxu0 %v46
    %116 = vmatprep.subr.mxu0 0.0
    %117 = vmatpush1.msra.mxu0 %v45
    %118 = vmatprep.subr.mxu0 0.0
    %119 = vmatpush1.msra.mxu0 %v44
    %120 = vmatprep.subr.mxu0 0.0
    %121 = vmatpush1.msra.mxu0 %v43
    %122 = vmatprep.subr.mxu0 0.0
    %123 = vmatpush1.msra.mxu0 %v42
    %124 = vmatprep.subr.mxu0 0.0
    %125 = vmatpush1.msra.mxu0 %v41
    %126 = vmatprep.subr.mxu0 0.0
    %127 = vmatpush1.msra.mxu0 %v40
    %128 = vmatprep.subr.mxu0 0.0
    %129 = vmatpush2.msra.mxu0 %v71
    %130 = vmatprep.subr.mxu0 0.0
    %131 = vmatpush2.msra.mxu0 %v70
    %132 = vmatprep.subr.mxu0 0.0
    %133 = vmatpush2.msra.mxu0 %v69
    %134 = vmatprep.subr.mxu0 0.0
    %135 = vmatpush2.msra.mxu0 %v68
    %136 = vmatprep.subr.mxu0 0.0
    %137 = vmatpush2.msra.mxu0 %v67
    %138 = vmatprep.subr.mxu0 0.0
    %139 = vmatpush2.msra.mxu0 %v66
    %140 = vmatprep.subr.mxu0 0.0
    %141 = vmatpush2.msra.mxu0 %v65
    %142 = vmatprep.subr.mxu0 0.0
    %143 = vmatpush2.msra.mxu0 %v64
    %144 = vmatprep.subr.mxu0 0.0
    %145 = vmatpush2.msra.mxu0 %v63
    %146 = vmatprep.subr.mxu0 0.0
    %147 = vmatpush2.msra.mxu0 %v62
    %148 = vmatprep.subr.mxu0 0.0
    %149 = vmatpush2.msra.mxu0 %v61
    %150 = vmatprep.subr.mxu0 0.0
    %151 = vmatpush2.msra.mxu0 %v60
    %152 = vmatprep.subr.mxu0 0.0
    %153 = vmatpush2.msra.mxu0 %v59
    %154 = vmatprep.subr.mxu0 0.0
    %155 = vmatpush2.msra.mxu0 %v58
    %156 = vmatprep.subr.mxu0 0.0
    %157 = vmatpush2.msra.mxu0 %v57
    %158 = vmatprep.subr.mxu0 0.0
    %159 = vmatpush2.msra.mxu0 %v56
    %160 = vmatprep.mubr.f32.mxu0 %v35
    %161 = vmatmul.mubr.f32.gmra.mxu0 %v34
    %v162 = vpop.f32.mrf.mxu0
    %v163 = vadd.f32 %v83, %v162
    %v164 = vpop.f32.mrf.mxu0
    %165 = vmatprep.mubr.f32.mxu0 %v38
    %166 = vmatmul.mubr.f32.gmra.mxu0 %v37
    %v167 = vpop.f32.mrf.mxu0
    %v168 = vadd.f32 %v83, %v167
    %v169 = vpop.f32.mrf.mxu0
    %170 = vdwg.mxu0
    %171 = vmatprep.subr.mxu0 0.0
    %172 = vmatpush1.msra.mxu0 0.0
    %173 = vmatprep.subr.mxu0 0.0
    %174 = vmatpush1.msra.mxu0 0.0
    %175 = vmatprep.subr.mxu0 0.0
    %176 = vmatpush1.msra.mxu0 0.0
    %177 = vmatprep.subr.mxu0 0.0
    %178 = vmatpush1.msra.mxu0 0.0
    %179 = vmatprep.subr.mxu0 0.0
    %180 = vmatpush1.msra.mxu0 0.0
    %181 = vmatprep.subr.mxu0 0.0
    %182 = vmatpush1.msra.mxu0 0.0
    %183 = vmatprep.subr.mxu0 0.0
    %184 = vmatpush1.msra.mxu0 0.0
    %185 = vmatprep.subr.mxu0 0.0
    %186 = vmatpush1.msra.mxu0 0.0
    %187 = vmatprep.subr.mxu0 0.0
    %188 = vmatpush1.msra.mxu0 0.0
    %189 = vmatprep.subr.mxu0 0.0
    %190 = vmatpush1.msra.mxu0 0.0
    %191 = vmatprep.subr.mxu0 0.0
    %192 = vmatpush1.msra.mxu0 %v94
    %193 = vmatprep.subr.mxu0 0.0
    %194 = vmatpush1.msra.mxu0 %v76
    %195 = vmatprep.subr.mxu0 0.0
    %196 = vmatpush1.msra.mxu0 %v75
    %197 = vmatprep.subr.mxu0 0.0
    %198 = vmatpush1.msra.mxu0 %v74
    %199 = vmatprep.subr.mxu0 0.0
    %200 = vmatpush1.msra.mxu0 %v73
    %201 = vmatprep.subr.mxu0 0.0
    %202 = vmatpush1.msra.mxu0 %v72
    %203 = vmatprep.subr.mxu0 0.0
    %204 = vmatpush2.msra.mxu0 0.0
    %205 = vmatprep.subr.mxu0 0.0
    %206 = vmatpush2.msra.mxu0 0.0
    %207 = vmatprep.subr.mxu0 0.0
    %208 = vmatpush2.msra.mxu0 0.0
    %209 = vmatprep.subr.mxu0 0.0
    %210 = vmatpush2.msra.mxu0 0.0
    %211 = vmatprep.subr.mxu0 0.0
    %212 = vmatpush2.msra.mxu0 0.0
    %213 = vmatprep.subr.mxu0 0.0
    %214 = vmatpush2.msra.mxu0 0.0
    %215 = vmatprep.subr.mxu0 0.0
    %216 = vmatpush2.msra.mxu0 0.0
    %217 = vmatprep.subr.mxu0 0.0
    %218 = vmatpush2.msra.mxu0 0.0
    %219 = vmatprep.subr.mxu0 0.0
    %220 = vmatpush2.msra.mxu0 0.0
    %221 = vmatprep.subr.mxu0 0.0
    %222 = vmatpush2.msra.mxu0 0.0
    %223 = vmatprep.subr.mxu0 0.0
    %224 = vmatpush2.msra.mxu0 0.0
    %225 = vmatprep.subr.mxu0 0.0
    %226 = vmatpush2.msra.mxu0 0.0
    %227 = vmatprep.subr.mxu0 0.0
    %228 = vmatpush2.msra.mxu0 0.0
    %229 = vmatprep.subr.mxu0 0.0
    %230 = vmatpush2.msra.mxu0 0.0
    %231 = vmatprep.subr.mxu0 0.0
    %232 = vmatpush2.msra.mxu0 0.0
    %233 = vmatprep.subr.mxu0 0.0
    %234 = vmatpush2.msra.mxu0 0.0
    %235 = vmatprep.mubr.f32.mxu0 0.0
    %236 = vmatmul.mubr.f32.gmra.mxu0 %v87
    %v237 = vpop.f32.mrf.mxu0
    %v238 = vadd.f32 %v163, %v237
    %v239 = vpop.f32.mrf.mxu0
    %240 = vmatprep.mubr.f32.mxu0 0.0
    %241 = vmatmul.mubr.f32.gmra.mxu0 %v90
    %v242 = vpop.f32.mrf.mxu0
    %v243 = vadd.f32 %v168, %v242
    %v244 = vpop.f32.mrf.mxu0
    %245 = vdwg.mxu0
    %246 = vst [vmem:[#allocation2] sm:$0xff] %v238
    %247 = vst [vmem:[#allocation2 + $0x8] sm:$0xff] %v243
    %v248 = vld [vmem:[%s2] sm:$0xff]
    %v249 = vld [vmem:[%s2 + $0x8] sm:$0xff]
    %v250 = vld [vmem:[%s2 + $0x10] sm:$0xff]
    %v251 = vld [vmem:[%s2 + $0x18] sm:$0xff]
    %v252 = vld [vmem:[%s2 + $0x20] sm:$0xff]
    %v253 = vld [vmem:[%s2 + $0x28] sm:$0xff]
    %v254 = vld [vmem:[%s2 + $0x30] sm:$0xff]
    %v255 = vld [vmem:[%s2 + $0x38] sm:$0xff]
    %vm256 = vcmask 523264
    %v258 = vsel %vm256, 0.0, 0
    %260 = vmatprep.subr.mxu0 0.0
    %261 = vmatpush1.msra.mxu0 0.0
    %262 = vmatprep.subr.mxu0 0.0
    %263 = vmatpush1.msra.mxu0 0.0
    %264 = vmatprep.subr.mxu0 0.0
    %265 = vmatpush1.msra.mxu0 0.0
    %266 = vmatprep.subr.mxu0 0.0
    %267 = vmatpush1.msra.mxu0 0.0
    %268 = vmatprep.subr.mxu0 0.0
    %269 = vmatpush1.msra.mxu0 0.0
    %270 = vmatprep.subr.mxu0 0.0
    %271 = vmatpush1.msra.mxu0 0.0
    %272 = vmatprep.subr.mxu0 0.0
    %273 = vmatpush1.msra.mxu0 0.0
    %274 = vmatprep.subr.mxu0 0.0
    %275 = vmatpush1.msra.mxu0 0.0
    %276 = vmatprep.subr.mxu0 0.0
    %277 = vmatpush1.msra.mxu0 %v255
    %278 = vmatprep.subr.mxu0 0.0
    %279 = vmatpush1.msra.mxu0 %v254
    %280 = vmatprep.subr.mxu0 0.0
    %281 = vmatpush1.msra.mxu0 %v253
    %282 = vmatprep.subr.mxu0 0.0
    %283 = vmatpush1.msra.mxu0 %v252
    %284 = vmatprep.subr.mxu0 0.0
    %285 = vmatpush1.msra.mxu0 %v251
    %286 = vmatprep.subr.mxu0 0.0
    %287 = vmatpush1.msra.mxu0 %v250
    %288 = vmatprep.subr.mxu0 0.0
    %289 = vmatpush1.msra.mxu0 %v249
    %290 = vmatprep.subr.mxu0 0.0
    %291 = vmatpush1.msra.mxu0 %v248
    %292 = vmatprep.subr.mxu0 0.0
    %293 = vmatpush2.msra.mxu0 0.0
    %294 = vmatprep.subr.mxu0 0.0
    %295 = vmatpush2.msra.mxu0 0.0
    %296 = vmatprep.subr.mxu0 0.0
    %297 = vmatpush2.msra.mxu0 0.0
    %298 = vmatprep.subr.mxu0 0.0
    %299 = vmatpush2.msra.mxu0 0.0
    %300 = vmatprep.subr.mxu0 0.0
    %301 = vmatpush2.msra.mxu0 0.0
    %302 = vmatprep.subr.mxu0 0.0
    %303 = vmatpush2.msra.mxu0 0.0
    %304 = vmatprep.subr.mxu0 0.0
    %305 = vmatpush2.msra.mxu0 0.0
    %306 = vmatprep.subr.mxu0 0.0
    %307 = vmatpush2.msra.mxu0 0.0
    %308 = vmatprep.subr.mxu0 0.0
    %309 = vmatpush2.msra.mxu0 0.0
    %310 = vmatprep.subr.mxu0 0.0
    %311 = vmatpush2.msra.mxu0 0.0
    %312 = vmatprep.subr.mxu0 0.0
    %313 = vmatpush2.msra.mxu0 0.0
    %314 = vmatprep.subr.mxu0 0.0
    %315 = vmatpush2.msra.mxu0 0.0
    %316 = vmatprep.subr.mxu0 0.0
    %317 = vmatpush2.msra.mxu0 0.0
    %318 = vmatprep.subr.mxu0 0.0
    %319 = vmatpush2.msra.mxu0 0.0
    %320 = vmatprep.subr.mxu0 0.0
    %321 = vmatpush2.msra.mxu0 0.0
    %322 = vmatprep.subr.mxu0 0.0
    %323 = vmatpush2.msra.mxu0 0.0
    %324 = vmatprep.mubr.f32.mxu0 0.0
    %325 = vmatmul.mubr.f32.gmra.mxu0 %v258
    %v326 = vpop.f32.mrf.mxu0
    %v327 = vadd.f32 0.0, %v326
    %v328 = vpop.f32.mrf.mxu0
    %329 = vdwg.mxu0
    %v330 = vld [vmem:[%s3] sm:$0xff]
    %v331 = vld [vmem:[%s3 + $0x8] sm:$0xff]
    %v332 = vld [vmem:[%s3 + $0x10] sm:$0xff]
    %v333 = vld [vmem:[%s3 + $0x18] sm:$0xff]
    %v334 = vld [vmem:[%s3 + $0x20] sm:$0xff]
    %v335 = vld [vmem:[%s3 + $0x28] sm:$0xff]
    %v336 = vld [vmem:[%s3 + $0x30] sm:$0xff]
    %v337 = vld [vmem:[%s3 + $0x38] sm:$0xff]
    %338 = vmatprep.subr.mxu0 0.0
    %339 = vmatpush1.msra.mxu0 0.0
    %340 = vmatprep.subr.mxu0 0.0
    %341 = vmatpush1.msra.mxu0 0.0
    %342 = vmatprep.subr.mxu0 0.0
    %343 = vmatpush1.msra.mxu0 0.0
    %344 = vmatprep.subr.mxu0 0.0
    %345 = vmatpush1.msra.mxu0 0.0
    %346 = vmatprep.subr.mxu0 0.0
    %347 = vmatpush1.msra.mxu0 0.0
    %348 = vmatprep.subr.mxu0 0.0
    %349 = vmatpush1.msra.mxu0 0.0
    %350 = vmatprep.subr.mxu0 0.0
    %351 = vmatpush1.msra.mxu0 0.0
    %352 = vmatprep.subr.mxu0 0.0
    %353 = vmatpush1.msra.mxu0 0.0
    %354 = vmatprep.subr.mxu0 0.0
    %355 = vmatpush1.msra.mxu0 %v337
    %356 = vmatprep.subr.mxu0 0.0
    %357 = vmatpush1.msra.mxu0 %v336
    %358 = vmatprep.subr.mxu0 0.0
    %359 = vmatpush1.msra.mxu0 %v335
    %360 = vmatprep.subr.mxu0 0.0
    %361 = vmatpush1.msra.mxu0 %v334
    %362 = vmatprep.subr.mxu0 0.0
    %363 = vmatpush1.msra.mxu0 %v333
    %364 = vmatprep.subr.mxu0 0.0
    %365 = vmatpush1.msra.mxu0 %v332
    %366 = vmatprep.subr.mxu0 0.0
    %367 = vmatpush1.msra.mxu0 %v331
    %368 = vmatprep.subr.mxu0 0.0
    %369 = vmatpush1.msra.mxu0 %v330
    %370 = vmatprep.subr.mxu0 0.0
    %371 = vmatpush2.msra.mxu0 0.0
    %372 = vmatprep.subr.mxu0 0.0
    %373 = vmatpush2.msra.mxu0 0.0
    %374 = vmatprep.subr.mxu0 0.0
    %375 = vmatpush2.msra.mxu0 0.0
    %376 = vmatprep.subr.mxu0 0.0
    %377 = vmatpush2.msra.mxu0 0.0
    %378 = vmatprep.subr.mxu0 0.0
    %379 = vmatpush2.msra.mxu0 0.0
    %380 = vmatprep.subr.mxu0 0.0
    %381 = vmatpush2.msra.mxu0 0.0
    %382 = vmatprep.subr.mxu0 0.0
    %383 = vmatpush2.msra.mxu0 0.0
    %384 = vmatprep.subr.mxu0 0.0
    %385 = vmatpush2.msra.mxu0 0.0
    %386 = vmatprep.subr.mxu0 0.0
    %387 = vmatpush2.msra.mxu0 0.0
    %388 = vmatprep.subr.mxu0 0.0
    %389 = vmatpush2.msra.mxu0 0.0
    %390 = vmatprep.subr.mxu0 0.0
    %391 = vmatpush2.msra.mxu0 0.0
    %392 = vmatprep.subr.mxu0 0.0
    %393 = vmatpush2.msra.mxu0 0.0
    %394 = vmatprep.subr.mxu0 0.0
    %395 = vmatpush2.msra.mxu0 0.0
    %396 = vmatprep.subr.mxu0 0.0
    %397 = vmatpush2.msra.mxu0 0.0
    %398 = vmatprep.subr.mxu0 0.0
    %399 = vmatpush2.msra.mxu0 0.0
    %400 = vmatprep.subr.mxu0 0.0
    %401 = vmatpush2.msra.mxu0 0.0
    %402 = vmatprep.mubr.f32.mxu0 0.0
    %403 = vmatmul.mubr.f32.gmra.mxu0 %v258
    %v404 = vpop.f32.mrf.mxu0
    %v405 = vadd.f32 0.0, %v404
    %v406 = vpop.f32.mrf.mxu0
    %407 = vdwg.mxu0
    %v408 = vld [vmem:[#allocation2] sm:$0x3]
    %v409 = vld [vmem:[#allocation2 + $0xe] sm:$0x3]
    %v410 = vadd.f32 %v408, %v327
    %v411 = vtanh.pop %v410
    %v412 = vmul.f32 %v411, 0.5
    %v413 = vadd.f32 %v412, 0.0
    %415 = vrot.lane.b32.xlu0 %v405, 64
    %v416 = vpop.permute.xlu0 %415
    %v418 = vadd.f32 %v409, %v416
    %v419 = vtanh.pop %v418
    %v420 = vmul.f32 %v419, 0.5
    %v421 = vadd.f32 %v420, 0.0
    %vm422 = vcmask 517120
    %423 = vst.msk [vmem:[#allocation3] sm:$0x3] %vm422, %v413
    %425 = vrot.lane.b32.xlu0 %v421, 64
    %v426 = vpop.permute.xlu0 %425
    %428 = vst.msk [vmem:[#allocation4 + $0xe] sm:$0x3] %vm422, %v426
    %v429 = vld [vmem:[%s2] sm:$0xff]
    %v430 = vld [vmem:[%s2 + $0x8] sm:$0xff]
    %v431 = vld [vmem:[%s2 + $0x10] sm:$0xff]
    %v432 = vld [vmem:[%s2 + $0x18] sm:$0xff]
    %v433 = vld [vmem:[%s2 + $0x20] sm:$0xff]
    %v434 = vld [vmem:[%s2 + $0x28] sm:$0xff]
    %v435 = vld [vmem:[%s2 + $0x30] sm:$0xff]
    %v436 = vld [vmem:[%s2 + $0x38] sm:$0xff]
    %v438 = vsel %vm256, %v413, 0
    %440 = vmatprep.subr.mxu0 0.0
    %441 = vmatpush1.msra.mxu0 0.0
    %442 = vmatprep.subr.mxu0 0.0
    %443 = vmatpush1.msra.mxu0 0.0
    %444 = vmatprep.subr.mxu0 0.0
    %445 = vmatpush1.msra.mxu0 0.0
    %446 = vmatprep.subr.mxu0 0.0
    %447 = vmatpush1.msra.mxu0 0.0
    %448 = vmatprep.subr.mxu0 0.0
    %449 = vmatpush1.msra.mxu0 0.0
    %450 = vmatprep.subr.mxu0 0.0
    %451 = vmatpush1.msra.mxu0 0.0
    %452 = vmatprep.subr.mxu0 0.0
    %453 = vmatpush1.msra.mxu0 0.0
    %454 = vmatprep.subr.mxu0 0.0
    %455 = vmatpush1.msra.mxu0 0.0
    %456 = vmatprep.subr.mxu0 0.0
    %457 = vmatpush1.msra.mxu0 %v436
    %458 = vmatprep.subr.mxu0 0.0
    %459 = vmatpush1.msra.mxu0 %v435
    %460 = vmatprep.subr.mxu0 0.0
    %461 = vmatpush1.msra.mxu0 %v434
    %462 = vmatprep.subr.mxu0 0.0
    %463 = vmatpush1.msra.mxu0 %v433
    %464 = vmatprep.subr.mxu0 0.0
    %465 = vmatpush1.msra.mxu0 %v432
    %466 = vmatprep.subr.mxu0 0.0
    %467 = vmatpush1.msra.mxu0 %v431
    %468 = vmatprep.subr.mxu0 0.0
    %469 = vmatpush1.msra.mxu0 %v430
    %470 = vmatprep.subr.mxu0 0.0
    %471 = vmatpush1.msra.mxu0 %v429
    %472 = vmatprep.subr.mxu0 0.0
    %473 = vmatpush2.msra.mxu0 0.0
    %474 = vmatprep.subr.mxu0 0.0
    %475 = vmatpush2.msra.mxu0 0.0
    %476 = vmatprep.subr.mxu0 0.0
    %477 = vmatpush2.msra.mxu0 0.0
    %478 = vmatprep.subr.mxu0 0.0
    %479 = vmatpush2.msra.mxu0 0.0
    %480 = vmatprep.subr.mxu0 0.0
    %481 = vmatpush2.msra.mxu0 0.0
    %482 = vmatprep.subr.mxu0 0.0
    %483 = vmatpush2.msra.mxu0 0.0
    %484 = vmatprep.subr.mxu0 0.0
    %485 = vmatpush2.msra.mxu0 0.0
    %486 = vmatprep.subr.mxu0 0.0
    %487 = vmatpush2.msra.mxu0 0.0
    %488 = vmatprep.subr.mxu0 0.0
    %489 = vmatpush2.msra.mxu0 0.0
    %490 = vmatprep.subr.mxu0 0.0
    %491 = vmatpush2.msra.mxu0 0.0
    %492 = vmatprep.subr.mxu0 0.0
    %493 = vmatpush2.msra.mxu0 0.0
    %494 = vmatprep.subr.mxu0 0.0
    %495 = vmatpush2.msra.mxu0 0.0
    %496 = vmatprep.subr.mxu0 0.0
    %497 = vmatpush2.msra.mxu0 0.0
    %498 = vmatprep.subr.mxu0 0.0
    %499 = vmatpush2.msra.mxu0 0.0
    %500 = vmatprep.subr.mxu0 0.0
    %501 = vmatpush2.msra.mxu0 0.0
    %502 = vmatprep.subr.mxu0 0.0
    %503 = vmatpush2.msra.mxu0 0.0
    %504 = vmatprep.mubr.f32.mxu0 0.0
    %505 = vmatmul.mubr.f32.gmra.mxu0 %v438
    %v506 = vpop.f32.mrf.mxu0
    %v507 = vadd.f32 0.0, %v506
    %v508 = vpop.f32.mrf.mxu0
    %509 = vdwg.mxu0
    %v510 = vld [vmem:[%s3] sm:$0xff]
    %v511 = vld [vmem:[%s3 + $0x8] sm:$0xff]
    %v512 = vld [vmem:[%s3 + $0x10] sm:$0xff]
    %v513 = vld [vmem:[%s3 + $0x18] sm:$0xff]
    %v514 = vld [vmem:[%s3 + $0x20] sm:$0xff]
    %v515 = vld [vmem:[%s3 + $0x28] sm:$0xff]
    %v516 = vld [vmem:[%s3 + $0x30] sm:$0xff]
    %v517 = vld [vmem:[%s3 + $0x38] sm:$0xff]
    %v518 = vsel %vm256, %v426, 0
    %520 = vmatprep.subr.mxu0 0.0
    %521 = vmatpush1.msra.mxu0 0.0
    %522 = vmatprep.subr.mxu0 0.0
    %523 = vmatpush1.msra.mxu0 0.0
    %524 = vmatprep.subr.mxu0 0.0
    %525 = vmatpush1.msra.mxu0 0.0
    %526 = vmatprep.subr.mxu0 0.0
    %527 = vmatpush1.msra.mxu0 0.0
    %528 = vmatprep.subr.mxu0 0.0
    %529 = vmatpush1.msra.mxu0 0.0
    %530 = vmatprep.subr.mxu0 0.0
    %531 = vmatpush1.msra.mxu0 0.0
    %532 = vmatprep.subr.mxu0 0.0
    %533 = vmatpush1.msra.mxu0 0.0
    %534 = vmatprep.subr.mxu0 0.0
    %535 = vmatpush1.msra.mxu0 0.0
    %536 = vmatprep.subr.mxu0 0.0
    %537 = vmatpush1.msra.mxu0 %v517
    %538 = vmatprep.subr.mxu0 0.0
    %539 = vmatpush1.msra.mxu0 %v516
    %540 = vmatprep.subr.mxu0 0.0
    %541 = vmatpush1.msra.mxu0 %v515
    %542 = vmatprep.subr.mxu0 0.0
    %543 = vmatpush1.msra.mxu0 %v514
    %544 = vmatprep.subr.mxu0 0.0
    %545 = vmatpush1.msra.mxu0 %v513
    %546 = vmatprep.subr.mxu0 0.0
    %547 = vmatpush1.msra.mxu0 %v512
    %548 = vmatprep.subr.mxu0 0.0
    %549 = vmatpush1.msra.mxu0 %v511
    %550 = vmatprep.subr.mxu0 0.0
    %551 = vmatpush1.msra.mxu0 %v510
    %552 = vmatprep.subr.mxu0 0.0
    %553 = vmatpush2.msra.mxu0 0.0
    %554 = vmatprep.subr.mxu0 0.0
    %555 = vmatpush2.msra.mxu0 0.0
    %556 = vmatprep.subr.mxu0 0.0
    %557 = vmatpush2.msra.mxu0 0.0
    %558 = vmatprep.subr.mxu0 0.0
    %559 = vmatpush2.msra.mxu0 0.0
    %560 = vmatprep.subr.mxu0 0.0
    %561 = vmatpush2.msra.mxu0 0.0
    %562 = vmatprep.subr.mxu0 0.0
    %563 = vmatpush2.msra.mxu0 0.0
    %564 = vmatprep.subr.mxu0 0.0
    %565 = vmatpush2.msra.mxu0 0.0
    %566 = vmatprep.subr.mxu0 0.0
    %567 = vmatpush2.msra.mxu0 0.0
    %568 = vmatprep.subr.mxu0 0.0
    %569 = vmatpush2.msra.mxu0 0.0
    %570 = vmatprep.subr.mxu0 0.0
    %571 = vmatpush2.msra.mxu0 0.0
    %572 = vmatprep.subr.mxu0 0.0
    %573 = vmatpush2.msra.mxu0 0.0
    %574 = vmatprep.subr.mxu0 0.0
    %575 = vmatpush2.msra.mxu0 0.0
    %576 = vmatprep.subr.mxu0 0.0
    %577 = vmatpush2.msra.mxu0 0.0
    %578 = vmatprep.subr.mxu0 0.0
    %579 = vmatpush2.msra.mxu0 0.0
    %580 = vmatprep.subr.mxu0 0.0
    %581 = vmatpush2.msra.mxu0 0.0
    %582 = vmatprep.subr.mxu0 0.0
    %583 = vmatpush2.msra.mxu0 0.0
    %584 = vmatprep.mubr.f32.mxu0 0.0
    %585 = vmatmul.mubr.f32.gmra.mxu0 %v518
    %v586 = vpop.f32.mrf.mxu0
    %v587 = vadd.f32 0.0, %v586
    %v588 = vpop.f32.mrf.mxu0
    %589 = vdwg.mxu0
    %v590 = vld [vmem:[#allocation2 + $0x2] sm:$0x3]
    %v591 = vld [vmem:[#allocation2 + $0xc] sm:$0x3]
    %v592 = vmul.f32 %v413, 0.5
    %v593 = vadd.f32 %v590, %v507
    %v594 = vtanh.pop %v593
    %v595 = vmul.f32 %v594, 0.5
    %v596 = vadd.f32 %v592, %v595
    %v597 = vmul.f32 %v421, 0.5
    %599 = vrot.lane.b32.xlu0 %v587, 64
    %v600 = vpop.permute.xlu0 %599
    %v602 = vadd.f32 %v591, %v600
    %v603 = vtanh.pop %v602
    %v604 = vmul.f32 %v603, 0.5
    %v605 = vadd.f32 %v597, %v604
    %606 = vst.msk [vmem:[#allocation3 + $0x2] sm:$0x3] %vm422, %v596
    %608 = vrot.lane.b32.xlu0 %v605, 64
    %v609 = vpop.permute.xlu0 %608
    %611 = vst.msk [vmem:[#allocation4 + $0xc] sm:$0x3] %vm422, %v609
    %v612 = vld [vmem:[%s2] sm:$0xff]
    %v613 = vld [vmem:[%s2 + $0x8] sm:$0xff]
    %v614 = vld [vmem:[%s2 + $0x10] sm:$0xff]
    %v615 = vld [vmem:[%s2 + $0x18] sm:$0xff]
    %v616 = vld [vmem:[%s2 + $0x20] sm:$0xff]
    %v617 = vld [vmem:[%s2 + $0x28] sm:$0xff]
    %v618 = vld [vmem:[%s2 + $0x30] sm:$0xff]
    %v619 = vld [vmem:[%s2 + $0x38] sm:$0xff]
    %v621 = vsel %vm256, %v596, 0
    %623 = vmatprep.subr.mxu0 0.0
    %624 = vmatpush1.msra.mxu0 0.0
    %625 = vmatprep.subr.mxu0 0.0
    %626 = vmatpush1.msra.mxu0 0.0
    %627 = vmatprep.subr.mxu0 0.0
    %628 = vmatpush1.msra.mxu0 0.0
    %629 = vmatprep.subr.mxu0 0.0
    %630 = vmatpush1.msra.mxu0 0.0
    %631 = vmatprep.subr.mxu0 0.0
    %632 = vmatpush1.msra.mxu0 0.0
    %633 = vmatprep.subr.mxu0 0.0
    %634 = vmatpush1.msra.mxu0 0.0
    %635 = vmatprep.subr.mxu0 0.0
    %636 = vmatpush1.msra.mxu0 0.0
    %637 = vmatprep.subr.mxu0 0.0
    %638 = vmatpush1.msra.mxu0 0.0
    %639 = vmatprep.subr.mxu0 0.0
    %640 = vmatpush1.msra.mxu0 %v619
    %641 = vmatprep.subr.mxu0 0.0
    %642 = vmatpush1.msra.mxu0 %v618
    %643 = vmatprep.subr.mxu0 0.0
    %644 = vmatpush1.msra.mxu0 %v617
    %645 = vmatprep.subr.mxu0 0.0
    %646 = vmatpush1.msra.mxu0 %v616
    %647 = vmatprep.subr.mxu0 0.0
    %648 = vmatpush1.msra.mxu0 %v615
    %649 = vmatprep.subr.mxu0 0.0
    %650 = vmatpush1.msra.mxu0 %v614
    %651 = vmatprep.subr.mxu0 0.0
    %652 = vmatpush1.msra.mxu0 %v613
    %653 = vmatprep.subr.mxu0 0.0
    %654 = vmatpush1.msra.mxu0 %v612
    %655 = vmatprep.subr.mxu0 0.0
    %656 = vmatpush2.msra.mxu0 0.0
    %657 = vmatprep.subr.mxu0 0.0
    %658 = vmatpush2.msra.mxu0 0.0
    %659 = vmatprep.subr.mxu0 0.0
    %660 = vmatpush2.msra.mxu0 0.0
    %661 = vmatprep.subr.mxu0 0.0
    %662 = vmatpush2.msra.mxu0 0.0
    %663 = vmatprep.subr.mxu0 0.0
    %664 = vmatpush2.msra.mxu0 0.0
    %665 = vmatprep.subr.mxu0 0.0
    %666 = vmatpush2.msra.mxu0 0.0
    %667 = vmatprep.subr.mxu0 0.0
    %668 = vmatpush2.msra.mxu0 0.0
    %669 = vmatprep.subr.mxu0 0.0
    %670 = vmatpush2.msra.mxu0 0.0
    %671 = vmatprep.subr.mxu0 0.0
    %672 = vmatpush2.msra.mxu0 0.0
    %673 = vmatprep.subr.mxu0 0.0
    %674 = vmatpush2.msra.mxu0 0.0
    %675 = vmatprep.subr.mxu0 0.0
    %676 = vmatpush2.msra.mxu0 0.0
    %677 = vmatprep.subr.mxu0 0.0
    %678 = vmatpush2.msra.mxu0 0.0
    %679 = vmatprep.subr.mxu0 0.0
    %680 = vmatpush2.msra.mxu0 0.0
    %681 = vmatprep.subr.mxu0 0.0
    %682 = vmatpush2.msra.mxu0 0.0
    %683 = vmatprep.subr.mxu0 0.0
    %684 = vmatpush2.msra.mxu0 0.0
    %685 = vmatprep.subr.mxu0 0.0
    %686 = vmatpush2.msra.mxu0 0.0
    %687 = vmatprep.mubr.f32.mxu0 0.0
    %688 = vmatmul.mubr.f32.gmra.mxu0 %v621
    %v689 = vpop.f32.mrf.mxu0
    %v690 = vadd.f32 0.0, %v689
    %v691 = vpop.f32.mrf.mxu0
    %692 = vdwg.mxu0
    %v693 = vld [vmem:[%s3] sm:$0xff]
    %v694 = vld [vmem:[%s3 + $0x8] sm:$0xff]
    %v695 = vld [vmem:[%s3 + $0x10] sm:$0xff]
    %v696 = vld [vmem:[%s3 + $0x18] sm:$0xff]
    %v697 = vld [vmem:[%s3 + $0x20] sm:$0xff]
    %v698 = vld [vmem:[%s3 + $0x28] sm:$0xff]
    %v699 = vld [vmem:[%s3 + $0x30] sm:$0xff]
    %v700 = vld [vmem:[%s3 + $0x38] sm:$0xff]
    %v701 = vsel %vm256, %v609, 0
    %703 = vmatprep.subr.mxu0 0.0
    %704 = vmatpush1.msra.mxu0 0.0
    %705 = vmatprep.subr.mxu0 0.0
    %706 = vmatpush1.msra.mxu0 0.0
    %707 = vmatprep.subr.mxu0 0.0
    %708 = vmatpush1.msra.mxu0 0.0
    %709 = vmatprep.subr.mxu0 0.0
    %710 = vmatpush1.msra.mxu0 0.0
    %711 = vmatprep.subr.mxu0 0.0
    %712 = vmatpush1.msra.mxu0 0.0
    %713 = vmatprep.subr.mxu0 0.0
    %714 = vmatpush1.msra.mxu0 0.0
    %715 = vmatprep.subr.mxu0 0.0
    %716 = vmatpush1.msra.mxu0 0.0
    %717 = vmatprep.subr.mxu0 0.0
    %718 = vmatpush1.msra.mxu0 0.0
    %719 = vmatprep.subr.mxu0 0.0
    %720 = vmatpush1.msra.mxu0 %v700
    %721 = vmatprep.subr.mxu0 0.0
    %722 = vmatpush1.msra.mxu0 %v699
    %723 = vmatprep.subr.mxu0 0.0
    %724 = vmatpush1.msra.mxu0 %v698
    %725 = vmatprep.subr.mxu0 0.0
    %726 = vmatpush1.msra.mxu0 %v697
    %727 = vmatprep.subr.mxu0 0.0
    %728 = vmatpush1.msra.mxu0 %v696
    %729 = vmatprep.subr.mxu0 0.0
    %730 = vmatpush1.msra.mxu0 %v695
    %731 = vmatprep.subr.mxu0 0.0
    %732 = vmatpush1.msra.mxu0 %v694
    %733 = vmatprep.subr.mxu0 0.0
    %734 = vmatpush1.msra.mxu0 %v693
    %735 = vmatprep.subr.mxu0 0.0
    %736 = vmatpush2.msra.mxu0 0.0
    %737 = vmatprep.subr.mxu0 0.0
    %738 = vmatpush2.msra.mxu0 0.0
    %739 = vmatprep.subr.mxu0 0.0
    %740 = vmatpush2.msra.mxu0 0.0
    %741 = vmatprep.subr.mxu0 0.0
    %742 = vmatpush2.msra.mxu0 0.0
    %743 = vmatprep.subr.mxu0 0.0
    %744 = vmatpush2.msra.mxu0 0.0
    %745 = vmatprep.subr.mxu0 0.0
    %746 = vmatpush2.msra.mxu0 0.0
    %747 = vmatprep.subr.mxu0 0.0
    %748 = vmatpush2.msra.mxu0 0.0
    %749 = vmatprep.subr.mxu0 0.0
    %750 = vmatpush2.msra.mxu0 0.0
    %751 = vmatprep.subr.mxu0 0.0
    %752 = vmatpush2.msra.mxu0 0.0
    %753 = vmatprep.subr.mxu0 0.0
    %754 = vmatpush2.msra.mxu0 0.0
    %755 = vmatprep.subr.mxu0 0.0
    %756 = vmatpush2.msra.mxu0 0.0
    %757 = vmatprep.subr.mxu0 0.0
    %758 = vmatpush2.msra.mxu0 0.0
    %759 = vmatprep.subr.mxu0 0.0
    %760 = vmatpush2.msra.mxu0 0.0
    %761 = vmatprep.subr.mxu0 0.0
    %762 = vmatpush2.msra.mxu0 0.0
    %763 = vmatprep.subr.mxu0 0.0
    %764 = vmatpush2.msra.mxu0 0.0
    %765 = vmatprep.subr.mxu0 0.0
    %766 = vmatpush2.msra.mxu0 0.0
    %767 = vmatprep.mubr.f32.mxu0 0.0
    %768 = vmatmul.mubr.f32.gmra.mxu0 %v701
    %v769 = vpop.f32.mrf.mxu0
    %v770 = vadd.f32 0.0, %v769
    %v771 = vpop.f32.mrf.mxu0
    %772 = vdwg.mxu0
    %v773 = vld [vmem:[#allocation2 + $0x4] sm:$0x3]
    %v774 = vld [vmem:[#allocation2 + $0xa] sm:$0x3]
    %v775 = vmul.f32 %v596, 0.5
    %v776 = vadd.f32 %v773, %v690
    %v777 = vtanh.pop %v776
    %v778 = vmul.f32 %v777, 0.5
    %v779 = vadd.f32 %v775, %v778
    %v780 = vmul.f32 %v605, 0.5
    %782 = vrot.lane.b32.xlu0 %v770, 64
    %v783 = vpop.permute.xlu0 %782
    %v785 = vadd.f32 %v774, %v783
    %v786 = vtanh.pop %v785
    %v787 = vmul.f32 %v786, 0.5
    %v788 = vadd.f32 %v780, %v787
    %789 = vst.msk [vmem:[#allocation3 + $0x4] sm:$0x3] %vm422, %v779
    %791 = vrot.lane.b32.xlu0 %v788, 64
    %v792 = vpop.permute.xlu0 %791
    %794 = vst.msk [vmem:[#allocation4 + $0xa] sm:$0x3] %vm422, %v792
    %v795 = vld [vmem:[%s2] sm:$0xff]
    %v796 = vld [vmem:[%s2 + $0x8] sm:$0xff]
    %v797 = vld [vmem:[%s2 + $0x10] sm:$0xff]
    %v798 = vld [vmem:[%s2 + $0x18] sm:$0xff]
    %v799 = vld [vmem:[%s2 + $0x20] sm:$0xff]
    %v800 = vld [vmem:[%s2 + $0x28] sm:$0xff]
    %v801 = vld [vmem:[%s2 + $0x30] sm:$0xff]
    %v802 = vld [vmem:[%s2 + $0x38] sm:$0xff]
    %v804 = vsel %vm256, %v779, 0
    %806 = vmatprep.subr.mxu0 0.0
    %807 = vmatpush1.msra.mxu0 0.0
    %808 = vmatprep.subr.mxu0 0.0
    %809 = vmatpush1.msra.mxu0 0.0
    %810 = vmatprep.subr.mxu0 0.0
    %811 = vmatpush1.msra.mxu0 0.0
    %812 = vmatprep.subr.mxu0 0.0
    %813 = vmatpush1.msra.mxu0 0.0
    %814 = vmatprep.subr.mxu0 0.0
    %815 = vmatpush1.msra.mxu0 0.0
    %816 = vmatprep.subr.mxu0 0.0
    %817 = vmatpush1.msra.mxu0 0.0
    %818 = vmatprep.subr.mxu0 0.0
    %819 = vmatpush1.msra.mxu0 0.0
    %820 = vmatprep.subr.mxu0 0.0
    %821 = vmatpush1.msra.mxu0 0.0
    %822 = vmatprep.subr.mxu0 0.0
    %823 = vmatpush1.msra.mxu0 %v802
    %824 = vmatprep.subr.mxu0 0.0
    %825 = vmatpush1.msra.mxu0 %v801
    %826 = vmatprep.subr.mxu0 0.0
    %827 = vmatpush1.msra.mxu0 %v800
    %828 = vmatprep.subr.mxu0 0.0
    %829 = vmatpush1.msra.mxu0 %v799
    %830 = vmatprep.subr.mxu0 0.0
    %831 = vmatpush1.msra.mxu0 %v798
    %832 = vmatprep.subr.mxu0 0.0
    %833 = vmatpush1.msra.mxu0 %v797
    %834 = vmatprep.subr.mxu0 0.0
    %835 = vmatpush1.msra.mxu0 %v796
    %836 = vmatprep.subr.mxu0 0.0
    %837 = vmatpush1.msra.mxu0 %v795
    %838 = vmatprep.subr.mxu0 0.0
    %839 = vmatpush2.msra.mxu0 0.0
    %840 = vmatprep.subr.mxu0 0.0
    %841 = vmatpush2.msra.mxu0 0.0
    %842 = vmatprep.subr.mxu0 0.0
    %843 = vmatpush2.msra.mxu0 0.0
    %844 = vmatprep.subr.mxu0 0.0
    %845 = vmatpush2.msra.mxu0 0.0
    %846 = vmatprep.subr.mxu0 0.0
    %847 = vmatpush2.msra.mxu0 0.0
    %848 = vmatprep.subr.mxu0 0.0
    %849 = vmatpush2.msra.mxu0 0.0
    %850 = vmatprep.subr.mxu0 0.0
    %851 = vmatpush2.msra.mxu0 0.0
    %852 = vmatprep.subr.mxu0 0.0
    %853 = vmatpush2.msra.mxu0 0.0
    %854 = vmatprep.subr.mxu0 0.0
    %855 = vmatpush2.msra.mxu0 0.0
    %856 = vmatprep.subr.mxu0 0.0
    %857 = vmatpush2.msra.mxu0 0.0
    %858 = vmatprep.subr.mxu0 0.0
    %859 = vmatpush2.msra.mxu0 0.0
    %860 = vmatprep.subr.mxu0 0.0
    %861 = vmatpush2.msra.mxu0 0.0
    %862 = vmatprep.subr.mxu0 0.0
    %863 = vmatpush2.msra.mxu0 0.0
    %864 = vmatprep.subr.mxu0 0.0
    %865 = vmatpush2.msra.mxu0 0.0
    %866 = vmatprep.subr.mxu0 0.0
    %867 = vmatpush2.msra.mxu0 0.0
    %868 = vmatprep.subr.mxu0 0.0
    %869 = vmatpush2.msra.mxu0 0.0
    %870 = vmatprep.mubr.f32.mxu0 0.0
    %871 = vmatmul.mubr.f32.gmra.mxu0 %v804
    %v872 = vpop.f32.mrf.mxu0
    %v873 = vadd.f32 0.0, %v872
    %v874 = vpop.f32.mrf.mxu0
    %875 = vdwg.mxu0
    %v876 = vld [vmem:[%s3] sm:$0xff]
    %v877 = vld [vmem:[%s3 + $0x8] sm:$0xff]
    %v878 = vld [vmem:[%s3 + $0x10] sm:$0xff]
    %v879 = vld [vmem:[%s3 + $0x18] sm:$0xff]
    %v880 = vld [vmem:[%s3 + $0x20] sm:$0xff]
    %v881 = vld [vmem:[%s3 + $0x28] sm:$0xff]
    %v882 = vld [vmem:[%s3 + $0x30] sm:$0xff]
    %v883 = vld [vmem:[%s3 + $0x38] sm:$0xff]
    %v884 = vsel %vm256, %v792, 0
    %886 = vmatprep.subr.mxu0 0.0
    %887 = vmatpush1.msra.mxu0 0.0
    %888 = vmatprep.subr.mxu0 0.0
    %889 = vmatpush1.msra.mxu0 0.0
    %890 = vmatprep.subr.mxu0 0.0
    %891 = vmatpush1.msra.mxu0 0.0
    %892 = vmatprep.subr.mxu0 0.0
    %893 = vmatpush1.msra.mxu0 0.0
    %894 = vmatprep.subr.mxu0 0.0
    %895 = vmatpush1.msra.mxu0 0.0
    %896 = vmatprep.subr.mxu0 0.0
    %897 = vmatpush1.msra.mxu0 0.0
    %898 = vmatprep.subr.mxu0 0.0
    %899 = vmatpush1.msra.mxu0 0.0
    %900 = vmatprep.subr.mxu0 0.0
    %901 = vmatpush1.msra.mxu0 0.0
    %902 = vmatprep.subr.mxu0 0.0
    %903 = vmatpush1.msra.mxu0 %v883
    %904 = vmatprep.subr.mxu0 0.0
    %905 = vmatpush1.msra.mxu0 %v882
    %906 = vmatprep.subr.mxu0 0.0
    %907 = vmatpush1.msra.mxu0 %v881
    %908 = vmatprep.subr.mxu0 0.0
    %909 = vmatpush1.msra.mxu0 %v880
    %910 = vmatprep.subr.mxu0 0.0
    %911 = vmatpush1.msra.mxu0 %v879
    %912 = vmatprep.subr.mxu0 0.0
    %913 = vmatpush1.msra.mxu0 %v878
    %914 = vmatprep.subr.mxu0 0.0
    %915 = vmatpush1.msra.mxu0 %v877
    %916 = vmatprep.subr.mxu0 0.0
    %917 = vmatpush1.msra.mxu0 %v876
    %918 = vmatprep.subr.mxu0 0.0
    %919 = vmatpush2.msra.mxu0 0.0
    %920 = vmatprep.subr.mxu0 0.0
    %921 = vmatpush2.msra.mxu0 0.0
    %922 = vmatprep.subr.mxu0 0.0
    %923 = vmatpush2.msra.mxu0 0.0
    %924 = vmatprep.subr.mxu0 0.0
    %925 = vmatpush2.msra.mxu0 0.0
    %926 = vmatprep.subr.mxu0 0.0
    %927 = vmatpush2.msra.mxu0 0.0
    %928 = vmatprep.subr.mxu0 0.0
    %929 = vmatpush2.msra.mxu0 0.0
    %930 = vmatprep.subr.mxu0 0.0
    %931 = vmatpush2.msra.mxu0 0.0
    %932 = vmatprep.subr.mxu0 0.0
    %933 = vmatpush2.msra.mxu0 0.0
    %934 = vmatprep.subr.mxu0 0.0
    %935 = vmatpush2.msra.mxu0 0.0
    %936 = vmatprep.subr.mxu0 0.0
    %937 = vmatpush2.msra.mxu0 0.0
    %938 = vmatprep.subr.mxu0 0.0
    %939 = vmatpush2.msra.mxu0 0.0
    %940 = vmatprep.subr.mxu0 0.0
    %941 = vmatpush2.msra.mxu0 0.0
    %942 = vmatprep.subr.mxu0 0.0
    %943 = vmatpush2.msra.mxu0 0.0
    %944 = vmatprep.subr.mxu0 0.0
    %945 = vmatpush2.msra.mxu0 0.0
    %946 = vmatprep.subr.mxu0 0.0
    %947 = vmatpush2.msra.mxu0 0.0
    %948 = vmatprep.subr.mxu0 0.0
    %949 = vmatpush2.msra.mxu0 0.0
    %950 = vmatprep.mubr.f32.mxu0 0.0
    %951 = vmatmul.mubr.f32.gmra.mxu0 %v884
    %v952 = vpop.f32.mrf.mxu0
    %v953 = vadd.f32 0.0, %v952
    %v954 = vpop.f32.mrf.mxu0
    %955 = vdwg.mxu0
    %v956 = vld [vmem:[#allocation2 + $0x6] sm:$0x3]
    %v957 = vld [vmem:[#allocation2 + $0x8] sm:$0x3]
    %v958 = vmul.f32 %v779, 0.5
    %v959 = vadd.f32 %v956, %v873
    %v960 = vtanh.pop %v959
    %v961 = vmul.f32 %v960, 0.5
    %v962 = vadd.f32 %v958, %v961
    %v963 = vmul.f32 %v788, 0.5
    %965 = vrot.lane.b32.xlu0 %v953, 64
    %v966 = vpop.permute.xlu0 %965
    %v968 = vadd.f32 %v957, %v966
    %v969 = vtanh.pop %v968
    %v970 = vmul.f32 %v969, 0.5
    %v971 = vadd.f32 %v963, %v970
    %972 = vst.msk [vmem:[#allocation3 + $0x6] sm:$0x3] %vm422, %v962
    %974 = vrot.lane.b32.xlu0 %v971, 64
    %v975 = vpop.permute.xlu0 %974
    %977 = vst.msk [vmem:[#allocation4 + $0x8] sm:$0x3] %vm422, %v975
    %v978 = vld [vmem:[%s2] sm:$0xff]
    %v979 = vld [vmem:[%s2 + $0x8] sm:$0xff]
    %v980 = vld [vmem:[%s2 + $0x10] sm:$0xff]
    %v981 = vld [vmem:[%s2 + $0x18] sm:$0xff]
    %v982 = vld [vmem:[%s2 + $0x20] sm:$0xff]
    %v983 = vld [vmem:[%s2 + $0x28] sm:$0xff]
    %v984 = vld [vmem:[%s2 + $0x30] sm:$0xff]
    %v985 = vld [vmem:[%s2 + $0x38] sm:$0xff]
    %v987 = vsel %vm256, %v962, 0
    %989 = vmatprep.subr.mxu0 0.0
    %990 = vmatpush1.msra.mxu0 0.0
    %991 = vmatprep.subr.mxu0 0.0
    %992 = vmatpush1.msra.mxu0 0.0
    %993 = vmatprep.subr.mxu0 0.0
    %994 = vmatpush1.msra.mxu0 0.0
    %995 = vmatprep.subr.mxu0 0.0
    %996 = vmatpush1.msra.mxu0 0.0
    %997 = vmatprep.subr.mxu0 0.0
    %998 = vmatpush1.msra.mxu0 0.0
    %999 = vmatprep.subr.mxu0 0.0
    %1000 = vmatpush1.msra.mxu0 0.0
    %1001 = vmatprep.subr.mxu0 0.0
    %1002 = vmatpush1.msra.mxu0 0.0
    %1003 = vmatprep.subr.mxu0 0.0
    %1004 = vmatpush1.msra.mxu0 0.0
    %1005 = vmatprep.subr.mxu0 0.0
    %1006 = vmatpush1.msra.mxu0 %v985
    %1007 = vmatprep.subr.mxu0 0.0
    %1008 = vmatpush1.msra.mxu0 %v984
    %1009 = vmatprep.subr.mxu0 0.0
    %1010 = vmatpush1.msra.mxu0 %v983
    %1011 = vmatprep.subr.mxu0 0.0
    %1012 = vmatpush1.msra.mxu0 %v982
    %1013 = vmatprep.subr.mxu0 0.0
    %1014 = vmatpush1.msra.mxu0 %v981
    %1015 = vmatprep.subr.mxu0 0.0
    %1016 = vmatpush1.msra.mxu0 %v980
    %1017 = vmatprep.subr.mxu0 0.0
    %1018 = vmatpush1.msra.mxu0 %v979
    %1019 = vmatprep.subr.mxu0 0.0
    %1020 = vmatpush1.msra.mxu0 %v978
    %1021 = vmatprep.subr.mxu0 0.0
    %1022 = vmatpush2.msra.mxu0 0.0
    %1023 = vmatprep.subr.mxu0 0.0
    %1024 = vmatpush2.msra.mxu0 0.0
    %1025 = vmatprep.subr.mxu0 0.0
    %1026 = vmatpush2.msra.mxu0 0.0
    %1027 = vmatprep.subr.mxu0 0.0
    %1028 = vmatpush2.msra.mxu0 0.0
    %1029 = vmatprep.subr.mxu0 0.0
    %1030 = vmatpush2.msra.mxu0 0.0
    %1031 = vmatprep.subr.mxu0 0.0
    %1032 = vmatpush2.msra.mxu0 0.0
    %1033 = vmatprep.subr.mxu0 0.0
    %1034 = vmatpush2.msra.mxu0 0.0
    %1035 = vmatprep.subr.mxu0 0.0
    %1036 = vmatpush2.msra.mxu0 0.0
    %1037 = vmatprep.subr.mxu0 0.0
    %1038 = vmatpush2.msra.mxu0 0.0
    %1039 = vmatprep.subr.mxu0 0.0
    %1040 = vmatpush2.msra.mxu0 0.0
    %1041 = vmatprep.subr.mxu0 0.0
    %1042 = vmatpush2.msra.mxu0 0.0
    %1043 = vmatprep.subr.mxu0 0.0
    %1044 = vmatpush2.msra.mxu0 0.0
    %1045 = vmatprep.subr.mxu0 0.0
    %1046 = vmatpush2.msra.mxu0 0.0
    %1047 = vmatprep.subr.mxu0 0.0
    %1048 = vmatpush2.msra.mxu0 0.0
    %1049 = vmatprep.subr.mxu0 0.0
    %1050 = vmatpush2.msra.mxu0 0.0
    %1051 = vmatprep.subr.mxu0 0.0
    %1052 = vmatpush2.msra.mxu0 0.0
    %1053 = vmatprep.mubr.f32.mxu0 0.0
    %1054 = vmatmul.mubr.f32.gmra.mxu0 %v987
    %v1055 = vpop.f32.mrf.mxu0
    %v1056 = vadd.f32 0.0, %v1055
    %v1057 = vpop.f32.mrf.mxu0
    %1058 = vdwg.mxu0
    %v1059 = vld [vmem:[%s3] sm:$0xff]
    %v1060 = vld [vmem:[%s3 + $0x8] sm:$0xff]
    %v1061 = vld [vmem:[%s3 + $0x10] sm:$0xff]
    %v1062 = vld [vmem:[%s3 + $0x18] sm:$0xff]
    %v1063 = vld [vmem:[%s3 + $0x20] sm:$0xff]
    %v1064 = vld [vmem:[%s3 + $0x28] sm:$0xff]
    %v1065 = vld [vmem:[%s3 + $0x30] sm:$0xff]
    %v1066 = vld [vmem:[%s3 + $0x38] sm:$0xff]
    %v1067 = vsel %vm256, %v975, 0
    %1069 = vmatprep.subr.mxu0 0.0
    %1070 = vmatpush1.msra.mxu0 0.0
    %1071 = vmatprep.subr.mxu0 0.0
    %1072 = vmatpush1.msra.mxu0 0.0
    %1073 = vmatprep.subr.mxu0 0.0
    %1074 = vmatpush1.msra.mxu0 0.0
    %1075 = vmatprep.subr.mxu0 0.0
    %1076 = vmatpush1.msra.mxu0 0.0
    %1077 = vmatprep.subr.mxu0 0.0
    %1078 = vmatpush1.msra.mxu0 0.0
    %1079 = vmatprep.subr.mxu0 0.0
    %1080 = vmatpush1.msra.mxu0 0.0
    %1081 = vmatprep.subr.mxu0 0.0
    %1082 = vmatpush1.msra.mxu0 0.0
    %1083 = vmatprep.subr.mxu0 0.0
    %1084 = vmatpush1.msra.mxu0 0.0
    %1085 = vmatprep.subr.mxu0 0.0
    %1086 = vmatpush1.msra.mxu0 %v1066
    %1087 = vmatprep.subr.mxu0 0.0
    %1088 = vmatpush1.msra.mxu0 %v1065
    %1089 = vmatprep.subr.mxu0 0.0
    %1090 = vmatpush1.msra.mxu0 %v1064
    %1091 = vmatprep.subr.mxu0 0.0
    %1092 = vmatpush1.msra.mxu0 %v1063
    %1093 = vmatprep.subr.mxu0 0.0
    %1094 = vmatpush1.msra.mxu0 %v1062
    %1095 = vmatprep.subr.mxu0 0.0
    %1096 = vmatpush1.msra.mxu0 %v1061
    %1097 = vmatprep.subr.mxu0 0.0
    %1098 = vmatpush1.msra.mxu0 %v1060
    %1099 = vmatprep.subr.mxu0 0.0
    %1100 = vmatpush1.msra.mxu0 %v1059
    %1101 = vmatprep.subr.mxu0 0.0
    %1102 = vmatpush2.msra.mxu0 0.0
    %1103 = vmatprep.subr.mxu0 0.0
    %1104 = vmatpush2.msra.mxu0 0.0
    %1105 = vmatprep.subr.mxu0 0.0
    %1106 = vmatpush2.msra.mxu0 0.0
    %1107 = vmatprep.subr.mxu0 0.0
    %1108 = vmatpush2.msra.mxu0 0.0
    %1109 = vmatprep.subr.mxu0 0.0
    %1110 = vmatpush2.msra.mxu0 0.0
    %1111 = vmatprep.subr.mxu0 0.0
    %1112 = vmatpush2.msra.mxu0 0.0
    %1113 = vmatprep.subr.mxu0 0.0
    %1114 = vmatpush2.msra.mxu0 0.0
    %1115 = vmatprep.subr.mxu0 0.0
    %1116 = vmatpush2.msra.mxu0 0.0
    %1117 = vmatprep.subr.mxu0 0.0
    %1118 = vmatpush2.msra.mxu0 0.0
    %1119 = vmatprep.subr.mxu0 0.0
    %1120 = vmatpush2.msra.mxu0 0.0
    %1121 = vmatprep.subr.mxu0 0.0
    %1122 = vmatpush2.msra.mxu0 0.0
    %1123 = vmatprep.subr.mxu0 0.0
    %1124 = vmatpush2.msra.mxu0 0.0
    %1125 = vmatprep.subr.mxu0 0.0
    %1126 = vmatpush2.msra.mxu0 0.0
    %1127 = vmatprep.subr.mxu0 0.0
    %1128 = vmatpush2.msra.mxu0 0.0
    %1129 = vmatprep.subr.mxu0 0.0
    %1130 = vmatpush2.msra.mxu0 0.0
    %1131 = vmatprep.subr.mxu0 0.0
    %1132 = vmatpush2.msra.mxu0 0.0
    %1133 = vmatprep.mubr.f32.mxu0 0.0
    %1134 = vmatmul.mubr.f32.gmra.mxu0 %v1067
    %v1135 = vpop.f32.mrf.mxu0
    %v1136 = vadd.f32 0.0, %v1135
    %v1137 = vpop.f32.mrf.mxu0
    %1138 = vdwg.mxu0
    %v1139 = vld [vmem:[#allocation2 + $0x8] sm:$0x3]
    %v1140 = vld [vmem:[#allocation2 + $0x6] sm:$0x3]
    %v1141 = vmul.f32 %v962, 0.5
    %v1142 = vadd.f32 %v1139, %v1056
    %v1143 = vtanh.pop %v1142
    %v1144 = vmul.f32 %v1143, 0.5
    %v1145 = vadd.f32 %v1141, %v1144
    %v1146 = vmul.f32 %v971, 0.5
    %1148 = vrot.lane.b32.xlu0 %v1136, 64
    %v1149 = vpop.permute.xlu0 %1148
    %v1151 = vadd.f32 %v1140, %v1149
    %v1152 = vtanh.pop %v1151
    %v1153 = vmul.f32 %v1152, 0.5
    %v1154 = vadd.f32 %v1146, %v1153
    %1155 = vst.msk [vmem:[#allocation3 + $0x8] sm:$0x3] %vm422, %v1145
    %1157 = vrot.lane.b32.xlu0 %v1154, 64
    %v1158 = vpop.permute.xlu0 %1157
    %1160 = vst.msk [vmem:[#allocation4 + $0x6] sm:$0x3] %vm422, %v1158
    %v1161 = vld [vmem:[%s2] sm:$0xff]
    %v1162 = vld [vmem:[%s2 + $0x8] sm:$0xff]
    %v1163 = vld [vmem:[%s2 + $0x10] sm:$0xff]
    %v1164 = vld [vmem:[%s2 + $0x18] sm:$0xff]
    %v1165 = vld [vmem:[%s2 + $0x20] sm:$0xff]
    %v1166 = vld [vmem:[%s2 + $0x28] sm:$0xff]
    %v1167 = vld [vmem:[%s2 + $0x30] sm:$0xff]
    %v1168 = vld [vmem:[%s2 + $0x38] sm:$0xff]
    %v1170 = vsel %vm256, %v1145, 0
    %1172 = vmatprep.subr.mxu0 0.0
    %1173 = vmatpush1.msra.mxu0 0.0
    %1174 = vmatprep.subr.mxu0 0.0
    %1175 = vmatpush1.msra.mxu0 0.0
    %1176 = vmatprep.subr.mxu0 0.0
    %1177 = vmatpush1.msra.mxu0 0.0
    %1178 = vmatprep.subr.mxu0 0.0
    %1179 = vmatpush1.msra.mxu0 0.0
    %1180 = vmatprep.subr.mxu0 0.0
    %1181 = vmatpush1.msra.mxu0 0.0
    %1182 = vmatprep.subr.mxu0 0.0
    %1183 = vmatpush1.msra.mxu0 0.0
    %1184 = vmatprep.subr.mxu0 0.0
    %1185 = vmatpush1.msra.mxu0 0.0
    %1186 = vmatprep.subr.mxu0 0.0
    %1187 = vmatpush1.msra.mxu0 0.0
    %1188 = vmatprep.subr.mxu0 0.0
    %1189 = vmatpush1.msra.mxu0 %v1168
    %1190 = vmatprep.subr.mxu0 0.0
    %1191 = vmatpush1.msra.mxu0 %v1167
    %1192 = vmatprep.subr.mxu0 0.0
    %1193 = vmatpush1.msra.mxu0 %v1166
    %1194 = vmatprep.subr.mxu0 0.0
    %1195 = vmatpush1.msra.mxu0 %v1165
    %1196 = vmatprep.subr.mxu0 0.0
    %1197 = vmatpush1.msra.mxu0 %v1164
    %1198 = vmatprep.subr.mxu0 0.0
    %1199 = vmatpush1.msra.mxu0 %v1163
    %1200 = vmatprep.subr.mxu0 0.0
    %1201 = vmatpush1.msra.mxu0 %v1162
    %1202 = vmatprep.subr.mxu0 0.0
    %1203 = vmatpush1.msra.mxu0 %v1161
    %1204 = vmatprep.subr.mxu0 0.0
    %1205 = vmatpush2.msra.mxu0 0.0
    %1206 = vmatprep.subr.mxu0 0.0
    %1207 = vmatpush2.msra.mxu0 0.0
    %1208 = vmatprep.subr.mxu0 0.0
    %1209 = vmatpush2.msra.mxu0 0.0
    %1210 = vmatprep.subr.mxu0 0.0
    %1211 = vmatpush2.msra.mxu0 0.0
    %1212 = vmatprep.subr.mxu0 0.0
    %1213 = vmatpush2.msra.mxu0 0.0
    %1214 = vmatprep.subr.mxu0 0.0
    %1215 = vmatpush2.msra.mxu0 0.0
    %1216 = vmatprep.subr.mxu0 0.0
    %1217 = vmatpush2.msra.mxu0 0.0
    %1218 = vmatprep.subr.mxu0 0.0
    %1219 = vmatpush2.msra.mxu0 0.0
    %1220 = vmatprep.subr.mxu0 0.0
    %1221 = vmatpush2.msra.mxu0 0.0
    %1222 = vmatprep.subr.mxu0 0.0
    %1223 = vmatpush2.msra.mxu0 0.0
    %1224 = vmatprep.subr.mxu0 0.0
    %1225 = vmatpush2.msra.mxu0 0.0
    %1226 = vmatprep.subr.mxu0 0.0
    %1227 = vmatpush2.msra.mxu0 0.0
    %1228 = vmatprep.subr.mxu0 0.0
    %1229 = vmatpush2.msra.mxu0 0.0
    %1230 = vmatprep.subr.mxu0 0.0
    %1231 = vmatpush2.msra.mxu0 0.0
    %1232 = vmatprep.subr.mxu0 0.0
    %1233 = vmatpush2.msra.mxu0 0.0
    %1234 = vmatprep.subr.mxu0 0.0
    %1235 = vmatpush2.msra.mxu0 0.0
    %1236 = vmatprep.mubr.f32.mxu0 0.0
    %1237 = vmatmul.mubr.f32.gmra.mxu0 %v1170
    %v1238 = vpop.f32.mrf.mxu0
    %v1239 = vadd.f32 0.0, %v1238
    %v1240 = vpop.f32.mrf.mxu0
    %1241 = vdwg.mxu0
    %v1242 = vld [vmem:[%s3] sm:$0xff]
    %v1243 = vld [vmem:[%s3 + $0x8] sm:$0xff]
    %v1244 = vld [vmem:[%s3 + $0x10] sm:$0xff]
    %v1245 = vld [vmem:[%s3 + $0x18] sm:$0xff]
    %v1246 = vld [vmem:[%s3 + $0x20] sm:$0xff]
    %v1247 = vld [vmem:[%s3 + $0x28] sm:$0xff]
    %v1248 = vld [vmem:[%s3 + $0x30] sm:$0xff]
    %v1249 = vld [vmem:[%s3 + $0x38] sm:$0xff]
    %v1250 = vsel %vm256, %v1158, 0
    %1252 = vmatprep.subr.mxu0 0.0
    %1253 = vmatpush1.msra.mxu0 0.0
    %1254 = vmatprep.subr.mxu0 0.0
    %1255 = vmatpush1.msra.mxu0 0.0
    %1256 = vmatprep.subr.mxu0 0.0
    %1257 = vmatpush1.msra.mxu0 0.0
    %1258 = vmatprep.subr.mxu0 0.0
    %1259 = vmatpush1.msra.mxu0 0.0
    %1260 = vmatprep.subr.mxu0 0.0
    %1261 = vmatpush1.msra.mxu0 0.0
    %1262 = vmatprep.subr.mxu0 0.0
    %1263 = vmatpush1.msra.mxu0 0.0
    %1264 = vmatprep.subr.mxu0 0.0
    %1265 = vmatpush1.msra.mxu0 0.0
    %1266 = vmatprep.subr.mxu0 0.0
    %1267 = vmatpush1.msra.mxu0 0.0
    %1268 = vmatprep.subr.mxu0 0.0
    %1269 = vmatpush1.msra.mxu0 %v1249
    %1270 = vmatprep.subr.mxu0 0.0
    %1271 = vmatpush1.msra.mxu0 %v1248
    %1272 = vmatprep.subr.mxu0 0.0
    %1273 = vmatpush1.msra.mxu0 %v1247
    %1274 = vmatprep.subr.mxu0 0.0
    %1275 = vmatpush1.msra.mxu0 %v1246
    %1276 = vmatprep.subr.mxu0 0.0
    %1277 = vmatpush1.msra.mxu0 %v1245
    %1278 = vmatprep.subr.mxu0 0.0
    %1279 = vmatpush1.msra.mxu0 %v1244
    %1280 = vmatprep.subr.mxu0 0.0
    %1281 = vmatpush1.msra.mxu0 %v1243
    %1282 = vmatprep.subr.mxu0 0.0
    %1283 = vmatpush1.msra.mxu0 %v1242
    %1284 = vmatprep.subr.mxu0 0.0
    %1285 = vmatpush2.msra.mxu0 0.0
    %1286 = vmatprep.subr.mxu0 0.0
    %1287 = vmatpush2.msra.mxu0 0.0
    %1288 = vmatprep.subr.mxu0 0.0
    %1289 = vmatpush2.msra.mxu0 0.0
    %1290 = vmatprep.subr.mxu0 0.0
    %1291 = vmatpush2.msra.mxu0 0.0
    %1292 = vmatprep.subr.mxu0 0.0
    %1293 = vmatpush2.msra.mxu0 0.0
    %1294 = vmatprep.subr.mxu0 0.0
    %1295 = vmatpush2.msra.mxu0 0.0
    %1296 = vmatprep.subr.mxu0 0.0
    %1297 = vmatpush2.msra.mxu0 0.0
    %1298 = vmatprep.subr.mxu0 0.0
    %1299 = vmatpush2.msra.mxu0 0.0
    %1300 = vmatprep.subr.mxu0 0.0
    %1301 = vmatpush2.msra.mxu0 0.0
    %1302 = vmatprep.subr.mxu0 0.0
    %1303 = vmatpush2.msra.mxu0 0.0
    %1304 = vmatprep.subr.mxu0 0.0
    %1305 = vmatpush2.msra.mxu0 0.0
    %1306 = vmatprep.subr.mxu0 0.0
    %1307 = vmatpush2.msra.mxu0 0.0
    %1308 = vmatprep.subr.mxu0 0.0
    %1309 = vmatpush2.msra.mxu0 0.0
    %1310 = vmatprep.subr.mxu0 0.0
    %1311 = vmatpush2.msra.mxu0 0.0
    %1312 = vmatprep.subr.mxu0 0.0
    %1313 = vmatpush2.msra.mxu0 0.0
    %1314 = vmatprep.subr.mxu0 0.0
    %1315 = vmatpush2.msra.mxu0 0.0
    %1316 = vmatprep.mubr.f32.mxu0 0.0
    %1317 = vmatmul.mubr.f32.gmra.mxu0 %v1250
    %v1318 = vpop.f32.mrf.mxu0
    %v1319 = vadd.f32 0.0, %v1318
    %v1320 = vpop.f32.mrf.mxu0
    %1321 = vdwg.mxu0
    %v1322 = vld [vmem:[#allocation2 + $0xa] sm:$0x3]
    %v1323 = vld [vmem:[#allocation2 + $0x4] sm:$0x3]
    %v1324 = vmul.f32 %v1145, 0.5
    %v1325 = vadd.f32 %v1322, %v1239
    %v1326 = vtanh.pop %v1325
    %v1327 = vmul.f32 %v1326, 0.5
    %v1328 = vadd.f32 %v1324, %v1327
    %v1329 = vmul.f32 %v1154, 0.5
    %1331 = vrot.lane.b32.xlu0 %v1319, 64
    %v1332 = vpop.permute.xlu0 %1331
    %v1334 = vadd.f32 %v1323, %v1332
    %v1335 = vtanh.pop %v1334
    %v1336 = vmul.f32 %v1335, 0.5
    %v1337 = vadd.f32 %v1329, %v1336
    %1338 = vst.msk [vmem:[#allocation3 + $0xa] sm:$0x3] %vm422, %v1328
    %1340 = vrot.lane.b32.xlu0 %v1337, 64
    %v1341 = vpop.permute.xlu0 %1340
    %1343 = vst.msk [vmem:[#allocation4 + $0x4] sm:$0x3] %vm422, %v1341
    %v1344 = vld [vmem:[%s2] sm:$0xff]
    %v1345 = vld [vmem:[%s2 + $0x8] sm:$0xff]
    %v1346 = vld [vmem:[%s2 + $0x10] sm:$0xff]
    %v1347 = vld [vmem:[%s2 + $0x18] sm:$0xff]
    %v1348 = vld [vmem:[%s2 + $0x20] sm:$0xff]
    %v1349 = vld [vmem:[%s2 + $0x28] sm:$0xff]
    %v1350 = vld [vmem:[%s2 + $0x30] sm:$0xff]
    %v1351 = vld [vmem:[%s2 + $0x38] sm:$0xff]
    %v1353 = vsel %vm256, %v1328, 0
    %1355 = vmatprep.subr.mxu0 0.0
    %1356 = vmatpush1.msra.mxu0 0.0
    %1357 = vmatprep.subr.mxu0 0.0
    %1358 = vmatpush1.msra.mxu0 0.0
    %1359 = vmatprep.subr.mxu0 0.0
    %1360 = vmatpush1.msra.mxu0 0.0
    %1361 = vmatprep.subr.mxu0 0.0
    %1362 = vmatpush1.msra.mxu0 0.0
    %1363 = vmatprep.subr.mxu0 0.0
    %1364 = vmatpush1.msra.mxu0 0.0
    %1365 = vmatprep.subr.mxu0 0.0
    %1366 = vmatpush1.msra.mxu0 0.0
    %1367 = vmatprep.subr.mxu0 0.0
    %1368 = vmatpush1.msra.mxu0 0.0
    %1369 = vmatprep.subr.mxu0 0.0
    %1370 = vmatpush1.msra.mxu0 0.0
    %1371 = vmatprep.subr.mxu0 0.0
    %1372 = vmatpush1.msra.mxu0 %v1351
    %1373 = vmatprep.subr.mxu0 0.0
    %1374 = vmatpush1.msra.mxu0 %v1350
    %1375 = vmatprep.subr.mxu0 0.0
    %1376 = vmatpush1.msra.mxu0 %v1349
    %1377 = vmatprep.subr.mxu0 0.0
    %1378 = vmatpush1.msra.mxu0 %v1348
    %1379 = vmatprep.subr.mxu0 0.0
    %1380 = vmatpush1.msra.mxu0 %v1347
    %1381 = vmatprep.subr.mxu0 0.0
    %1382 = vmatpush1.msra.mxu0 %v1346
    %1383 = vmatprep.subr.mxu0 0.0
    %1384 = vmatpush1.msra.mxu0 %v1345
    %1385 = vmatprep.subr.mxu0 0.0
    %1386 = vmatpush1.msra.mxu0 %v1344
    %1387 = vmatprep.subr.mxu0 0.0
    %1388 = vmatpush2.msra.mxu0 0.0
    %1389 = vmatprep.subr.mxu0 0.0
    %1390 = vmatpush2.msra.mxu0 0.0
    %1391 = vmatprep.subr.mxu0 0.0
    %1392 = vmatpush2.msra.mxu0 0.0
    %1393 = vmatprep.subr.mxu0 0.0
    %1394 = vmatpush2.msra.mxu0 0.0
    %1395 = vmatprep.subr.mxu0 0.0
    %1396 = vmatpush2.msra.mxu0 0.0
    %1397 = vmatprep.subr.mxu0 0.0
    %1398 = vmatpush2.msra.mxu0 0.0
    %1399 = vmatprep.subr.mxu0 0.0
    %1400 = vmatpush2.msra.mxu0 0.0
    %1401 = vmatprep.subr.mxu0 0.0
    %1402 = vmatpush2.msra.mxu0 0.0
    %1403 = vmatprep.subr.mxu0 0.0
    %1404 = vmatpush2.msra.mxu0 0.0
    %1405 = vmatprep.subr.mxu0 0.0
    %1406 = vmatpush2.msra.mxu0 0.0
    %1407 = vmatprep.subr.mxu0 0.0
    %1408 = vmatpush2.msra.mxu0 0.0
    %1409 = vmatprep.subr.mxu0 0.0
    %1410 = vmatpush2.msra.mxu0 0.0
    %1411 = vmatprep.subr.mxu0 0.0
    %1412 = vmatpush2.msra.mxu0 0.0
    %1413 = vmatprep.subr.mxu0 0.0
    %1414 = vmatpush2.msra.mxu0 0.0
    %1415 = vmatprep.subr.mxu0 0.0
    %1416 = vmatpush2.msra.mxu0 0.0
    %1417 = vmatprep.subr.mxu0 0.0
    %1418 = vmatpush2.msra.mxu0 0.0
    %1419 = vmatprep.mubr.f32.mxu0 0.0
    %1420 = vmatmul.mubr.f32.gmra.mxu0 %v1353
    %v1421 = vpop.f32.mrf.mxu0
    %v1422 = vadd.f32 0.0, %v1421
    %v1423 = vpop.f32.mrf.mxu0
    %1424 = vdwg.mxu0
    %v1425 = vld [vmem:[%s3] sm:$0xff]
    %v1426 = vld [vmem:[%s3 + $0x8] sm:$0xff]
    %v1427 = vld [vmem:[%s3 + $0x10] sm:$0xff]
    %v1428 = vld [vmem:[%s3 + $0x18] sm:$0xff]
    %v1429 = vld [vmem:[%s3 + $0x20] sm:$0xff]
    %v1430 = vld [vmem:[%s3 + $0x28] sm:$0xff]
    %v1431 = vld [vmem:[%s3 + $0x30] sm:$0xff]
    %v1432 = vld [vmem:[%s3 + $0x38] sm:$0xff]
    %v1433 = vsel %vm256, %v1341, 0
    %1435 = vmatprep.subr.mxu0 0.0
    %1436 = vmatpush1.msra.mxu0 0.0
    %1437 = vmatprep.subr.mxu0 0.0
    %1438 = vmatpush1.msra.mxu0 0.0
    %1439 = vmatprep.subr.mxu0 0.0
    %1440 = vmatpush1.msra.mxu0 0.0
    %1441 = vmatprep.subr.mxu0 0.0
    %1442 = vmatpush1.msra.mxu0 0.0
    %1443 = vmatprep.subr.mxu0 0.0
    %1444 = vmatpush1.msra.mxu0 0.0
    %1445 = vmatprep.subr.mxu0 0.0
    %1446 = vmatpush1.msra.mxu0 0.0
    %1447 = vmatprep.subr.mxu0 0.0
    %1448 = vmatpush1.msra.mxu0 0.0
    %1449 = vmatprep.subr.mxu0 0.0
    %1450 = vmatpush1.msra.mxu0 0.0
    %1451 = vmatprep.subr.mxu0 0.0
    %1452 = vmatpush1.msra.mxu0 %v1432
    %1453 = vmatprep.subr.mxu0 0.0
    %1454 = vmatpush1.msra.mxu0 %v1431
    %1455 = vmatprep.subr.mxu0 0.0
    %1456 = vmatpush1.msra.mxu0 %v1430
    %1457 = vmatprep.subr.mxu0 0.0
    %1458 = vmatpush1.msra.mxu0 %v1429
    %1459 = vmatprep.subr.mxu0 0.0
    %1460 = vmatpush1.msra.mxu0 %v1428
    %1461 = vmatprep.subr.mxu0 0.0
    %1462 = vmatpush1.msra.mxu0 %v1427
    %1463 = vmatprep.subr.mxu0 0.0
    %1464 = vmatpush1.msra.mxu0 %v1426
    %1465 = vmatprep.subr.mxu0 0.0
    %1466 = vmatpush1.msra.mxu0 %v1425
    %1467 = vmatprep.subr.mxu0 0.0
    %1468 = vmatpush2.msra.mxu0 0.0
    %1469 = vmatprep.subr.mxu0 0.0
    %1470 = vmatpush2.msra.mxu0 0.0
    %1471 = vmatprep.subr.mxu0 0.0
    %1472 = vmatpush2.msra.mxu0 0.0
    %1473 = vmatprep.subr.mxu0 0.0
    %1474 = vmatpush2.msra.mxu0 0.0
    %1475 = vmatprep.subr.mxu0 0.0
    %1476 = vmatpush2.msra.mxu0 0.0
    %1477 = vmatprep.subr.mxu0 0.0
    %1478 = vmatpush2.msra.mxu0 0.0
    %1479 = vmatprep.subr.mxu0 0.0
    %1480 = vmatpush2.msra.mxu0 0.0
    %1481 = vmatprep.subr.mxu0 0.0
    %1482 = vmatpush2.msra.mxu0 0.0
    %1483 = vmatprep.subr.mxu0 0.0
    %1484 = vmatpush2.msra.mxu0 0.0
    %1485 = vmatprep.subr.mxu0 0.0
    %1486 = vmatpush2.msra.mxu0 0.0
    %1487 = vmatprep.subr.mxu0 0.0
    %1488 = vmatpush2.msra.mxu0 0.0
    %1489 = vmatprep.subr.mxu0 0.0
    %1490 = vmatpush2.msra.mxu0 0.0
    %1491 = vmatprep.subr.mxu0 0.0
    %1492 = vmatpush2.msra.mxu0 0.0
    %1493 = vmatprep.subr.mxu0 0.0
    %1494 = vmatpush2.msra.mxu0 0.0
    %1495 = vmatprep.subr.mxu0 0.0
    %1496 = vmatpush2.msra.mxu0 0.0
    %1497 = vmatprep.subr.mxu0 0.0
    %1498 = vmatpush2.msra.mxu0 0.0
    %1499 = vmatprep.mubr.f32.mxu0 0.0
    %1500 = vmatmul.mubr.f32.gmra.mxu0 %v1433
    %v1501 = vpop.f32.mrf.mxu0
    %v1502 = vadd.f32 0.0, %v1501
    %v1503 = vpop.f32.mrf.mxu0
    %1504 = vdwg.mxu0
    %v1505 = vld [vmem:[#allocation2 + $0xc] sm:$0x3]
    %v1506 = vld [vmem:[#allocation2 + $0x2] sm:$0x3]
    %v1507 = vmul.f32 %v1328, 0.5
    %v1508 = vadd.f32 %v1505, %v1422
    %v1509 = vtanh.pop %v1508
    %v1510 = vmul.f32 %v1509, 0.5
    %v1511 = vadd.f32 %v1507, %v1510
    %v1512 = vmul.f32 %v1337, 0.5
    %1514 = vrot.lane.b32.xlu0 %v1502, 64
    %v1515 = vpop.permute.xlu0 %1514
    %v1517 = vadd.f32 %v1506, %v1515
    %v1518 = vtanh.pop %v1517
    %v1519 = vmul.f32 %v1518, 0.5
    %v1520 = vadd.f32 %v1512, %v1519
    %1521 = vst.msk [vmem:[#allocation3 + $0xc] sm:$0x3] %vm422, %v1511
    %1523 = vrot.lane.b32.xlu0 %v1520, 64
    %v1524 = vpop.permute.xlu0 %1523
    %1526 = vst.msk [vmem:[#allocation4 + $0x2] sm:$0x3] %vm422, %v1524
    %v1527 = vld [vmem:[%s2] sm:$0xff]
    %v1528 = vld [vmem:[%s2 + $0x8] sm:$0xff]
    %v1529 = vld [vmem:[%s2 + $0x10] sm:$0xff]
    %v1530 = vld [vmem:[%s2 + $0x18] sm:$0xff]
    %v1531 = vld [vmem:[%s2 + $0x20] sm:$0xff]
    %v1532 = vld [vmem:[%s2 + $0x28] sm:$0xff]
    %v1533 = vld [vmem:[%s2 + $0x30] sm:$0xff]
    %v1534 = vld [vmem:[%s2 + $0x38] sm:$0xff]
    %v1536 = vsel %vm256, %v1511, 0
    %1538 = vmatprep.subr.mxu0 0.0
    %1539 = vmatpush1.msra.mxu0 0.0
    %1540 = vmatprep.subr.mxu0 0.0
    %1541 = vmatpush1.msra.mxu0 0.0
    %1542 = vmatprep.subr.mxu0 0.0
    %1543 = vmatpush1.msra.mxu0 0.0
    %1544 = vmatprep.subr.mxu0 0.0
    %1545 = vmatpush1.msra.mxu0 0.0
    %1546 = vmatprep.subr.mxu0 0.0
    %1547 = vmatpush1.msra.mxu0 0.0
    %1548 = vmatprep.subr.mxu0 0.0
    %1549 = vmatpush1.msra.mxu0 0.0
    %1550 = vmatprep.subr.mxu0 0.0
    %1551 = vmatpush1.msra.mxu0 0.0
    %1552 = vmatprep.subr.mxu0 0.0
    %1553 = vmatpush1.msra.mxu0 0.0
    %1554 = vmatprep.subr.mxu0 0.0
    %1555 = vmatpush1.msra.mxu0 %v1534
    %1556 = vmatprep.subr.mxu0 0.0
    %1557 = vmatpush1.msra.mxu0 %v1533
    %1558 = vmatprep.subr.mxu0 0.0
    %1559 = vmatpush1.msra.mxu0 %v1532
    %1560 = vmatprep.subr.mxu0 0.0
    %1561 = vmatpush1.msra.mxu0 %v1531
    %1562 = vmatprep.subr.mxu0 0.0
    %1563 = vmatpush1.msra.mxu0 %v1530
    %1564 = vmatprep.subr.mxu0 0.0
    %1565 = vmatpush1.msra.mxu0 %v1529
    %1566 = vmatprep.subr.mxu0 0.0
    %1567 = vmatpush1.msra.mxu0 %v1528
    %1568 = vmatprep.subr.mxu0 0.0
    %1569 = vmatpush1.msra.mxu0 %v1527
    %1570 = vmatprep.subr.mxu0 0.0
    %1571 = vmatpush2.msra.mxu0 0.0
    %1572 = vmatprep.subr.mxu0 0.0
    %1573 = vmatpush2.msra.mxu0 0.0
    %1574 = vmatprep.subr.mxu0 0.0
    %1575 = vmatpush2.msra.mxu0 0.0
    %1576 = vmatprep.subr.mxu0 0.0
    %1577 = vmatpush2.msra.mxu0 0.0
    %1578 = vmatprep.subr.mxu0 0.0
    %1579 = vmatpush2.msra.mxu0 0.0
    %1580 = vmatprep.subr.mxu0 0.0
    %1581 = vmatpush2.msra.mxu0 0.0
    %1582 = vmatprep.subr.mxu0 0.0
    %1583 = vmatpush2.msra.mxu0 0.0
    %1584 = vmatprep.subr.mxu0 0.0
    %1585 = vmatpush2.msra.mxu0 0.0
    %1586 = vmatprep.subr.mxu0 0.0
    %1587 = vmatpush2.msra.mxu0 0.0
    %1588 = vmatprep.subr.mxu0 0.0
    %1589 = vmatpush2.msra.mxu0 0.0
    %1590 = vmatprep.subr.mxu0 0.0
    %1591 = vmatpush2.msra.mxu0 0.0
    %1592 = vmatprep.subr.mxu0 0.0
    %1593 = vmatpush2.msra.mxu0 0.0
    %1594 = vmatprep.subr.mxu0 0.0
    %1595 = vmatpush2.msra.mxu0 0.0
    %1596 = vmatprep.subr.mxu0 0.0
    %1597 = vmatpush2.msra.mxu0 0.0
    %1598 = vmatprep.subr.mxu0 0.0
    %1599 = vmatpush2.msra.mxu0 0.0
    %1600 = vmatprep.subr.mxu0 0.0
    %1601 = vmatpush2.msra.mxu0 0.0
    %1602 = vmatprep.mubr.f32.mxu0 0.0
    %1603 = vmatmul.mubr.f32.gmra.mxu0 %v1536
    %v1604 = vpop.f32.mrf.mxu0
    %v1605 = vadd.f32 0.0, %v1604
    %v1606 = vpop.f32.mrf.mxu0
    %1607 = vdwg.mxu0
    %v1608 = vld [vmem:[%s3] sm:$0xff]
    %v1609 = vld [vmem:[%s3 + $0x8] sm:$0xff]
    %v1610 = vld [vmem:[%s3 + $0x10] sm:$0xff]
    %v1611 = vld [vmem:[%s3 + $0x18] sm:$0xff]
    %v1612 = vld [vmem:[%s3 + $0x20] sm:$0xff]
    %v1613 = vld [vmem:[%s3 + $0x28] sm:$0xff]
    %v1614 = vld [vmem:[%s3 + $0x30] sm:$0xff]
    %v1615 = vld [vmem:[%s3 + $0x38] sm:$0xff]
    %v1616 = vsel %vm256, %v1524, 0
    %1618 = vmatprep.subr.mxu0 0.0
    %1619 = vmatpush1.msra.mxu0 0.0
    %1620 = vmatprep.subr.mxu0 0.0
    %1621 = vmatpush1.msra.mxu0 0.0
    %1622 = vmatprep.subr.mxu0 0.0
    %1623 = vmatpush1.msra.mxu0 0.0
    %1624 = vmatprep.subr.mxu0 0.0
    %1625 = vmatpush1.msra.mxu0 0.0
    %1626 = vmatprep.subr.mxu0 0.0
    %1627 = vmatpush1.msra.mxu0 0.0
    %1628 = vmatprep.subr.mxu0 0.0
    %1629 = vmatpush1.msra.mxu0 0.0
    %1630 = vmatprep.subr.mxu0 0.0
    %1631 = vmatpush1.msra.mxu0 0.0
    %1632 = vmatprep.subr.mxu0 0.0
    %1633 = vmatpush1.msra.mxu0 0.0
    %1634 = vmatprep.subr.mxu0 0.0
    %1635 = vmatpush1.msra.mxu0 %v1615
    %1636 = vmatprep.subr.mxu0 0.0
    %1637 = vmatpush1.msra.mxu0 %v1614
    %1638 = vmatprep.subr.mxu0 0.0
    %1639 = vmatpush1.msra.mxu0 %v1613
    %1640 = vmatprep.subr.mxu0 0.0
    %1641 = vmatpush1.msra.mxu0 %v1612
    %1642 = vmatprep.subr.mxu0 0.0
    %1643 = vmatpush1.msra.mxu0 %v1611
    %1644 = vmatprep.subr.mxu0 0.0
    %1645 = vmatpush1.msra.mxu0 %v1610
    %1646 = vmatprep.subr.mxu0 0.0
    %1647 = vmatpush1.msra.mxu0 %v1609
    %1648 = vmatprep.subr.mxu0 0.0
    %1649 = vmatpush1.msra.mxu0 %v1608
    %1650 = vmatprep.subr.mxu0 0.0
    %1651 = vmatpush2.msra.mxu0 0.0
    %1652 = vmatprep.subr.mxu0 0.0
    %1653 = vmatpush2.msra.mxu0 0.0
    %1654 = vmatprep.subr.mxu0 0.0
    %1655 = vmatpush2.msra.mxu0 0.0
    %1656 = vmatprep.subr.mxu0 0.0
    %1657 = vmatpush2.msra.mxu0 0.0
    %1658 = vmatprep.subr.mxu0 0.0
    %1659 = vmatpush2.msra.mxu0 0.0
    %1660 = vmatprep.subr.mxu0 0.0
    %1661 = vmatpush2.msra.mxu0 0.0
    %1662 = vmatprep.subr.mxu0 0.0
    %1663 = vmatpush2.msra.mxu0 0.0
    %1664 = vmatprep.subr.mxu0 0.0
    %1665 = vmatpush2.msra.mxu0 0.0
    %1666 = vmatprep.subr.mxu0 0.0
    %1667 = vmatpush2.msra.mxu0 0.0
    %1668 = vmatprep.subr.mxu0 0.0
    %1669 = vmatpush2.msra.mxu0 0.0
    %1670 = vmatprep.subr.mxu0 0.0
    %1671 = vmatpush2.msra.mxu0 0.0
    %1672 = vmatprep.subr.mxu0 0.0
    %1673 = vmatpush2.msra.mxu0 0.0
    %1674 = vmatprep.subr.mxu0 0.0
    %1675 = vmatpush2.msra.mxu0 0.0
    %1676 = vmatprep.subr.mxu0 0.0
    %1677 = vmatpush2.msra.mxu0 0.0
    %1678 = vmatprep.subr.mxu0 0.0
    %1679 = vmatpush2.msra.mxu0 0.0
    %1680 = vmatprep.subr.mxu0 0.0
    %1681 = vmatpush2.msra.mxu0 0.0
    %1682 = vmatprep.mubr.f32.mxu0 0.0
    %1683 = vmatmul.mubr.f32.gmra.mxu0 %v1616
    %v1684 = vpop.f32.mrf.mxu0
    %v1685 = vadd.f32 0.0, %v1684
    %v1686 = vpop.f32.mrf.mxu0
    %1687 = vdwg.mxu0
    %v1688 = vld [vmem:[#allocation2 + $0xe] sm:$0x3]
    %v1689 = vld [vmem:[#allocation2] sm:$0x3]
    %v1690 = vmul.f32 %v1511, 0.5
    %v1691 = vadd.f32 %v1688, %v1605
    %v1692 = vtanh.pop %v1691
    %v1693 = vmul.f32 %v1692, 0.5
    %v1694 = vadd.f32 %v1690, %v1693
    %v1695 = vmul.f32 %v1520, 0.5
    %1697 = vrot.lane.b32.xlu0 %v1685, 64
    %v1698 = vpop.permute.xlu0 %1697
    %v1700 = vadd.f32 %v1689, %v1698
    %v1701 = vtanh.pop %v1700
    %v1702 = vmul.f32 %v1701, 0.5
    %v1703 = vadd.f32 %v1695, %v1702
    %1704 = vst.msk [vmem:[#allocation3 + $0xe] sm:$0x3] %vm422, %v1694
    %1706 = vrot.lane.b32.xlu0 %v1703, 64
    %v1707 = vpop.permute.xlu0 %1706
    %1709 = vst.msk [vmem:[#allocation4] sm:$0x3] %vm422, %v1707
    %v1710 = vld [vmem:[#allocation3] sm:$0xff]
    %v1711 = vld [vmem:[#allocation3 + $0x8] sm:$0xff]
    %v1712 = vld [vmem:[#allocation4] sm:$0xff]
    %v1713 = vld [vmem:[#allocation4 + $0x8] sm:$0xff]
    %1716 = vrot.lane.b32.xlu0 %v1712, 64
    %v1717 = vpop.permute.xlu0 %1716
    %1718 = vrot.lane.b32.xlu0 %v1713, 64
    %v1719 = vpop.permute.xlu0 %1718
    %v1722 = vsel %vm256, %v1710, %v1717
    %v1723 = vsel %vm256, %v1711, %v1719
    %1724 = vst [vmem:[%s5] sm:$0xff] %v1722
    %1725 = vst [vmem:[%s5 + $0x8] sm:$0xff] %v1723
    // Predicated region
    $region26: #{_lambda_.3} parent=1 // pred_check
      _
    $region27: #{_lambda_.3} parent=1 // pred_check_branch
      %1727 = sbr.rel (0) target = $region29
    $region28: #{_lambda_.3} parent=1 // pred_region
      _
    $region29: #{_lambda_.3} parent=1 // pred_fallthru
      _
    // Predicated region
    $region30: #{_lambda_.3} parent=1 // pred_check
      _
    $region31: #{_lambda_.3} parent=1 // pred_check_branch
      %1729 = sbr.rel (0) target = $region33
    $region32: #{_lambda_.3} parent=1 // pred_region
      _
    $region33: #{_lambda_.3} parent=1 // pred_fallthru
      _
    %1730 = vsyncpa [#allocation6], 1

</llo_original>
